<compile_context>
chip_gen: v7x
topology: tpu7x:2x2x1
jax: 0.10.0
libtpu: 0.0.40
codegen_flags: <defaults>
</compile_context>

<pallas_src>
import jax
import jax.numpy as jnp
import numpy as np
from jax.experimental import pallas as pl
from jax.experimental.pallas import tpu as pltpu


def _fa_kernel(x_ref, wconv_ref, bconv_ref, wcls_ref, bcls_ref, logit_ref,
               lhs_ref):
    # x_ref:     [1, H+2, W+2, Cin] bf16   one batch element, spatially padded
    # wconv_ref: [9*Cin, Chid]      bf16   im2col-flattened conv weight (dy,dx,ci)
    # bconv_ref: [1, Chid]          f32
    # wcls_ref:  [Chid, 128]        bf16   classifier weight, lane-padded
    # bcls_ref:  [1, 128]           f32    classifier bias, lane-padded
    # logit_ref: [1, 1, 128]        f32
    # lhs_ref:   [H*W, 9*Cin]       bf16   VMEM scratch (im2col LHS)
    _, Hp, Wp, Cin = x_ref.shape
    H, W = Hp - 2, Wp - 2

    # --- on-chip im2col: scatter the 9 shifted taps into the [H*W, 9*Cin] slab.
    # Static slice offsets; each tap is stored then dead (bounded live range).
    for dy in range(3):
        for dx in range(3):
            t = dy * 3 + dx
            tap = x_ref[0, dy:dy + H, dx:dx + W, :].reshape(H * W, Cin)
            lhs_ref[:, t * Cin:(t + 1) * Cin] = tap

    # --- single K = 9*Cin matmul on the MXU (bf16 operands, f32 accumulate).
    acc = jnp.dot(lhs_ref[...], wconv_ref[...],
                  preferred_element_type=jnp.float32)          # [H*W, Chid] f32
    acc = jnp.maximum(acc + bconv_ref[...], 0.0)               # bias + ReLU

    # --- global average pool over spatial -> embedding [1, Chid].
    emb = jnp.sum(acc, axis=0, keepdims=True) * (1.0 / (H * W))

    # --- classifier head (lane-dense 128-wide logit slab).
    logits = jnp.dot(emb.astype(wcls_ref.dtype), wcls_ref[...],
                     preferred_element_type=jnp.float32) + bcls_ref[...]
    logit_ref[0] = logits.astype(logit_ref.dtype)


def fa_wrapper_forward(x_nchw, wconv, bconv, wcls, bcls):
    """Pallas forward. x_nchw: [B, Cin, H, W]; wconv: [Chid, Cin, 3, 3] (torch
    conv layout); bconv: [Chid]; wcls: [Ncls, Chid] (torch Linear layout);
    bcls: [Ncls]. Returns logits [B, Ncls] (float32)."""
    B, Cin, H, W = x_nchw.shape
    Chid = wconv.shape[0]
    Ncls = wcls.shape[0]
    NPAD = 128                      # lane-dense logits slab width
    Hp, Wp = H + 2, W + 2

    # --- layout glue: one fused host-side prep pass per tensor (not hot path).
    x_pad = jnp.pad(jnp.transpose(x_nchw, (0, 2, 3, 1)),
                    ((0, 0), (1, 1), (1, 1), (0, 0))).astype(jnp.bfloat16)

    # conv weight -> im2col-flattened [(dy, dx, ci), co], bf16
    wconv_k = jnp.transpose(wconv, (2, 3, 1, 0)).reshape(9 * Cin, Chid)
    wconv_k = wconv_k.astype(jnp.bfloat16)
    bconv_k = bconv.reshape(1, Chid).astype(jnp.float32)

    # classifier weight/bias -> zero-padded to 128 output lanes, bf16 weight
    wcls_k = jnp.zeros((Chid, NPAD), jnp.bfloat16)
    wcls_k = wcls_k.at[:, :Ncls].set(wcls.T.astype(jnp.bfloat16))
    bcls_k = jnp.zeros((1, NPAD), jnp.float32)
    bcls_k = bcls_k.at[:, :Ncls].set(bcls.astype(jnp.float32))

    flops = 2 * B * H * W * (9 * Cin) * Chid + 2 * B * Chid * NPAD
    bytes_accessed = (x_pad.size * 2 + wconv_k.size * 2 + bconv_k.size * 4
                      + wcls_k.size * 2 + bcls_k.size * 4 + B * NPAD * 4)

    out = pl.pallas_call(
        _fa_kernel,
        out_shape=jax.ShapeDtypeStruct((B, 1, NPAD), jnp.float32),
        grid_spec=pltpu.PrefetchScalarGridSpec(
            num_scalar_prefetch=0,
            grid=(B,),
            in_specs=[
                pl.BlockSpec((1, Hp, Wp, Cin), lambda b: (b, 0, 0, 0)),
                pl.BlockSpec((9 * Cin, Chid), lambda b: (0, 0)),
                pl.BlockSpec((1, Chid), lambda b: (0, 0)),
                pl.BlockSpec((Chid, NPAD), lambda b: (0, 0)),
                pl.BlockSpec((1, NPAD), lambda b: (0, 0)),
            ],
            out_specs=pl.BlockSpec((1, 1, NPAD), lambda b: (b, 0, 0)),
            scratch_shapes=[pltpu.VMEM((H * W, 9 * Cin), jnp.bfloat16)],
        ),
        compiler_params=pltpu.CompilerParams(
            dimension_semantics=("parallel",),
        ),
        cost_estimate=pl.CostEstimate(flops=flops, transcendentals=0,
                                      bytes_accessed=bytes_accessed),
    )(x_pad, wconv_k, bconv_k, wcls_k, bcls_k)

    # NOTE: for very large H*W, add a second ("arbitrary") row-tile grid axis
    # with a pl.when-init/finalize pooled-sum accumulator; unnecessary at these
    # shapes since one batch element fits VMEM comfortably on all chips.
    return out[:, 0, :Ncls]


def _reference_forward(x_nchw, wconv, bconv, wcls, bcls):
    """Plain-JAX f32 reference with the module's math (for a sanity check)."""
    x = jnp.transpose(x_nchw, (0, 2, 3, 1)).astype(jnp.float32)
    B, H, W, Cin = x.shape
    Chid = wconv.shape[0]
    xp = jnp.pad(x, ((0, 0), (1, 1), (1, 1), (0, 0)))
    wk = jnp.transpose(wconv, (2, 3, 1, 0)).astype(jnp.float32)
    y = jnp.zeros((B, H, W, Chid), jnp.float32)
    for dy in range(3):
        for dx in range(3):
            y = y + jnp.einsum('bhwc,cd->bhwd',
                               xp[:, dy:dy + H, dx:dx + W, :], wk[dy, dx])
    y = jnp.maximum(y + bconv.astype(jnp.float32), 0.0)
    emb = jnp.mean(y, axis=(1, 2))
    return emb @ wcls.T.astype(jnp.float32) + bcls.astype(jnp.float32)


if __name__ == "__main__":
    # Small, deterministic synthetic setup.
    B, Cin, H, W = 2, 4, 16, 16
    Chid, Ncls = 32, 8

    key = jax.random.PRNGKey(0)
    kx, kwc, kbc, kwl, kbl = jax.random.split(key, 5)
    x = jax.random.normal(kx, (B, Cin, H, W), dtype=jnp.float32)
    wconv = 0.1 * jax.random.normal(kwc, (Chid, Cin, 3, 3), dtype=jnp.float32)
    bconv = 0.1 * jax.random.normal(kbc, (Chid,), dtype=jnp.float32)
    wcls = 0.1 * jax.random.normal(kwl, (Ncls, Chid), dtype=jnp.float32)
    bcls = 0.1 * jax.random.normal(kbl, (Ncls,), dtype=jnp.float32)

    logits = fa_wrapper_forward(x, wconv, bconv, wcls, bcls)
    jax.block_until_ready(logits)

    ref = _reference_forward(x, wconv, bconv, wcls, bcls)
    # bf16 matmul operands with f32 accumulation -> loosen tolerance vs f32 ref.
    np.testing.assert_allclose(np.asarray(logits), np.asarray(ref),
                               rtol=2e-2, atol=2e-2)

    print("KERNEL_OK")
</pallas_src>

<mosaic_0001>
module attributes {stable_mosaic.version = 11 : i64} {
  func.func @_fa_kernel(%arg0: i32, %arg1: memref<1x18x18x4xbf16, #tpu.memory_space<vmem>>, %arg2: memref<36x32xbf16, #tpu.memory_space<vmem>>, %arg3: memref<1x32xf32, #tpu.memory_space<vmem>>, %arg4: memref<32x128xbf16, #tpu.memory_space<vmem>>, %arg5: memref<1x128xf32, #tpu.memory_space<vmem>>, %arg6: memref<1x1x128xf32, #tpu.memory_space<vmem>>, %arg7: memref<256x36xbf16, #tpu.memory_space<vmem>>) attributes {dimension_semantics = [#tpu.dimension_semantics<parallel>], iteration_bounds = array<i64: 2>, scalar_prefetch = 0 : i64, scratch_operands = 1 : i64, tpu.core_type = #tpu.core_type<tc>, window_params = [{transform_indices = @transform_0, window_bounds = array<i64: 1, 18, 18, 4>}, {pipeline_mode = #tpu.pipeline_mode<synchronous>, transform_indices = @transform_1, window_bounds = array<i64: 36, 32>}, {pipeline_mode = #tpu.pipeline_mode<synchronous>, transform_indices = @transform_2, window_bounds = array<i64: 1, 32>}, {pipeline_mode = #tpu.pipeline_mode<synchronous>, transform_indices = @transform_3, window_bounds = array<i64: 32, 128>}, {pipeline_mode = #tpu.pipeline_mode<synchronous>, transform_indices = @transform_4, window_bounds = array<i64: 1, 128>}, {transform_indices = @transform_5, window_bounds = array<i64: 1, 1, 128>}]} {
    %c0 = arith.constant 0 : index
    %c0_0 = arith.constant 0 : index
    %c0_1 = arith.constant 0 : index
    %c0_2 = arith.constant 0 : index
    %0 = vector.load %arg1[%c0, %c0_0, %c0_1, %c0_2] : memref<1x18x18x4xbf16, #tpu.memory_space<vmem>>, vector<1x16x16x4xbf16>
    %1 = vector.shape_cast %0 : vector<1x16x16x4xbf16> to vector<16x16x4xbf16>
    %2 = vector.shape_cast %1 : vector<16x16x4xbf16> to vector<256x4xbf16>
    %c0_3 = arith.constant 0 : index
    %c0_4 = arith.constant 0 : index
    %3 = vector.load %arg7[%c0_3, %c0_4] : memref<256x36xbf16, #tpu.memory_space<vmem>>, vector<256x4xbf16>
    tpu.vector_store %arg7[%c0_3, %c0_4], %2 {strides = array<i32>} : memref<256x36xbf16, #tpu.memory_space<vmem>>, vector<256x4xbf16>,
    %c0_5 = arith.constant 0 : index
    %c0_6 = arith.constant 0 : index
    %c1 = arith.constant 1 : index
    %c0_7 = arith.constant 0 : index
    %4 = vector.load %arg1[%c0_5, %c0_6, %c1, %c0_7] : memref<1x18x18x4xbf16, #tpu.memory_space<vmem>>, vector<1x16x16x4xbf16>
    %5 = vector.shape_cast %4 : vector<1x16x16x4xbf16> to vector<16x16x4xbf16>
    %6 = vector.shape_cast %5 : vector<16x16x4xbf16> to vector<256x4xbf16>
    %c0_8 = arith.constant 0 : index
    %c4 = arith.constant 4 : index
    %7 = vector.load %arg7[%c0_8, %c4] : memref<256x36xbf16, #tpu.memory_space<vmem>>, vector<256x4xbf16>
    tpu.vector_store %arg7[%c0_8, %c4], %6 {strides = array<i32>} : memref<256x36xbf16, #tpu.memory_space<vmem>>, vector<256x4xbf16>,
    %c0_9 = arith.constant 0 : index
    %c0_10 = arith.constant 0 : index
    %c2 = arith.constant 2 : index
    %c0_11 = arith.constant 0 : index
    %8 = vector.load %arg1[%c0_9, %c0_10, %c2, %c0_11] : memref<1x18x18x4xbf16, #tpu.memory_space<vmem>>, vector<1x16x16x4xbf16>
    %9 = vector.shape_cast %8 : vector<1x16x16x4xbf16> to vector<16x16x4xbf16>
    %10 = vector.shape_cast %9 : vector<16x16x4xbf16> to vector<256x4xbf16>
    %c0_12 = arith.constant 0 : index
    %c8 = arith.constant 8 : index
    %11 = vector.load %arg7[%c0_12, %c8] : memref<256x36xbf16, #tpu.memory_space<vmem>>, vector<256x4xbf16>
    tpu.vector_store %arg7[%c0_12, %c8], %10 {strides = array<i32>} : memref<256x36xbf16, #tpu.memory_space<vmem>>, vector<256x4xbf16>,
    %c0_13 = arith.constant 0 : index
    %c1_14 = arith.constant 1 : index
    %c0_15 = arith.constant 0 : index
    %c0_16 = arith.constant 0 : index
    %12 = vector.load %arg1[%c0_13, %c1_14, %c0_15, %c0_16] : memref<1x18x18x4xbf16, #tpu.memory_space<vmem>>, vector<1x16x16x4xbf16>
    %13 = vector.shape_cast %12 : vector<1x16x16x4xbf16> to vector<16x16x4xbf16>
    %14 = vector.shape_cast %13 : vector<16x16x4xbf16> to vector<256x4xbf16>
    %c0_17 = arith.constant 0 : index
    %c12 = arith.constant 12 : index
    %15 = vector.load %arg7[%c0_17, %c12] : memref<256x36xbf16, #tpu.memory_space<vmem>>, vector<256x4xbf16>
    tpu.vector_store %arg7[%c0_17, %c12], %14 {strides = array<i32>} : memref<256x36xbf16, #tpu.memory_space<vmem>>, vector<256x4xbf16>,
    %c0_18 = arith.constant 0 : index
    %c1_19 = arith.constant 1 : index
    %c1_20 = arith.constant 1 : index
    %c0_21 = arith.constant 0 : index
    %16 = vector.load %arg1[%c0_18, %c1_19, %c1_20, %c0_21] : memref<1x18x18x4xbf16, #tpu.memory_space<vmem>>, vector<1x16x16x4xbf16>
    %17 = vector.shape_cast %16 : vector<1x16x16x4xbf16> to vector<16x16x4xbf16>
    %18 = vector.shape_cast %17 : vector<16x16x4xbf16> to vector<256x4xbf16>
    %c0_22 = arith.constant 0 : index
    %c16 = arith.constant 16 : index
    %19 = vector.load %arg7[%c0_22, %c16] : memref<256x36xbf16, #tpu.memory_space<vmem>>, vector<256x4xbf16>
    tpu.vector_store %arg7[%c0_22, %c16], %18 {strides = array<i32>} : memref<256x36xbf16, #tpu.memory_space<vmem>>, vector<256x4xbf16>,
    %c0_23 = arith.constant 0 : index
    %c1_24 = arith.constant 1 : index
    %c2_25 = arith.constant 2 : index
    %c0_26 = arith.constant 0 : index
    %20 = vector.load %arg1[%c0_23, %c1_24, %c2_25, %c0_26] : memref<1x18x18x4xbf16, #tpu.memory_space<vmem>>, vector<1x16x16x4xbf16>
    %21 = vector.shape_cast %20 : vector<1x16x16x4xbf16> to vector<16x16x4xbf16>
    %22 = vector.shape_cast %21 : vector<16x16x4xbf16> to vector<256x4xbf16>
    %c0_27 = arith.constant 0 : index
    %c20 = arith.constant 20 : index
    %23 = vector.load %arg7[%c0_27, %c20] : memref<256x36xbf16, #tpu.memory_space<vmem>>, vector<256x4xbf16>
    tpu.vector_store %arg7[%c0_27, %c20], %22 {strides = array<i32>} : memref<256x36xbf16, #tpu.memory_space<vmem>>, vector<256x4xbf16>,
    %c0_28 = arith.constant 0 : index
    %c2_29 = arith.constant 2 : index
    %c0_30 = arith.constant 0 : index
    %c0_31 = arith.constant 0 : index
    %24 = vector.load %arg1[%c0_28, %c2_29, %c0_30, %c0_31] : memref<1x18x18x4xbf16, #tpu.memory_space<vmem>>, vector<1x16x16x4xbf16>
    %25 = vector.shape_cast %24 : vector<1x16x16x4xbf16> to vector<16x16x4xbf16>
    %26 = vector.shape_cast %25 : vector<16x16x4xbf16> to vector<256x4xbf16>
    %c0_32 = arith.constant 0 : index
    %c24 = arith.constant 24 : index
    %27 = vector.load %arg7[%c0_32, %c24] : memref<256x36xbf16, #tpu.memory_space<vmem>>, vector<256x4xbf16>
    tpu.vector_store %arg7[%c0_32, %c24], %26 {strides = array<i32>} : memref<256x36xbf16, #tpu.memory_space<vmem>>, vector<256x4xbf16>,
    %c0_33 = arith.constant 0 : index
    %c2_34 = arith.constant 2 : index
    %c1_35 = arith.constant 1 : index
    %c0_36 = arith.constant 0 : index
    %28 = vector.load %arg1[%c0_33, %c2_34, %c1_35, %c0_36] : memref<1x18x18x4xbf16, #tpu.memory_space<vmem>>, vector<1x16x16x4xbf16>
    %29 = vector.shape_cast %28 : vector<1x16x16x4xbf16> to vector<16x16x4xbf16>
    %30 = vector.shape_cast %29 : vector<16x16x4xbf16> to vector<256x4xbf16>
    %c0_37 = arith.constant 0 : index
    %c28 = arith.constant 28 : index
    %31 = vector.load %arg7[%c0_37, %c28] : memref<256x36xbf16, #tpu.memory_space<vmem>>, vector<256x4xbf16>
    tpu.vector_store %arg7[%c0_37, %c28], %30 {strides = array<i32>} : memref<256x36xbf16, #tpu.memory_space<vmem>>, vector<256x4xbf16>,
    %c0_38 = arith.constant 0 : index
    %c2_39 = arith.constant 2 : index
    %c2_40 = arith.constant 2 : index
    %c0_41 = arith.constant 0 : index
    %32 = vector.load %arg1[%c0_38, %c2_39, %c2_40, %c0_41] : memref<1x18x18x4xbf16, #tpu.memory_space<vmem>>, vector<1x16x16x4xbf16>
    %33 = vector.shape_cast %32 : vector<1x16x16x4xbf16> to vector<16x16x4xbf16>
    %34 = vector.shape_cast %33 : vector<16x16x4xbf16> to vector<256x4xbf16>
    %c0_42 = arith.constant 0 : index
    %c32 = arith.constant 32 : index
    %35 = vector.load %arg7[%c0_42, %c32] : memref<256x36xbf16, #tpu.memory_space<vmem>>, vector<256x4xbf16>
    tpu.vector_store %arg7[%c0_42, %c32], %34 {strides = array<i32>} : memref<256x36xbf16, #tpu.memory_space<vmem>>, vector<256x4xbf16>,
    %c0_43 = arith.constant 0 : index
    %c0_44 = arith.constant 0 : index
    %36 = vector.load %arg7[%c0_43, %c0_44] : memref<256x36xbf16, #tpu.memory_space<vmem>>, vector<256x36xbf16>
    %c0_45 = arith.constant 0 : index
    %c0_46 = arith.constant 0 : index
    %37 = vector.load %arg2[%c0_45, %c0_46] : memref<36x32xbf16, #tpu.memory_space<vmem>>, vector<36x32xbf16>
    %cst = arith.constant dense<0.000000e+00> : vector<256x32xf32>
    %38 = tpu.matmul %36, %37, %cst {dimension_numbers = #tpu.dot_dimension_numbers<[1], [0], [0], [1], [0, 0, 1, 1], [], []>} : vector<256x36xbf16>, vector<36x32xbf16>, vector<256x32xf32> -> vector<256x32xf32>
    %c0_47 = arith.constant 0 : index
    %c0_48 = arith.constant 0 : index
    %39 = vector.load %arg3[%c0_47, %c0_48] : memref<1x32xf32, #tpu.memory_space<vmem>>, vector<1x32xf32>
    %40 = vector.broadcast %39 : vector<1x32xf32> to vector<256x32xf32>
    %41 = arith.addf %38, %40 : vector<256x32xf32>
    %cst_49 = arith.constant 0.000000e+00 : f32
    %42 = vector.broadcast %cst_49 : f32 to vector<256x32xf32>
    %43 = arith.maximumf %41, %42 : vector<256x32xf32>
    %cst_50 = arith.constant dense<0.000000e+00> : vector<32xf32>
    %44 = vector.multi_reduction <add>, %43, %cst_50 [0] : vector<256x32xf32> to vector<32xf32>
    %45 = vector.shape_cast %44 : vector<32xf32> to vector<1x32xf32>
    %cst_51 = arith.constant 3.906250e-03 : f32
    %46 = vector.broadcast %cst_51 : f32 to vector<1x32xf32>
    %47 = arith.mulf %45, %46 : vector<1x32xf32>
    %48 = arith.truncf %47 : vector<1x32xf32> to vector<1x32xbf16>
    %c0_52 = arith.constant 0 : index
    %c0_53 = arith.constant 0 : index
    %49 = vector.load %arg4[%c0_52, %c0_53] : memref<32x128xbf16, #tpu.memory_space<vmem>>, vector<32x128xbf16>
    %cst_54 = arith.constant dense<0.000000e+00> : vector<1x128xf32>
    %50 = tpu.matmul %48, %49, %cst_54 {dimension_numbers = #tpu.dot_dimension_numbers<[1], [0], [0], [1], [0, 0, 1, 1], [], []>} : vector<1x32xbf16>, vector<32x128xbf16>, vector<1x128xf32> -> vector<1x128xf32>
    %c0_55 = arith.constant 0 : index
    %c0_56 = arith.constant 0 : index
    %51 = vector.load %arg5[%c0_55, %c0_56] : memref<1x128xf32, #tpu.memory_space<vmem>>, vector<1x128xf32>
    %52 = arith.addf %50, %51 : vector<1x128xf32>
    %c0_57 = arith.constant 0 : index
    %c0_58 = arith.constant 0 : index
    %c0_59 = arith.constant 0 : index
    %53 = vector.load %arg6[%c0_57, %c0_58, %c0_59] : memref<1x1x128xf32, #tpu.memory_space<vmem>>, vector<1x1x128xf32>
    %54 = vector.shape_cast %53 : vector<1x1x128xf32> to vector<1x128xf32>
    %55 = vector.shape_cast %52 : vector<1x128xf32> to vector<1x1x128xf32>
    tpu.vector_store %arg6[%c0_57, %c0_58, %c0_59], %55 {strides = array<i32>} : memref<1x1x128xf32, #tpu.memory_space<vmem>>, vector<1x1x128xf32>,
    return
  }
  func.func @transform_0(%arg0: i32) -> (i32, i32, i32, i32) {
    %c0_i32 = arith.constant 0 : i32
    %c0_i32_0 = arith.constant 0 : i32
    %c0_i32_1 = arith.constant 0 : i32
    %c0_i32_2 = arith.constant 0 : i32
    return %arg0, %c0_i32, %c0_i32_0, %c0_i32_1 : i32, i32, i32, i32
  }
  func.func @transform_1(%arg0: i32) -> (i32, i32) {
    %c0_i32 = arith.constant 0 : i32
    %c0_i32_0 = arith.constant 0 : i32
    %c0_i32_1 = arith.constant 0 : i32
    return %c0_i32, %c0_i32_0 : i32, i32
  }
  func.func @transform_2(%arg0: i32) -> (i32, i32) {
    %c0_i32 = arith.constant 0 : i32
    %c0_i32_0 = arith.constant 0 : i32
    %c0_i32_1 = arith.constant 0 : i32
    return %c0_i32, %c0_i32_0 : i32, i32
  }
  func.func @transform_3(%arg0: i32) -> (i32, i32) {
    %c0_i32 = arith.constant 0 : i32
    %c0_i32_0 = arith.constant 0 : i32
    %c0_i32_1 = arith.constant 0 : i32
    return %c0_i32, %c0_i32_0 : i32, i32
  }
  func.func @transform_4(%arg0: i32) -> (i32, i32) {
    %c0_i32 = arith.constant 0 : i32
    %c0_i32_0 = arith.constant 0 : i32
    %c0_i32_1 = arith.constant 0 : i32
    return %c0_i32, %c0_i32_0 : i32, i32
  }
  func.func @transform_5(%arg0: i32) -> (i32, i32, i32) {
    %c0_i32 = arith.constant 0 : i32
    %c0_i32_0 = arith.constant 0 : i32
    %c0_i32_1 = arith.constant 0 : i32
    return %arg0, %c0_i32, %c0_i32_0 : i32, i32, i32
  }
}

</mosaic_0001>

<llo_original>
// kernel: tpu_custom_call.1
$region0: #{tpu_custom_call.1}
  #allocation0 [shape = 'u32[]', space=smem, size = 0x4, offset = 0x4, fixed_abs, tag = 'smem constant byte address 0x4 - core index']
  #allocation1 [shape = 'u32[144,128]{1,0:T(1,128)}', space=vmem, size = 0x12000, scoped, tag = 'internal scratch']
  #allocation2 [shape = 'bf16[256,36]{1,0:T(16,128)(2,1)}', space=vmem, size = 0x10000, scoped, tag = 'scratch operand']
  %s0 = inlined_call_operand.vmem [shape: bf16[2,18,18,4], index: 0, kind: input, shape index: {}]
  %s1 = inlined_call_operand.vmem [shape: bf16[36,32], index: 1, kind: input, shape index: {}]
  %s2 = inlined_call_operand.vmem [shape: f32[1,32], index: 2, kind: input, shape index: {}]
  %s3 = inlined_call_operand.vmem [shape: bf16[32,128], index: 3, kind: input, shape index: {}]
  %s4 = inlined_call_operand.vmem [shape: f32[1,128], index: 4, kind: input, shape index: {}]
  %s5 = inlined_call_operand.hbm [shape: f32[2,1,128], index: 5, kind: output, shape index: {}]
  %s6 = sld [smem:[#allocation0]]
  $region53: #{tpu_custom_call.1} parent=0
    _
  %s8 = ssub.s32 1, %s6
  %s9 = scalar_select 0, %s8, %s6
  $region1: #{tpu_custom_call.1} parent=0
    #allocation3 [shape = 'u8[1024]{0}', space=vmem, size = 0x400, scoped, tag = 'output window, operand 0']
    #allocation4 [shape = 's32[2]{0}', space=sflag, size = 0x8, scoped, tag = 'scoped memory for tpu_custom_call.1']
    %10 = vsyncpa [#allocation4], 0
    %s11 = scalar_lea.sflag [#allocation4], 1
    %12 = vsyncpa %s11, 0
    loop: start=0, step=1, limit=4
    $region2: #{tpu_custom_call.1} parent=1 // loop_pre_header
      _
    $region3: #{tpu_custom_call.1} parent=1 // loop_header
      %s14 = sphi 0, %s18
      %p15 = scmp.ge.s32.totalorder %s14, 4
      %s24 = sphi 0, %s26
      %s27 = sphi 0, %s24
      %s28 = sphi 0, %s27
      %s44 = sphi 0, %s28
      %s48 = sphi 0, %s48
      %s50 = sphi 0, %s48
      %s51 = sphi 0, %s50
      %s65 = sphi 0, %s51
      %s69 = sphi 0, %s69
      %s71 = sphi 0, %s69
      %s72 = sphi 0, %s71
      %s86 = sphi 0, %s72
      %s90 = sphi 0, %s90
      %s92 = sphi 0, %s90
      %s93 = sphi 0, %s92
      %s107 = sphi 0, %s93
      %s111 = sphi 0, %s111
      %s113 = sphi 0, %s111
      %s114 = sphi 0, %s113
      %s128 = sphi 0, %s114
      %s134 = sphi 0, %s136
      %s137 = sphi 0, %s134
      %s138 = sphi 0, %s137
      %s154 = sphi 0, %s138
    $region4: #{tpu_custom_call.1} parent=1 // loop_header_branch
      %17 = sbr.rel (%p15) target = $region8
    $region5: #{tpu_custom_call.1} parent=1 // loop_body
      %s19 = ssub.s32 %s14, 1
      %s20 = ssub.s32 %s14, 2
      %s21 = sadd.s32 %s14, 1
      %s22 = ssub.s32 %s14, %s21
      %p23 = scmp.eq.s32.totalorder %s22, 0
      %s25 = sadd.s32 %s24, 1
      %s26 = scalar_select %p23, %s24, %s25
      %p29 = pneg %p23
      %p30 = scmp.eq.s32.totalorder %s14, 1
      %p31 = por %p29, %p30
      %p32 = scmp.ne.s32.totalorder %s24, %s27
      %p33 = scmp.eq.s32.totalorder %s14, 0
      %p34 = por %p32, %p33
      %p35 = scmp.ne.s32.totalorder %s24, %s27
      %p36 = scmp.eq.s32.totalorder %s19, 1
      %p37 = por %p35, %p36
      %p38 = scmp.ne.s32.totalorder %s27, %s28
      %p39 = scmp.eq.s32.totalorder %s19, 0
      %p40 = por %p38, %p39
      %p41 = scmp.ne.s32.totalorder %s27, %s28
      %p42 = scmp.eq.s32.totalorder %s20, 1
      %p43 = por %p41, %p42
      %p45 = scmp.ne.s32.totalorder %s28, %s44
      %p46 = scmp.eq.s32.totalorder %s20, 0
      %p47 = por %p45, %p46
      %s49 = sadd.s32 %s48, 1
      %p52 = scmp.eq.s32.totalorder %s14, 1
      %p53 = scmp.ne.s32.totalorder %s48, %s50
      %p54 = scmp.eq.s32.totalorder %s14, 0
      %p55 = por %p53, %p54
      %p56 = scmp.ne.s32.totalorder %s48, %s50
      %p57 = scmp.eq.s32.totalorder %s19, 1
      %p58 = por %p56, %p57
      %p59 = scmp.ne.s32.totalorder %s50, %s51
      %p60 = scmp.eq.s32.totalorder %s19, 0
      %p61 = por %p59, %p60
      %p62 = scmp.ne.s32.totalorder %s50, %s51
      %p63 = scmp.eq.s32.totalorder %s20, 1
      %p64 = por %p62, %p63
      %p66 = scmp.ne.s32.totalorder %s51, %s65
      %p67 = scmp.eq.s32.totalorder %s20, 0
      %p68 = por %p66, %p67
      %s70 = sadd.s32 %s69, 1
      %p73 = scmp.eq.s32.totalorder %s14, 1
      %p74 = scmp.ne.s32.totalorder %s69, %s71
      %p75 = scmp.eq.s32.totalorder %s14, 0
      %p76 = por %p74, %p75
      %p77 = scmp.ne.s32.totalorder %s69, %s71
      %p78 = scmp.eq.s32.totalorder %s19, 1
      %p79 = por %p77, %p78
      %p80 = scmp.ne.s32.totalorder %s71, %s72
      %p81 = scmp.eq.s32.totalorder %s19, 0
      %p82 = por %p80, %p81
      %p83 = scmp.ne.s32.totalorder %s71, %s72
      %p84 = scmp.eq.s32.totalorder %s20, 1
      %p85 = por %p83, %p84
      %p87 = scmp.ne.s32.totalorder %s72, %s86
      %p88 = scmp.eq.s32.totalorder %s20, 0
      %p89 = por %p87, %p88
      %s91 = sadd.s32 %s90, 1
      %p94 = scmp.eq.s32.totalorder %s14, 1
      %p95 = scmp.ne.s32.totalorder %s90, %s92
      %p96 = scmp.eq.s32.totalorder %s14, 0
      %p97 = por %p95, %p96
      %p98 = scmp.ne.s32.totalorder %s90, %s92
      %p99 = scmp.eq.s32.totalorder %s19, 1
      %p100 = por %p98, %p99
      %p101 = scmp.ne.s32.totalorder %s92, %s93
      %p102 = scmp.eq.s32.totalorder %s19, 0
      %p103 = por %p101, %p102
      %p104 = scmp.ne.s32.totalorder %s92, %s93
      %p105 = scmp.eq.s32.totalorder %s20, 1
      %p106 = por %p104, %p105
      %p108 = scmp.ne.s32.totalorder %s93, %s107
      %p109 = scmp.eq.s32.totalorder %s20, 0
      %p110 = por %p108, %p109
      %s112 = sadd.s32 %s111, 1
      %p115 = scmp.eq.s32.totalorder %s14, 1
      %p116 = scmp.ne.s32.totalorder %s111, %s113
      %p117 = scmp.eq.s32.totalorder %s14, 0
      %p118 = por %p116, %p117
      %p119 = scmp.ne.s32.totalorder %s111, %s113
      %p120 = scmp.eq.s32.totalorder %s19, 1
      %p121 = por %p119, %p120
      %p122 = scmp.ne.s32.totalorder %s113, %s114
      %p123 = scmp.eq.s32.totalorder %s19, 0
      %p124 = por %p122, %p123
      %p125 = scmp.ne.s32.totalorder %s113, %s114
      %p126 = scmp.eq.s32.totalorder %s20, 1
      %p127 = por %p125, %p126
      %p129 = scmp.ne.s32.totalorder %s114, %s128
      %p130 = scmp.eq.s32.totalorder %s20, 0
      %p131 = por %p129, %p130
      %s132 = ssub.s32 %s14, %s21
      %p133 = scmp.eq.s32.totalorder %s132, 0
      %s135 = sadd.s32 %s134, 1
      %s136 = scalar_select %p133, %s134, %s135
      %p139 = pneg %p133
      %p140 = scmp.eq.s32.totalorder %s14, 1
      %p141 = por %p139, %p140
      %p142 = scmp.ne.s32.totalorder %s134, %s137
      %p143 = scmp.eq.s32.totalorder %s14, 0
      %p144 = por %p142, %p143
      %p145 = scmp.ne.s32.totalorder %s134, %s137
      %p146 = scmp.eq.s32.totalorder %s19, 1
      %p147 = por %p145, %p146
      %p148 = scmp.ne.s32.totalorder %s137, %s138
      %p149 = scmp.eq.s32.totalorder %s19, 0
      %p150 = por %p148, %p149
      %p151 = scmp.ne.s32.totalorder %s137, %s138
      %p152 = scmp.eq.s32.totalorder %s20, 1
      %p153 = por %p151, %p152
      %p155 = scmp.ne.s32.totalorder %s138, %s154
      %p156 = scmp.eq.s32.totalorder %s20, 0
      %p157 = por %p155, %p156
      %p158 = scmp.le.s32.totalorder 1, %s14
      %p159 = scmp.lt.s32.totalorder %s14, 3
      %p160 = pnand %p158, %p159
      %p161 = pneg %p160
      // Predicated region
      $region9: #{tpu_custom_call.1} parent=5 // pred_check
        _
      $region10: #{tpu_custom_call.1} parent=5 // pred_check_branch
        %163 = sbr.rel (%p160) target = $region12
      $region11: #{tpu_custom_call.1} parent=5 // pred_region
        %s164 = ssub.s32 %s14, 1
        // Predicated region
        $region13: #{tpu_custom_call.1} parent=11 // pred_check
          %p165 = pneg %p61
        $region14: #{tpu_custom_call.1} parent=11 // pred_check_branch
          %167 = sbr.rel (%p165) target = $region16
        $region15: #{tpu_custom_call.1} parent=11 // pred_region
          _
        $region16: #{tpu_custom_call.1} parent=11 // pred_fallthru
          _
        // Predicated region
        $region17: #{tpu_custom_call.1} parent=11 // pred_check
          %p168 = pneg %p82
        $region18: #{tpu_custom_call.1} parent=11 // pred_check_branch
          %170 = sbr.rel (%p168) target = $region20
        $region19: #{tpu_custom_call.1} parent=11 // pred_region
          _
        $region20: #{tpu_custom_call.1} parent=11 // pred_fallthru
          _
        // Predicated region
        $region21: #{tpu_custom_call.1} parent=11 // pred_check
          %p171 = pneg %p103
        $region22: #{tpu_custom_call.1} parent=11 // pred_check_branch
          %173 = sbr.rel (%p171) target = $region24
        $region23: #{tpu_custom_call.1} parent=11 // pred_region
          _
        $region24: #{tpu_custom_call.1} parent=11 // pred_fallthru
          _
        // Predicated region
        $region25: #{tpu_custom_call.1} parent=11 // pred_check
          %p174 = pneg %p124
        $region26: #{tpu_custom_call.1} parent=11 // pred_check_branch
          %176 = sbr.rel (%p174) target = $region28
        $region27: #{tpu_custom_call.1} parent=11 // pred_region
          _
        $region28: #{tpu_custom_call.1} parent=11 // pred_fallthru
          _
      $region12: #{tpu_custom_call.1} parent=5 // pred_fallthru
        _
      %p177 = scmp.lt.s32.totalorder %s14, 2
      // Predicated region
      $region29: #{tpu_custom_call.1} parent=5 // pred_check
        %p178 = pneg %p177
      $region30: #{tpu_custom_call.1} parent=5 // pred_check_branch
        %180 = sbr.rel (%p178) target = $region32
      $region31: #{tpu_custom_call.1} parent=5 // pred_region
        // Predicated region
        $region33: #{tpu_custom_call.1} parent=31 // pred_check
          %p181 = pneg %p34
        $region34: #{tpu_custom_call.1} parent=31 // pred_check_branch
          %183 = sbr.rel (%p181) target = $region36
        $region35: #{tpu_custom_call.1} parent=31 // pred_region
          %p184 = scmp.lt.s32.totalorder %s14, 1
          %s185 = scalar_select %p184, %s14, 1
          %s186 = smul.addr %s185, 54
          %s187 = smul.addr %s186, 4
          %s188 = scalar_lea.vmem %s0, %s187
        $region36: #{tpu_custom_call.1} parent=31 // pred_fallthru
          _
      $region32: #{tpu_custom_call.1} parent=5 // pred_fallthru
        _
      %p189 = scmp.le.s32.totalorder 1, %s14
      %p190 = scmp.lt.s32.totalorder %s14, 3
      %p191 = pnand %p189, %p190
      %p192 = pneg %p191
      // Predicated region
      $region37: #{tpu_custom_call.1} parent=5 // pred_check
        _
      $region38: #{tpu_custom_call.1} parent=5 // pred_check_branch
        %194 = sbr.rel (%p191) target = $region40
      $region39: #{tpu_custom_call.1} parent=5 // pred_region
        %s195 = ssub.s32 %s14, 1
        %p196 = scmp.lt.s32.totalorder %s19, 1
        %s197 = scalar_select %p196, %s19, 1
        %s198 = smul.addr %s197, 54
        %s199 = smul.addr %s198, 4
        %s200 = scalar_lea.vmem %s0, %s199
        %p201 = pneg %p40
        %p202 = pneg %p37
        %p203 = pneg %p61
        %p204 = pneg %p58
        %p205 = pneg %p82
        %p206 = pneg %p79
        %p207 = pneg %p103
        %p208 = pneg %p100
        %p209 = pneg %p124
        %p210 = pneg %p121
        %p211 = pneg %p150
        %p212 = pneg %p147
        %s213 = sand.u32 %s137, 1
        %s214 = scalar_lea.sflag [#allocation4], %s213
        %s215 = sand.u32 %s137, 1
        %s216 = scalar_lea.vmem [#allocation3], %s215
        %p217 = scmp.lt.s32.totalorder %s19, 1
        %s218 = scalar_select %p217, %s19, 1
        %s219 = smul.addr %s218, 54
        %s220 = smul.addr %s219, 4
        %s221 = scalar_lea.vmem %s0, %s220
        %v223 = vld [vmem:[%s221] sm:$0xf]
        %v224 = vld [vmem:[%s221 + $0x4] sm:$0xf]
        %v225 = vld [vmem:[%s221 + $0xc] sm:$0xf]
        %v226 = vld [vmem:[%s221 + $0x10] sm:$0xf]
        %v227 = vld [vmem:[%s221 + $0x18] sm:$0xf]
        %v228 = vld [vmem:[%s221 + $0x1c] sm:$0xf]
        %v229 = vld [vmem:[%s221 + $0x24] sm:$0xf]
        %v230 = vld [vmem:[%s221 + $0x28] sm:$0xf]
        %v231 = vld [vmem:[%s221 + $0x30] sm:$0xf]
        %v232 = vld [vmem:[%s221 + $0x34] sm:$0xf]
        %v233 = vld [vmem:[%s221 + $0x3c] sm:$0xf]
        %v234 = vld [vmem:[%s221 + $0x40] sm:$0xf]
        %v235 = vld [vmem:[%s221 + $0x48] sm:$0xf]
        %v236 = vld [vmem:[%s221 + $0x4c] sm:$0xf]
        %v237 = vld [vmem:[%s221 + $0x54] sm:$0xf]
        %v238 = vld [vmem:[%s221 + $0x58] sm:$0xf]
        %v239 = vld [vmem:[%s221 + $0x60] sm:$0xf]
        %v240 = vld [vmem:[%s221 + $0x64] sm:$0xf]
        %v241 = vld [vmem:[%s221 + $0x6c] sm:$0xf]
        %v242 = vld [vmem:[%s221 + $0x70] sm:$0xf]
        %v243 = vld [vmem:[%s221 + $0x78] sm:$0xf]
        %v244 = vld [vmem:[%s221 + $0x7c] sm:$0xf]
        %v245 = vld [vmem:[%s221 + $0x84] sm:$0xf]
        %v246 = vld [vmem:[%s221 + $0x88] sm:$0xf]
        %v247 = vld [vmem:[%s221 + $0x90] sm:$0xf]
        %v248 = vld [vmem:[%s221 + $0x94] sm:$0xf]
        %v249 = vld [vmem:[%s221 + $0x9c] sm:$0xf]
        %v250 = vld [vmem:[%s221 + $0xa0] sm:$0xf]
        %v251 = vld [vmem:[%s221 + $0xa8] sm:$0xf]
        %v252 = vld [vmem:[%s221 + $0xac] sm:$0xf]
        %v253 = vld [vmem:[%s221 + $0xb4] sm:$0xf]
        %v254 = vld [vmem:[%s221 + $0xb8] sm:$0xf]
        %v287 = vunpack.c.l.b16 %v223
        %v288 = vunpack.c.l.b16 %v224
        %v289 = vunpack.c.l.b16 %v225
        %v290 = vunpack.c.l.b16 %v226
        %v291 = vunpack.c.l.b16 %v227
        %v292 = vunpack.c.l.b16 %v228
        %v293 = vunpack.c.l.b16 %v229
        %v294 = vunpack.c.l.b16 %v230
        %v295 = vunpack.c.l.b16 %v231
        %v296 = vunpack.c.l.b16 %v232
        %v297 = vunpack.c.l.b16 %v233
        %v298 = vunpack.c.l.b16 %v234
        %v299 = vunpack.c.l.b16 %v235
        %v300 = vunpack.c.l.b16 %v236
        %v301 = vunpack.c.l.b16 %v237
        %v302 = vunpack.c.l.b16 %v238
        %v303 = vunpack.c.l.b16 %v239
        %v304 = vunpack.c.l.b16 %v240
        %v305 = vunpack.c.l.b16 %v241
        %v306 = vunpack.c.l.b16 %v242
        %v307 = vunpack.c.l.b16 %v243
        %v308 = vunpack.c.l.b16 %v244
        %v309 = vunpack.c.l.b16 %v245
        %v310 = vunpack.c.l.b16 %v246
        %v311 = vunpack.c.l.b16 %v247
        %v312 = vunpack.c.l.b16 %v248
        %v313 = vunpack.c.l.b16 %v249
        %v314 = vunpack.c.l.b16 %v250
        %v315 = vunpack.c.l.b16 %v251
        %v316 = vunpack.c.l.b16 %v252
        %v317 = vunpack.c.l.b16 %v253
        %v318 = vunpack.c.l.b16 %v254
        %v319 = vpack.c.b16 %v288, %v287
        %v320 = vpack.c.b16 %v290, %v289
        %v321 = vpack.c.b16 %v292, %v291
        %v322 = vpack.c.b16 %v294, %v293
        %v323 = vpack.c.b16 %v296, %v295
        %v324 = vpack.c.b16 %v298, %v297
        %v325 = vpack.c.b16 %v300, %v299
        %v326 = vpack.c.b16 %v302, %v301
        %v327 = vpack.c.b16 %v304, %v303
        %v328 = vpack.c.b16 %v306, %v305
        %v329 = vpack.c.b16 %v308, %v307
        %v330 = vpack.c.b16 %v310, %v309
        %v331 = vpack.c.b16 %v312, %v311
        %v332 = vpack.c.b16 %v314, %v313
        %v333 = vpack.c.b16 %v316, %v315
        %v334 = vpack.c.b16 %v318, %v317
        %vm351 = vcmask 31744
        %352 = vst.msk [vmem:[#allocation2] sm:$0xff] %vm351, %v319
        %353 = vst.msk [vmem:[#allocation2 + $0x8] sm:$0xff] %vm351, %v320
        %354 = vst.msk [vmem:[#allocation2 + $0x10] sm:$0xff] %vm351, %v321
        %355 = vst.msk [vmem:[#allocation2 + $0x18] sm:$0xff] %vm351, %v322
        %356 = vst.msk [vmem:[#allocation2 + $0x20] sm:$0xff] %vm351, %v323
        %357 = vst.msk [vmem:[#allocation2 + $0x28] sm:$0xff] %vm351, %v324
        %358 = vst.msk [vmem:[#allocation2 + $0x30] sm:$0xff] %vm351, %v325
        %359 = vst.msk [vmem:[#allocation2 + $0x38] sm:$0xff] %vm351, %v326
        %360 = vst.msk [vmem:[#allocation2 + $0x40] sm:$0xff] %vm351, %v327
        %361 = vst.msk [vmem:[#allocation2 + $0x48] sm:$0xff] %vm351, %v328
        %362 = vst.msk [vmem:[#allocation2 + $0x50] sm:$0xff] %vm351, %v329
        %363 = vst.msk [vmem:[#allocation2 + $0x58] sm:$0xff] %vm351, %v330
        %364 = vst.msk [vmem:[#allocation2 + $0x60] sm:$0xff] %vm351, %v331
        %365 = vst.msk [vmem:[#allocation2 + $0x68] sm:$0xff] %vm351, %v332
        %366 = vst.msk [vmem:[#allocation2 + $0x70] sm:$0xff] %vm351, %v333
        %367 = vst.msk [vmem:[#allocation2 + $0x78] sm:$0xff] %vm351, %v334
        %v368 = vld [vmem:[%s221] sm:$0xf]
        %v369 = vld [vmem:[%s221 + $0x4] sm:$0xf]
        %v370 = vld [vmem:[%s221 + $0x8] sm:$0x1]
        %v371 = vld [vmem:[%s221 + $0xc] sm:$0xf]
        %v372 = vld [vmem:[%s221 + $0x10] sm:$0xf]
        %v373 = vld [vmem:[%s221 + $0x14] sm:$0x1]
        %v374 = vld [vmem:[%s221 + $0x18] sm:$0xf]
        %v375 = vld [vmem:[%s221 + $0x1c] sm:$0xf]
        %v376 = vld [vmem:[%s221 + $0x20] sm:$0x1]
        %v377 = vld [vmem:[%s221 + $0x24] sm:$0xf]
        %v378 = vld [vmem:[%s221 + $0x28] sm:$0xf]
        %v379 = vld [vmem:[%s221 + $0x2c] sm:$0x1]
        %v380 = vld [vmem:[%s221 + $0x30] sm:$0xf]
        %v381 = vld [vmem:[%s221 + $0x34] sm:$0xf]
        %v382 = vld [vmem:[%s221 + $0x38] sm:$0x1]
        %v383 = vld [vmem:[%s221 + $0x3c] sm:$0xf]
        %v384 = vld [vmem:[%s221 + $0x40] sm:$0xf]
        %v385 = vld [vmem:[%s221 + $0x44] sm:$0x1]
        %v386 = vld [vmem:[%s221 + $0x48] sm:$0xf]
        %v387 = vld [vmem:[%s221 + $0x4c] sm:$0xf]
        %v388 = vld [vmem:[%s221 + $0x50] sm:$0x1]
        %v389 = vld [vmem:[%s221 + $0x54] sm:$0xf]
        %v390 = vld [vmem:[%s221 + $0x58] sm:$0xf]
        %v391 = vld [vmem:[%s221 + $0x5c] sm:$0x1]
        %v392 = vld [vmem:[%s221 + $0x60] sm:$0xf]
        %v393 = vld [vmem:[%s221 + $0x64] sm:$0xf]
        %v394 = vld [vmem:[%s221 + $0x68] sm:$0x1]
        %v395 = vld [vmem:[%s221 + $0x6c] sm:$0xf]
        %v396 = vld [vmem:[%s221 + $0x70] sm:$0xf]
        %v397 = vld [vmem:[%s221 + $0x74] sm:$0x1]
        %v398 = vld [vmem:[%s221 + $0x78] sm:$0xf]
        %v399 = vld [vmem:[%s221 + $0x7c] sm:$0xf]
        %v400 = vld [vmem:[%s221 + $0x80] sm:$0x1]
        %v401 = vld [vmem:[%s221 + $0x84] sm:$0xf]
        %v402 = vld [vmem:[%s221 + $0x88] sm:$0xf]
        %v403 = vld [vmem:[%s221 + $0x8c] sm:$0x1]
        %v404 = vld [vmem:[%s221 + $0x90] sm:$0xf]
        %v405 = vld [vmem:[%s221 + $0x94] sm:$0xf]
        %v406 = vld [vmem:[%s221 + $0x98] sm:$0x1]
        %v407 = vld [vmem:[%s221 + $0x9c] sm:$0xf]
        %v408 = vld [vmem:[%s221 + $0xa0] sm:$0xf]
        %v409 = vld [vmem:[%s221 + $0xa4] sm:$0x1]
        %v410 = vld [vmem:[%s221 + $0xa8] sm:$0xf]
        %v411 = vld [vmem:[%s221 + $0xac] sm:$0xf]
        %v412 = vld [vmem:[%s221 + $0xb0] sm:$0x1]
        %v413 = vld [vmem:[%s221 + $0xb4] sm:$0xf]
        %v414 = vld [vmem:[%s221 + $0xb8] sm:$0xf]
        %v415 = vld [vmem:[%s221 + $0xbc] sm:$0x1]
        %vm416 = vsmask.f32 3328
        %vm417 = vsmask.f32 7440
        %vm418 = vmor %vm416, %vm417
        %v420 = vshrl.u32 %v368, 16
        %v422 = vrot.slane %v420, 4
        %v423 = vshll.u32 %v368, 16
        %v425 = vrot.slane %v423, 5
        %v426 = vor.u32 %v422, %v425
        %v427 = vrot.slane %v426, 4
        %v429 = vshll.u32 %v369, 16
        %v431 = vrot.slane %v429, 5
        %v432 = vsel %vm418, %v427, %v431
        %v433 = vshrl.u32 %v369, 16
        %v435 = vrot.slane %v433, 4
        %v436 = vor.u32 %v435, %v431
        %v437 = vrot.slane %v436, 4
        %v439 = vshll.u32 %v370, 16
        %v441 = vrot.slane %v439, 5
        %v442 = vsel %vm418, %v437, %v441
        %v444 = vshrl.u32 %v371, 16
        %v446 = vrot.slane %v444, 4
        %v447 = vshll.u32 %v371, 16
        %v449 = vrot.slane %v447, 5
        %v450 = vor.u32 %v446, %v449
        %v451 = vrot.slane %v450, 4
        %v453 = vshll.u32 %v372, 16
        %v455 = vrot.slane %v453, 5
        %v456 = vsel %vm418, %v451, %v455
        %v457 = vshrl.u32 %v372, 16
        %v459 = vrot.slane %v457, 4
        %v460 = vor.u32 %v459, %v455
        %v461 = vrot.slane %v460, 4
        %v463 = vshll.u32 %v373, 16
        %v465 = vrot.slane %v463, 5
        %v466 = vsel %vm418, %v461, %v465
        %v468 = vshrl.u32 %v374, 16
        %v470 = vrot.slane %v468, 4
        %v471 = vshll.u32 %v374, 16
        %v473 = vrot.slane %v471, 5
        %v474 = vor.u32 %v470, %v473
        %v475 = vrot.slane %v474, 4
        %v477 = vshll.u32 %v375, 16
        %v479 = vrot.slane %v477, 5
        %v480 = vsel %vm418, %v475, %v479
        %v481 = vshrl.u32 %v375, 16
        %v483 = vrot.slane %v481, 4
        %v484 = vor.u32 %v483, %v479
        %v485 = vrot.slane %v484, 4
        %v487 = vshll.u32 %v376, 16
        %v489 = vrot.slane %v487, 5
        %v490 = vsel %vm418, %v485, %v489
        %v492 = vshrl.u32 %v377, 16
        %v494 = vrot.slane %v492, 4
        %v495 = vshll.u32 %v377, 16
        %v497 = vrot.slane %v495, 5
        %v498 = vor.u32 %v494, %v497
        %v499 = vrot.slane %v498, 4
        %v501 = vshll.u32 %v378, 16
        %v503 = vrot.slane %v501, 5
        %v504 = vsel %vm418, %v499, %v503
        %v505 = vshrl.u32 %v378, 16
        %v507 = vrot.slane %v505, 4
        %v508 = vor.u32 %v507, %v503
        %v509 = vrot.slane %v508, 4
        %v511 = vshll.u32 %v379, 16
        %v513 = vrot.slane %v511, 5
        %v514 = vsel %vm418, %v509, %v513
        %v516 = vshrl.u32 %v380, 16
        %v518 = vrot.slane %v516, 4
        %v519 = vshll.u32 %v380, 16
        %v521 = vrot.slane %v519, 5
        %v522 = vor.u32 %v518, %v521
        %v523 = vrot.slane %v522, 4
        %v525 = vshll.u32 %v381, 16
        %v527 = vrot.slane %v525, 5
        %v528 = vsel %vm418, %v523, %v527
        %v529 = vshrl.u32 %v381, 16
        %v531 = vrot.slane %v529, 4
        %v532 = vor.u32 %v531, %v527
        %v533 = vrot.slane %v532, 4
        %v535 = vshll.u32 %v382, 16
        %v537 = vrot.slane %v535, 5
        %v538 = vsel %vm418, %v533, %v537
        %v540 = vshrl.u32 %v383, 16
        %v542 = vrot.slane %v540, 4
        %v543 = vshll.u32 %v383, 16
        %v545 = vrot.slane %v543, 5
        %v546 = vor.u32 %v542, %v545
        %v547 = vrot.slane %v546, 4
        %v549 = vshll.u32 %v384, 16
        %v551 = vrot.slane %v549, 5
        %v552 = vsel %vm418, %v547, %v551
        %v553 = vshrl.u32 %v384, 16
        %v555 = vrot.slane %v553, 4
        %v556 = vor.u32 %v555, %v551
        %v557 = vrot.slane %v556, 4
        %v559 = vshll.u32 %v385, 16
        %v561 = vrot.slane %v559, 5
        %v562 = vsel %vm418, %v557, %v561
        %v564 = vshrl.u32 %v386, 16
        %v566 = vrot.slane %v564, 4
        %v567 = vshll.u32 %v386, 16
        %v569 = vrot.slane %v567, 5
        %v570 = vor.u32 %v566, %v569
        %v571 = vrot.slane %v570, 4
        %v573 = vshll.u32 %v387, 16
        %v575 = vrot.slane %v573, 5
        %v576 = vsel %vm418, %v571, %v575
        %v577 = vshrl.u32 %v387, 16
        %v579 = vrot.slane %v577, 4
        %v580 = vor.u32 %v579, %v575
        %v581 = vrot.slane %v580, 4
        %v583 = vshll.u32 %v388, 16
        %v585 = vrot.slane %v583, 5
        %v586 = vsel %vm418, %v581, %v585
        %v588 = vshrl.u32 %v389, 16
        %v590 = vrot.slane %v588, 4
        %v591 = vshll.u32 %v389, 16
        %v593 = vrot.slane %v591, 5
        %v594 = vor.u32 %v590, %v593
        %v595 = vrot.slane %v594, 4
        %v597 = vshll.u32 %v390, 16
        %v599 = vrot.slane %v597, 5
        %v600 = vsel %vm418, %v595, %v599
        %v601 = vshrl.u32 %v390, 16
        %v603 = vrot.slane %v601, 4
        %v604 = vor.u32 %v603, %v599
        %v605 = vrot.slane %v604, 4
        %v607 = vshll.u32 %v391, 16
        %v609 = vrot.slane %v607, 5
        %v610 = vsel %vm418, %v605, %v609
        %v612 = vshrl.u32 %v392, 16
        %v614 = vrot.slane %v612, 4
        %v615 = vshll.u32 %v392, 16
        %v617 = vrot.slane %v615, 5
        %v618 = vor.u32 %v614, %v617
        %v619 = vrot.slane %v618, 4
        %v621 = vshll.u32 %v393, 16
        %v623 = vrot.slane %v621, 5
        %v624 = vsel %vm418, %v619, %v623
        %v625 = vshrl.u32 %v393, 16
        %v627 = vrot.slane %v625, 4
        %v628 = vor.u32 %v627, %v623
        %v629 = vrot.slane %v628, 4
        %v631 = vshll.u32 %v394, 16
        %v633 = vrot.slane %v631, 5
        %v634 = vsel %vm418, %v629, %v633
        %v636 = vshrl.u32 %v395, 16
        %v638 = vrot.slane %v636, 4
        %v639 = vshll.u32 %v395, 16
        %v641 = vrot.slane %v639, 5
        %v642 = vor.u32 %v638, %v641
        %v643 = vrot.slane %v642, 4
        %v645 = vshll.u32 %v396, 16
        %v647 = vrot.slane %v645, 5
        %v648 = vsel %vm418, %v643, %v647
        %v649 = vshrl.u32 %v396, 16
        %v651 = vrot.slane %v649, 4
        %v652 = vor.u32 %v651, %v647
        %v653 = vrot.slane %v652, 4
        %v655 = vshll.u32 %v397, 16
        %v657 = vrot.slane %v655, 5
        %v658 = vsel %vm418, %v653, %v657
        %v660 = vshrl.u32 %v398, 16
        %v662 = vrot.slane %v660, 4
        %v663 = vshll.u32 %v398, 16
        %v665 = vrot.slane %v663, 5
        %v666 = vor.u32 %v662, %v665
        %v667 = vrot.slane %v666, 4
        %v669 = vshll.u32 %v399, 16
        %v671 = vrot.slane %v669, 5
        %v672 = vsel %vm418, %v667, %v671
        %v673 = vshrl.u32 %v399, 16
        %v675 = vrot.slane %v673, 4
        %v676 = vor.u32 %v675, %v671
        %v677 = vrot.slane %v676, 4
        %v679 = vshll.u32 %v400, 16
        %v681 = vrot.slane %v679, 5
        %v682 = vsel %vm418, %v677, %v681
        %v684 = vshrl.u32 %v401, 16
        %v686 = vrot.slane %v684, 4
        %v687 = vshll.u32 %v401, 16
        %v689 = vrot.slane %v687, 5
        %v690 = vor.u32 %v686, %v689
        %v691 = vrot.slane %v690, 4
        %v693 = vshll.u32 %v402, 16
        %v695 = vrot.slane %v693, 5
        %v696 = vsel %vm418, %v691, %v695
        %v697 = vshrl.u32 %v402, 16
        %v699 = vrot.slane %v697, 4
        %v700 = vor.u32 %v699, %v695
        %v701 = vrot.slane %v700, 4
        %v703 = vshll.u32 %v403, 16
        %v705 = vrot.slane %v703, 5
        %v706 = vsel %vm418, %v701, %v705
        %v708 = vshrl.u32 %v404, 16
        %v710 = vrot.slane %v708, 4
        %v711 = vshll.u32 %v404, 16
        %v713 = vrot.slane %v711, 5
        %v714 = vor.u32 %v710, %v713
        %v715 = vrot.slane %v714, 4
        %v717 = vshll.u32 %v405, 16
        %v719 = vrot.slane %v717, 5
        %v720 = vsel %vm418, %v715, %v719
        %v721 = vshrl.u32 %v405, 16
        %v723 = vrot.slane %v721, 4
        %v724 = vor.u32 %v723, %v719
        %v725 = vrot.slane %v724, 4
        %v727 = vshll.u32 %v406, 16
        %v729 = vrot.slane %v727, 5
        %v730 = vsel %vm418, %v725, %v729
        %v732 = vshrl.u32 %v407, 16
        %v734 = vrot.slane %v732, 4
        %v735 = vshll.u32 %v407, 16
        %v737 = vrot.slane %v735, 5
        %v738 = vor.u32 %v734, %v737
        %v739 = vrot.slane %v738, 4
        %v741 = vshll.u32 %v408, 16
        %v743 = vrot.slane %v741, 5
        %v744 = vsel %vm418, %v739, %v743
        %v745 = vshrl.u32 %v408, 16
        %v747 = vrot.slane %v745, 4
        %v748 = vor.u32 %v747, %v743
        %v749 = vrot.slane %v748, 4
        %v751 = vshll.u32 %v409, 16
        %v753 = vrot.slane %v751, 5
        %v754 = vsel %vm418, %v749, %v753
        %v756 = vshrl.u32 %v410, 16
        %v758 = vrot.slane %v756, 4
        %v759 = vshll.u32 %v410, 16
        %v761 = vrot.slane %v759, 5
        %v762 = vor.u32 %v758, %v761
        %v763 = vrot.slane %v762, 4
        %v765 = vshll.u32 %v411, 16
        %v767 = vrot.slane %v765, 5
        %v768 = vsel %vm418, %v763, %v767
        %v769 = vshrl.u32 %v411, 16
        %v771 = vrot.slane %v769, 4
        %v772 = vor.u32 %v771, %v767
        %v773 = vrot.slane %v772, 4
        %v775 = vshll.u32 %v412, 16
        %v777 = vrot.slane %v775, 5
        %v778 = vsel %vm418, %v773, %v777
        %v780 = vshrl.u32 %v413, 16
        %v782 = vrot.slane %v780, 4
        %v783 = vshll.u32 %v413, 16
        %v785 = vrot.slane %v783, 5
        %v786 = vor.u32 %v782, %v785
        %v787 = vrot.slane %v786, 4
        %v789 = vshll.u32 %v414, 16
        %v791 = vrot.slane %v789, 5
        %v792 = vsel %vm418, %v787, %v791
        %v793 = vshrl.u32 %v414, 16
        %v795 = vrot.slane %v793, 4
        %v796 = vor.u32 %v795, %v791
        %v797 = vrot.slane %v796, 4
        %v799 = vshll.u32 %v415, 16
        %v801 = vrot.slane %v799, 5
        %v802 = vsel %vm418, %v797, %v801
        %v803 = vunpack.c.l.b16 %v432
        %v804 = vunpack.c.l.b16 %v442
        %v805 = vunpack.c.l.b16 %v456
        %v806 = vunpack.c.l.b16 %v466
        %v807 = vunpack.c.l.b16 %v480
        %v808 = vunpack.c.l.b16 %v490
        %v809 = vunpack.c.l.b16 %v504
        %v810 = vunpack.c.l.b16 %v514
        %v811 = vunpack.c.l.b16 %v528
        %v812 = vunpack.c.l.b16 %v538
        %v813 = vunpack.c.l.b16 %v552
        %v814 = vunpack.c.l.b16 %v562
        %v815 = vunpack.c.l.b16 %v576
        %v816 = vunpack.c.l.b16 %v586
        %v817 = vunpack.c.l.b16 %v600
        %v818 = vunpack.c.l.b16 %v610
        %v819 = vunpack.c.l.b16 %v624
        %v820 = vunpack.c.l.b16 %v634
        %v821 = vunpack.c.l.b16 %v648
        %v822 = vunpack.c.l.b16 %v658
        %v823 = vunpack.c.l.b16 %v672
        %v824 = vunpack.c.l.b16 %v682
        %v825 = vunpack.c.l.b16 %v696
        %v826 = vunpack.c.l.b16 %v706
        %v827 = vunpack.c.l.b16 %v720
        %v828 = vunpack.c.l.b16 %v730
        %v829 = vunpack.c.l.b16 %v744
        %v830 = vunpack.c.l.b16 %v754
        %v831 = vunpack.c.l.b16 %v768
        %v832 = vunpack.c.l.b16 %v778
        %v833 = vunpack.c.l.b16 %v792
        %v834 = vunpack.c.l.b16 %v802
        %v835 = vpack.c.b16 %v804, %v803
        %v836 = vpack.c.b16 %v806, %v805
        %v837 = vpack.c.b16 %v808, %v807
        %v838 = vpack.c.b16 %v810, %v809
        %v839 = vpack.c.b16 %v812, %v811
        %v840 = vpack.c.b16 %v814, %v813
        %v841 = vpack.c.b16 %v816, %v815
        %v842 = vpack.c.b16 %v818, %v817
        %v843 = vpack.c.b16 %v820, %v819
        %v844 = vpack.c.b16 %v822, %v821
        %v845 = vpack.c.b16 %v824, %v823
        %v846 = vpack.c.b16 %v826, %v825
        %v847 = vpack.c.b16 %v828, %v827
        %v848 = vpack.c.b16 %v830, %v829
        %v849 = vpack.c.b16 %v832, %v831
        %v850 = vpack.c.b16 %v834, %v833
        %851 = vrot.lane.b32.xlu0 %v835, 4
        %v852 = vpop.permute.xlu0 %851
        %853 = vrot.lane.b32.xlu0 %v836, 4
        %v854 = vpop.permute.xlu0 %853
        %855 = vrot.lane.b32.xlu0 %v837, 4
        %v856 = vpop.permute.xlu0 %855
        %857 = vrot.lane.b32.xlu0 %v838, 4
        %v858 = vpop.permute.xlu0 %857
        %859 = vrot.lane.b32.xlu0 %v839, 4
        %v860 = vpop.permute.xlu0 %859
        %861 = vrot.lane.b32.xlu0 %v840, 4
        %v862 = vpop.permute.xlu0 %861
        %863 = vrot.lane.b32.xlu0 %v841, 4
        %v864 = vpop.permute.xlu0 %863
        %865 = vrot.lane.b32.xlu0 %v842, 4
        %v866 = vpop.permute.xlu0 %865
        %867 = vrot.lane.b32.xlu0 %v843, 4
        %v868 = vpop.permute.xlu0 %867
        %869 = vrot.lane.b32.xlu0 %v844, 4
        %v870 = vpop.permute.xlu0 %869
        %871 = vrot.lane.b32.xlu0 %v845, 4
        %v872 = vpop.permute.xlu0 %871
        %873 = vrot.lane.b32.xlu0 %v846, 4
        %v874 = vpop.permute.xlu0 %873
        %875 = vrot.lane.b32.xlu0 %v847, 4
        %v876 = vpop.permute.xlu0 %875
        %877 = vrot.lane.b32.xlu0 %v848, 4
        %v878 = vpop.permute.xlu0 %877
        %879 = vrot.lane.b32.xlu0 %v849, 4
        %v880 = vpop.permute.xlu0 %879
        %881 = vrot.lane.b32.xlu0 %v850, 4
        %v882 = vpop.permute.xlu0 %881
        %vm899 = vcmask 64544
        %900 = vst.msk [vmem:[#allocation2] sm:$0xff] %vm899, %v852
        %901 = vst.msk [vmem:[#allocation2 + $0x8] sm:$0xff] %vm899, %v854
        %902 = vst.msk [vmem:[#allocation2 + $0x10] sm:$0xff] %vm899, %v856
        %903 = vst.msk [vmem:[#allocation2 + $0x18] sm:$0xff] %vm899, %v858
        %904 = vst.msk [vmem:[#allocation2 + $0x20] sm:$0xff] %vm899, %v860
        %905 = vst.msk [vmem:[#allocation2 + $0x28] sm:$0xff] %vm899, %v862
        %906 = vst.msk [vmem:[#allocation2 + $0x30] sm:$0xff] %vm899, %v864
        %907 = vst.msk [vmem:[#allocation2 + $0x38] sm:$0xff] %vm899, %v866
        %908 = vst.msk [vmem:[#allocation2 + $0x40] sm:$0xff] %vm899, %v868
        %909 = vst.msk [vmem:[#allocation2 + $0x48] sm:$0xff] %vm899, %v870
        %910 = vst.msk [vmem:[#allocation2 + $0x50] sm:$0xff] %vm899, %v872
        %911 = vst.msk [vmem:[#allocation2 + $0x58] sm:$0xff] %vm899, %v874
        %912 = vst.msk [vmem:[#allocation2 + $0x60] sm:$0xff] %vm899, %v876
        %913 = vst.msk [vmem:[#allocation2 + $0x68] sm:$0xff] %vm899, %v878
        %914 = vst.msk [vmem:[#allocation2 + $0x70] sm:$0xff] %vm899, %v880
        %915 = vst.msk [vmem:[#allocation2 + $0x78] sm:$0xff] %vm899, %v882
        %v916 = vld [vmem:[%s221] sm:$0xe]
        %v917 = vld [vmem:[%s221 + $0x4] sm:$0xf]
        %v918 = vld [vmem:[%s221 + $0x8] sm:$0x1]
        %v919 = vld [vmem:[%s221 + $0xc] sm:$0xe]
        %v920 = vld [vmem:[%s221 + $0x10] sm:$0xf]
        %v921 = vld [vmem:[%s221 + $0x14] sm:$0x1]
        %v922 = vld [vmem:[%s221 + $0x18] sm:$0xe]
        %v923 = vld [vmem:[%s221 + $0x1c] sm:$0xf]
        %v924 = vld [vmem:[%s221 + $0x20] sm:$0x1]
        %v925 = vld [vmem:[%s221 + $0x24] sm:$0xe]
        %v926 = vld [vmem:[%s221 + $0x28] sm:$0xf]
        %v927 = vld [vmem:[%s221 + $0x2c] sm:$0x1]
        %v928 = vld [vmem:[%s221 + $0x30] sm:$0xe]
        %v929 = vld [vmem:[%s221 + $0x34] sm:$0xf]
        %v930 = vld [vmem:[%s221 + $0x38] sm:$0x1]
        %v931 = vld [vmem:[%s221 + $0x3c] sm:$0xe]
        %v932 = vld [vmem:[%s221 + $0x40] sm:$0xf]
        %v933 = vld [vmem:[%s221 + $0x44] sm:$0x1]
        %v934 = vld [vmem:[%s221 + $0x48] sm:$0xe]
        %v935 = vld [vmem:[%s221 + $0x4c] sm:$0xf]
        %v936 = vld [vmem:[%s221 + $0x50] sm:$0x1]
        %v937 = vld [vmem:[%s221 + $0x54] sm:$0xe]
        %v938 = vld [vmem:[%s221 + $0x58] sm:$0xf]
        %v939 = vld [vmem:[%s221 + $0x5c] sm:$0x1]
        %v940 = vld [vmem:[%s221 + $0x60] sm:$0xe]
        %v941 = vld [vmem:[%s221 + $0x64] sm:$0xf]
        %v942 = vld [vmem:[%s221 + $0x68] sm:$0x1]
        %v943 = vld [vmem:[%s221 + $0x6c] sm:$0xe]
        %v944 = vld [vmem:[%s221 + $0x70] sm:$0xf]
        %v945 = vld [vmem:[%s221 + $0x74] sm:$0x1]
        %v946 = vld [vmem:[%s221 + $0x78] sm:$0xe]
        %v947 = vld [vmem:[%s221 + $0x7c] sm:$0xf]
        %v948 = vld [vmem:[%s221 + $0x80] sm:$0x1]
        %v949 = vld [vmem:[%s221 + $0x84] sm:$0xe]
        %v950 = vld [vmem:[%s221 + $0x88] sm:$0xf]
        %v951 = vld [vmem:[%s221 + $0x8c] sm:$0x1]
        %v952 = vld [vmem:[%s221 + $0x90] sm:$0xe]
        %v953 = vld [vmem:[%s221 + $0x94] sm:$0xf]
        %v954 = vld [vmem:[%s221 + $0x98] sm:$0x1]
        %v955 = vld [vmem:[%s221 + $0x9c] sm:$0xe]
        %v956 = vld [vmem:[%s221 + $0xa0] sm:$0xf]
        %v957 = vld [vmem:[%s221 + $0xa4] sm:$0x1]
        %v958 = vld [vmem:[%s221 + $0xa8] sm:$0xe]
        %v959 = vld [vmem:[%s221 + $0xac] sm:$0xf]
        %v960 = vld [vmem:[%s221 + $0xb0] sm:$0x1]
        %v961 = vld [vmem:[%s221 + $0xb4] sm:$0xe]
        %v962 = vld [vmem:[%s221 + $0xb8] sm:$0xf]
        %v963 = vld [vmem:[%s221 + $0xbc] sm:$0x1]
        %vm1012 = vcmask 1042432
        %vm1013 = vcmask 1046532
        %vm1014 = vmor %vm1012, %vm1013
        %v1015 = vrot.slane %v916, 5
        %v1016 = vrot.slane %v1015, 4
        %v1017 = vrot.slane %v917, 5
        %v1018 = vsel %vm1014, %v1016, %v1017
        %v1019 = vrot.slane %v1017, 4
        %v1020 = vrot.slane %v918, 5
        %v1021 = vsel %vm1014, %v1019, %v1020
        %v1022 = vrot.slane %v919, 5
        %v1023 = vrot.slane %v1022, 4
        %v1024 = vrot.slane %v920, 5
        %v1025 = vsel %vm1014, %v1023, %v1024
        %v1026 = vrot.slane %v1024, 4
        %v1027 = vrot.slane %v921, 5
        %v1028 = vsel %vm1014, %v1026, %v1027
        %v1029 = vrot.slane %v922, 5
        %v1030 = vrot.slane %v1029, 4
        %v1031 = vrot.slane %v923, 5
        %v1032 = vsel %vm1014, %v1030, %v1031
        %v1033 = vrot.slane %v1031, 4
        %v1034 = vrot.slane %v924, 5
        %v1035 = vsel %vm1014, %v1033, %v1034
        %v1036 = vrot.slane %v925, 5
        %v1037 = vrot.slane %v1036, 4
        %v1038 = vrot.slane %v926, 5
        %v1039 = vsel %vm1014, %v1037, %v1038
        %v1040 = vrot.slane %v1038, 4
        %v1041 = vrot.slane %v927, 5
        %v1042 = vsel %vm1014, %v1040, %v1041
        %v1043 = vrot.slane %v928, 5
        %v1044 = vrot.slane %v1043, 4
        %v1045 = vrot.slane %v929, 5
        %v1046 = vsel %vm1014, %v1044, %v1045
        %v1047 = vrot.slane %v1045, 4
        %v1048 = vrot.slane %v930, 5
        %v1049 = vsel %vm1014, %v1047, %v1048
        %v1050 = vrot.slane %v931, 5
        %v1051 = vrot.slane %v1050, 4
        %v1052 = vrot.slane %v932, 5
        %v1053 = vsel %vm1014, %v1051, %v1052
        %v1054 = vrot.slane %v1052, 4
        %v1055 = vrot.slane %v933, 5
        %v1056 = vsel %vm1014, %v1054, %v1055
        %v1057 = vrot.slane %v934, 5
        %v1058 = vrot.slane %v1057, 4
        %v1059 = vrot.slane %v935, 5
        %v1060 = vsel %vm1014, %v1058, %v1059
        %v1061 = vrot.slane %v1059, 4
        %v1062 = vrot.slane %v936, 5
        %v1063 = vsel %vm1014, %v1061, %v1062
        %v1064 = vrot.slane %v937, 5
        %v1065 = vrot.slane %v1064, 4
        %v1066 = vrot.slane %v938, 5
        %v1067 = vsel %vm1014, %v1065, %v1066
        %v1068 = vrot.slane %v1066, 4
        %v1069 = vrot.slane %v939, 5
        %v1070 = vsel %vm1014, %v1068, %v1069
        %v1071 = vrot.slane %v940, 5
        %v1072 = vrot.slane %v1071, 4
        %v1073 = vrot.slane %v941, 5
        %v1074 = vsel %vm1014, %v1072, %v1073
        %v1075 = vrot.slane %v1073, 4
        %v1076 = vrot.slane %v942, 5
        %v1077 = vsel %vm1014, %v1075, %v1076
        %v1078 = vrot.slane %v943, 5
        %v1079 = vrot.slane %v1078, 4
        %v1080 = vrot.slane %v944, 5
        %v1081 = vsel %vm1014, %v1079, %v1080
        %v1082 = vrot.slane %v1080, 4
        %v1083 = vrot.slane %v945, 5
        %v1084 = vsel %vm1014, %v1082, %v1083
        %v1085 = vrot.slane %v946, 5
        %v1086 = vrot.slane %v1085, 4
        %v1087 = vrot.slane %v947, 5
        %v1088 = vsel %vm1014, %v1086, %v1087
        %v1089 = vrot.slane %v1087, 4
        %v1090 = vrot.slane %v948, 5
        %v1091 = vsel %vm1014, %v1089, %v1090
        %v1092 = vrot.slane %v949, 5
        %v1093 = vrot.slane %v1092, 4
        %v1094 = vrot.slane %v950, 5
        %v1095 = vsel %vm1014, %v1093, %v1094
        %v1096 = vrot.slane %v1094, 4
        %v1097 = vrot.slane %v951, 5
        %v1098 = vsel %vm1014, %v1096, %v1097
        %v1099 = vrot.slane %v952, 5
        %v1100 = vrot.slane %v1099, 4
        %v1101 = vrot.slane %v953, 5
        %v1102 = vsel %vm1014, %v1100, %v1101
        %v1103 = vrot.slane %v1101, 4
        %v1104 = vrot.slane %v954, 5
        %v1105 = vsel %vm1014, %v1103, %v1104
        %v1106 = vrot.slane %v955, 5
        %v1107 = vrot.slane %v1106, 4
        %v1108 = vrot.slane %v956, 5
        %v1109 = vsel %vm1014, %v1107, %v1108
        %v1110 = vrot.slane %v1108, 4
        %v1111 = vrot.slane %v957, 5
        %v1112 = vsel %vm1014, %v1110, %v1111
        %v1113 = vrot.slane %v958, 5
        %v1114 = vrot.slane %v1113, 4
        %v1115 = vrot.slane %v959, 5
        %v1116 = vsel %vm1014, %v1114, %v1115
        %v1117 = vrot.slane %v1115, 4
        %v1118 = vrot.slane %v960, 5
        %v1119 = vsel %vm1014, %v1117, %v1118
        %v1120 = vrot.slane %v961, 5
        %v1121 = vrot.slane %v1120, 4
        %v1122 = vrot.slane %v962, 5
        %v1123 = vsel %vm1014, %v1121, %v1122
        %v1124 = vrot.slane %v1122, 4
        %v1125 = vrot.slane %v963, 5
        %v1126 = vsel %vm1014, %v1124, %v1125
        %v1127 = vunpack.c.l.b16 %v1018
        %v1128 = vunpack.c.l.b16 %v1021
        %v1129 = vunpack.c.l.b16 %v1025
        %v1130 = vunpack.c.l.b16 %v1028
        %v1131 = vunpack.c.l.b16 %v1032
        %v1132 = vunpack.c.l.b16 %v1035
        %v1133 = vunpack.c.l.b16 %v1039
        %v1134 = vunpack.c.l.b16 %v1042
        %v1135 = vunpack.c.l.b16 %v1046
        %v1136 = vunpack.c.l.b16 %v1049
        %v1137 = vunpack.c.l.b16 %v1053
        %v1138 = vunpack.c.l.b16 %v1056
        %v1139 = vunpack.c.l.b16 %v1060
        %v1140 = vunpack.c.l.b16 %v1063
        %v1141 = vunpack.c.l.b16 %v1067
        %v1142 = vunpack.c.l.b16 %v1070
        %v1143 = vunpack.c.l.b16 %v1074
        %v1144 = vunpack.c.l.b16 %v1077
        %v1145 = vunpack.c.l.b16 %v1081
        %v1146 = vunpack.c.l.b16 %v1084
        %v1147 = vunpack.c.l.b16 %v1088
        %v1148 = vunpack.c.l.b16 %v1091
        %v1149 = vunpack.c.l.b16 %v1095
        %v1150 = vunpack.c.l.b16 %v1098
        %v1151 = vunpack.c.l.b16 %v1102
        %v1152 = vunpack.c.l.b16 %v1105
        %v1153 = vunpack.c.l.b16 %v1109
        %v1154 = vunpack.c.l.b16 %v1112
        %v1155 = vunpack.c.l.b16 %v1116
        %v1156 = vunpack.c.l.b16 %v1119
        %v1157 = vunpack.c.l.b16 %v1123
        %v1158 = vunpack.c.l.b16 %v1126
        %v1159 = vpack.c.b16 %v1128, %v1127
        %v1160 = vpack.c.b16 %v1130, %v1129
        %v1161 = vpack.c.b16 %v1132, %v1131
        %v1162 = vpack.c.b16 %v1134, %v1133
        %v1163 = vpack.c.b16 %v1136, %v1135
        %v1164 = vpack.c.b16 %v1138, %v1137
        %v1165 = vpack.c.b16 %v1140, %v1139
        %v1166 = vpack.c.b16 %v1142, %v1141
        %v1167 = vpack.c.b16 %v1144, %v1143
        %v1168 = vpack.c.b16 %v1146, %v1145
        %v1169 = vpack.c.b16 %v1148, %v1147
        %v1170 = vpack.c.b16 %v1150, %v1149
        %v1171 = vpack.c.b16 %v1152, %v1151
        %v1172 = vpack.c.b16 %v1154, %v1153
        %v1173 = vpack.c.b16 %v1156, %v1155
        %v1174 = vpack.c.b16 %v1158, %v1157
        %1175 = vrot.lane.b32.xlu0 %v1159, 8
        %v1176 = vpop.permute.xlu0 %1175
        %1177 = vrot.lane.b32.xlu0 %v1160, 8
        %v1178 = vpop.permute.xlu0 %1177
        %1179 = vrot.lane.b32.xlu0 %v1161, 8
        %v1180 = vpop.permute.xlu0 %1179
        %1181 = vrot.lane.b32.xlu0 %v1162, 8
        %v1182 = vpop.permute.xlu0 %1181
        %1183 = vrot.lane.b32.xlu0 %v1163, 8
        %v1184 = vpop.permute.xlu0 %1183
        %1185 = vrot.lane.b32.xlu0 %v1164, 8
        %v1186 = vpop.permute.xlu0 %1185
        %1187 = vrot.lane.b32.xlu0 %v1165, 8
        %v1188 = vpop.permute.xlu0 %1187
        %1189 = vrot.lane.b32.xlu0 %v1166, 8
        %v1190 = vpop.permute.xlu0 %1189
        %1191 = vrot.lane.b32.xlu0 %v1167, 8
        %v1192 = vpop.permute.xlu0 %1191
        %1193 = vrot.lane.b32.xlu0 %v1168, 8
        %v1194 = vpop.permute.xlu0 %1193
        %1195 = vrot.lane.b32.xlu0 %v1169, 8
        %v1196 = vpop.permute.xlu0 %1195
        %1197 = vrot.lane.b32.xlu0 %v1170, 8
        %v1198 = vpop.permute.xlu0 %1197
        %1199 = vrot.lane.b32.xlu0 %v1171, 8
        %v1200 = vpop.permute.xlu0 %1199
        %1201 = vrot.lane.b32.xlu0 %v1172, 8
        %v1202 = vpop.permute.xlu0 %1201
        %1203 = vrot.lane.b32.xlu0 %v1173, 8
        %v1204 = vpop.permute.xlu0 %1203
        %1205 = vrot.lane.b32.xlu0 %v1174, 8
        %v1206 = vpop.permute.xlu0 %1205
        %vm1223 = vcmask 97344
        %1224 = vst.msk [vmem:[#allocation2] sm:$0xff] %vm1223, %v1176
        %1225 = vst.msk [vmem:[#allocation2 + $0x8] sm:$0xff] %vm1223, %v1178
        %1226 = vst.msk [vmem:[#allocation2 + $0x10] sm:$0xff] %vm1223, %v1180
        %1227 = vst.msk [vmem:[#allocation2 + $0x18] sm:$0xff] %vm1223, %v1182
        %1228 = vst.msk [vmem:[#allocation2 + $0x20] sm:$0xff] %vm1223, %v1184
        %1229 = vst.msk [vmem:[#allocation2 + $0x28] sm:$0xff] %vm1223, %v1186
        %1230 = vst.msk [vmem:[#allocation2 + $0x30] sm:$0xff] %vm1223, %v1188
        %1231 = vst.msk [vmem:[#allocation2 + $0x38] sm:$0xff] %vm1223, %v1190
        %1232 = vst.msk [vmem:[#allocation2 + $0x40] sm:$0xff] %vm1223, %v1192
        %1233 = vst.msk [vmem:[#allocation2 + $0x48] sm:$0xff] %vm1223, %v1194
        %1234 = vst.msk [vmem:[#allocation2 + $0x50] sm:$0xff] %vm1223, %v1196
        %1235 = vst.msk [vmem:[#allocation2 + $0x58] sm:$0xff] %vm1223, %v1198
        %1236 = vst.msk [vmem:[#allocation2 + $0x60] sm:$0xff] %vm1223, %v1200
        %1237 = vst.msk [vmem:[#allocation2 + $0x68] sm:$0xff] %vm1223, %v1202
        %1238 = vst.msk [vmem:[#allocation2 + $0x70] sm:$0xff] %vm1223, %v1204
        %1239 = vst.msk [vmem:[#allocation2 + $0x78] sm:$0xff] %vm1223, %v1206
        %s1240 = scalar_lea.vmem %s221, 12
        %v1241 = vld [vmem:[%s1240] sm:$0xf]
        %v1242 = vld [vmem:[%s1240 + $0x4] sm:$0xf]
        %v1243 = vld [vmem:[%s1240 + $0xc] sm:$0xf]
        %v1244 = vld [vmem:[%s1240 + $0x10] sm:$0xf]
        %v1245 = vld [vmem:[%s1240 + $0x18] sm:$0xf]
        %v1246 = vld [vmem:[%s1240 + $0x1c] sm:$0xf]
        %v1247 = vld [vmem:[%s1240 + $0x24] sm:$0xf]
        %v1248 = vld [vmem:[%s1240 + $0x28] sm:$0xf]
        %v1249 = vld [vmem:[%s1240 + $0x30] sm:$0xf]
        %v1250 = vld [vmem:[%s1240 + $0x34] sm:$0xf]
        %v1251 = vld [vmem:[%s1240 + $0x3c] sm:$0xf]
        %v1252 = vld [vmem:[%s1240 + $0x40] sm:$0xf]
        %v1253 = vld [vmem:[%s1240 + $0x48] sm:$0xf]
        %v1254 = vld [vmem:[%s1240 + $0x4c] sm:$0xf]
        %v1255 = vld [vmem:[%s1240 + $0x54] sm:$0xf]
        %v1256 = vld [vmem:[%s1240 + $0x58] sm:$0xf]
        %v1257 = vld [vmem:[%s1240 + $0x60] sm:$0xf]
        %v1258 = vld [vmem:[%s1240 + $0x64] sm:$0xf]
        %v1259 = vld [vmem:[%s1240 + $0x6c] sm:$0xf]
        %v1260 = vld [vmem:[%s1240 + $0x70] sm:$0xf]
        %v1261 = vld [vmem:[%s1240 + $0x78] sm:$0xf]
        %v1262 = vld [vmem:[%s1240 + $0x7c] sm:$0xf]
        %v1263 = vld [vmem:[%s1240 + $0x84] sm:$0xf]
        %v1264 = vld [vmem:[%s1240 + $0x88] sm:$0xf]
        %v1265 = vld [vmem:[%s1240 + $0x90] sm:$0xf]
        %v1266 = vld [vmem:[%s1240 + $0x94] sm:$0xf]
        %v1267 = vld [vmem:[%s1240 + $0x9c] sm:$0xf]
        %v1268 = vld [vmem:[%s1240 + $0xa0] sm:$0xf]
        %v1269 = vld [vmem:[%s1240 + $0xa8] sm:$0xf]
        %v1270 = vld [vmem:[%s1240 + $0xac] sm:$0xf]
        %v1271 = vld [vmem:[%s1240 + $0xb4] sm:$0xf]
        %v1272 = vld [vmem:[%s1240 + $0xb8] sm:$0xf]
        %v1305 = vunpack.c.l.b16 %v1241
        %v1306 = vunpack.c.l.b16 %v1242
        %v1307 = vunpack.c.l.b16 %v1243
        %v1308 = vunpack.c.l.b16 %v1244
        %v1309 = vunpack.c.l.b16 %v1245
        %v1310 = vunpack.c.l.b16 %v1246
        %v1311 = vunpack.c.l.b16 %v1247
        %v1312 = vunpack.c.l.b16 %v1248
        %v1313 = vunpack.c.l.b16 %v1249
        %v1314 = vunpack.c.l.b16 %v1250
        %v1315 = vunpack.c.l.b16 %v1251
        %v1316 = vunpack.c.l.b16 %v1252
        %v1317 = vunpack.c.l.b16 %v1253
        %v1318 = vunpack.c.l.b16 %v1254
        %v1319 = vunpack.c.l.b16 %v1255
        %v1320 = vunpack.c.l.b16 %v1256
        %v1321 = vunpack.c.l.b16 %v1257
        %v1322 = vunpack.c.l.b16 %v1258
        %v1323 = vunpack.c.l.b16 %v1259
        %v1324 = vunpack.c.l.b16 %v1260
        %v1325 = vunpack.c.l.b16 %v1261
        %v1326 = vunpack.c.l.b16 %v1262
        %v1327 = vunpack.c.l.b16 %v1263
        %v1328 = vunpack.c.l.b16 %v1264
        %v1329 = vunpack.c.l.b16 %v1265
        %v1330 = vunpack.c.l.b16 %v1266
        %v1331 = vunpack.c.l.b16 %v1267
        %v1332 = vunpack.c.l.b16 %v1268
        %v1333 = vunpack.c.l.b16 %v1269
        %v1334 = vunpack.c.l.b16 %v1270
        %v1335 = vunpack.c.l.b16 %v1271
        %v1336 = vunpack.c.l.b16 %v1272
        %v1337 = vpack.c.b16 %v1306, %v1305
        %v1338 = vpack.c.b16 %v1308, %v1307
        %v1339 = vpack.c.b16 %v1310, %v1309
        %v1340 = vpack.c.b16 %v1312, %v1311
        %v1341 = vpack.c.b16 %v1314, %v1313
        %v1342 = vpack.c.b16 %v1316, %v1315
        %v1343 = vpack.c.b16 %v1318, %v1317
        %v1344 = vpack.c.b16 %v1320, %v1319
        %v1345 = vpack.c.b16 %v1322, %v1321
        %v1346 = vpack.c.b16 %v1324, %v1323
        %v1347 = vpack.c.b16 %v1326, %v1325
        %v1348 = vpack.c.b16 %v1328, %v1327
        %v1349 = vpack.c.b16 %v1330, %v1329
        %v1350 = vpack.c.b16 %v1332, %v1331
        %v1351 = vpack.c.b16 %v1334, %v1333
        %v1352 = vpack.c.b16 %v1336, %v1335
        %1353 = vrot.lane.b32.xlu0 %v1337, 12
        %v1354 = vpop.permute.xlu0 %1353
        %1355 = vrot.lane.b32.xlu0 %v1338, 12
        %v1356 = vpop.permute.xlu0 %1355
        %1357 = vrot.lane.b32.xlu0 %v1339, 12
        %v1358 = vpop.permute.xlu0 %1357
        %1359 = vrot.lane.b32.xlu0 %v1340, 12
        %v1360 = vpop.permute.xlu0 %1359
        %1361 = vrot.lane.b32.xlu0 %v1341, 12
        %v1362 = vpop.permute.xlu0 %1361
        %1363 = vrot.lane.b32.xlu0 %v1342, 12
        %v1364 = vpop.permute.xlu0 %1363
        %1365 = vrot.lane.b32.xlu0 %v1343, 12
        %v1366 = vpop.permute.xlu0 %1365
        %1367 = vrot.lane.b32.xlu0 %v1344, 12
        %v1368 = vpop.permute.xlu0 %1367
        %1369 = vrot.lane.b32.xlu0 %v1345, 12
        %v1370 = vpop.permute.xlu0 %1369
        %1371 = vrot.lane.b32.xlu0 %v1346, 12
        %v1372 = vpop.permute.xlu0 %1371
        %1373 = vrot.lane.b32.xlu0 %v1347, 12
        %v1374 = vpop.permute.xlu0 %1373
        %1375 = vrot.lane.b32.xlu0 %v1348, 12
        %v1376 = vpop.permute.xlu0 %1375
        %1377 = vrot.lane.b32.xlu0 %v1349, 12
        %v1378 = vpop.permute.xlu0 %1377
        %1379 = vrot.lane.b32.xlu0 %v1350, 12
        %v1380 = vpop.permute.xlu0 %1379
        %1381 = vrot.lane.b32.xlu0 %v1351, 12
        %v1382 = vpop.permute.xlu0 %1381
        %1383 = vrot.lane.b32.xlu0 %v1352, 12
        %v1384 = vpop.permute.xlu0 %1383
        %vm1401 = vcmask 130144
        %1402 = vst.msk [vmem:[#allocation2] sm:$0xff] %vm1401, %v1354
        %1403 = vst.msk [vmem:[#allocation2 + $0x8] sm:$0xff] %vm1401, %v1356
        %1404 = vst.msk [vmem:[#allocation2 + $0x10] sm:$0xff] %vm1401, %v1358
        %1405 = vst.msk [vmem:[#allocation2 + $0x18] sm:$0xff] %vm1401, %v1360
        %1406 = vst.msk [vmem:[#allocation2 + $0x20] sm:$0xff] %vm1401, %v1362
        %1407 = vst.msk [vmem:[#allocation2 + $0x28] sm:$0xff] %vm1401, %v1364
        %1408 = vst.msk [vmem:[#allocation2 + $0x30] sm:$0xff] %vm1401, %v1366
        %1409 = vst.msk [vmem:[#allocation2 + $0x38] sm:$0xff] %vm1401, %v1368
        %1410 = vst.msk [vmem:[#allocation2 + $0x40] sm:$0xff] %vm1401, %v1370
        %1411 = vst.msk [vmem:[#allocation2 + $0x48] sm:$0xff] %vm1401, %v1372
        %1412 = vst.msk [vmem:[#allocation2 + $0x50] sm:$0xff] %vm1401, %v1374
        %1413 = vst.msk [vmem:[#allocation2 + $0x58] sm:$0xff] %vm1401, %v1376
        %1414 = vst.msk [vmem:[#allocation2 + $0x60] sm:$0xff] %vm1401, %v1378
        %1415 = vst.msk [vmem:[#allocation2 + $0x68] sm:$0xff] %vm1401, %v1380
        %1416 = vst.msk [vmem:[#allocation2 + $0x70] sm:$0xff] %vm1401, %v1382
        %1417 = vst.msk [vmem:[#allocation2 + $0x78] sm:$0xff] %vm1401, %v1384
        %v1418 = vld [vmem:[%s1240] sm:$0xf]
        %v1419 = vld [vmem:[%s1240 + $0x4] sm:$0xf]
        %v1420 = vld [vmem:[%s1240 + $0x8] sm:$0x1]
        %v1421 = vld [vmem:[%s1240 + $0xc] sm:$0xf]
        %v1422 = vld [vmem:[%s1240 + $0x10] sm:$0xf]
        %v1423 = vld [vmem:[%s1240 + $0x14] sm:$0x1]
        %v1424 = vld [vmem:[%s1240 + $0x18] sm:$0xf]
        %v1425 = vld [vmem:[%s1240 + $0x1c] sm:$0xf]
        %v1426 = vld [vmem:[%s1240 + $0x20] sm:$0x1]
        %v1427 = vld [vmem:[%s1240 + $0x24] sm:$0xf]
        %v1428 = vld [vmem:[%s1240 + $0x28] sm:$0xf]
        %v1429 = vld [vmem:[%s1240 + $0x2c] sm:$0x1]
        %v1430 = vld [vmem:[%s1240 + $0x30] sm:$0xf]
        %v1431 = vld [vmem:[%s1240 + $0x34] sm:$0xf]
        %v1432 = vld [vmem:[%s1240 + $0x38] sm:$0x1]
        %v1433 = vld [vmem:[%s1240 + $0x3c] sm:$0xf]
        %v1434 = vld [vmem:[%s1240 + $0x40] sm:$0xf]
        %v1435 = vld [vmem:[%s1240 + $0x44] sm:$0x1]
        %v1436 = vld [vmem:[%s1240 + $0x48] sm:$0xf]
        %v1437 = vld [vmem:[%s1240 + $0x4c] sm:$0xf]
        %v1438 = vld [vmem:[%s1240 + $0x50] sm:$0x1]
        %v1439 = vld [vmem:[%s1240 + $0x54] sm:$0xf]
        %v1440 = vld [vmem:[%s1240 + $0x58] sm:$0xf]
        %v1441 = vld [vmem:[%s1240 + $0x5c] sm:$0x1]
        %v1442 = vld [vmem:[%s1240 + $0x60] sm:$0xf]
        %v1443 = vld [vmem:[%s1240 + $0x64] sm:$0xf]
        %v1444 = vld [vmem:[%s1240 + $0x68] sm:$0x1]
        %v1445 = vld [vmem:[%s1240 + $0x6c] sm:$0xf]
        %v1446 = vld [vmem:[%s1240 + $0x70] sm:$0xf]
        %v1447 = vld [vmem:[%s1240 + $0x74] sm:$0x1]
        %v1448 = vld [vmem:[%s1240 + $0x78] sm:$0xf]
        %v1449 = vld [vmem:[%s1240 + $0x7c] sm:$0xf]
        %v1450 = vld [vmem:[%s1240 + $0x80] sm:$0x1]
        %v1451 = vld [vmem:[%s1240 + $0x84] sm:$0xf]
        %v1452 = vld [vmem:[%s1240 + $0x88] sm:$0xf]
        %v1453 = vld [vmem:[%s1240 + $0x8c] sm:$0x1]
        %v1454 = vld [vmem:[%s1240 + $0x90] sm:$0xf]
        %v1455 = vld [vmem:[%s1240 + $0x94] sm:$0xf]
        %v1456 = vld [vmem:[%s1240 + $0x98] sm:$0x1]
        %v1457 = vld [vmem:[%s1240 + $0x9c] sm:$0xf]
        %v1458 = vld [vmem:[%s1240 + $0xa0] sm:$0xf]
        %v1459 = vld [vmem:[%s1240 + $0xa4] sm:$0x1]
        %v1460 = vld [vmem:[%s1240 + $0xa8] sm:$0xf]
        %v1461 = vld [vmem:[%s1240 + $0xac] sm:$0xf]
        %v1462 = vld [vmem:[%s1240 + $0xb0] sm:$0x1]
        %v1463 = vld [vmem:[%s1240 + $0xb4] sm:$0xf]
        %v1464 = vld [vmem:[%s1240 + $0xb8] sm:$0xf]
        %v1465 = vld [vmem:[%s1240 + $0xbc] sm:$0x1]
        %v1467 = vshrl.u32 %v1418, 16
        %v1469 = vrot.slane %v1467, 4
        %v1470 = vshll.u32 %v1418, 16
        %v1472 = vrot.slane %v1470, 5
        %v1473 = vor.u32 %v1469, %v1472
        %v1474 = vrot.slane %v1473, 4
        %v1476 = vshll.u32 %v1419, 16
        %v1478 = vrot.slane %v1476, 5
        %v1479 = vsel %vm418, %v1474, %v1478
        %v1480 = vshrl.u32 %v1419, 16
        %v1482 = vrot.slane %v1480, 4
        %v1483 = vor.u32 %v1482, %v1478
        %v1484 = vrot.slane %v1483, 4
        %v1486 = vshll.u32 %v1420, 16
        %v1488 = vrot.slane %v1486, 5
        %v1489 = vsel %vm418, %v1484, %v1488
        %v1491 = vshrl.u32 %v1421, 16
        %v1493 = vrot.slane %v1491, 4
        %v1494 = vshll.u32 %v1421, 16
        %v1496 = vrot.slane %v1494, 5
        %v1497 = vor.u32 %v1493, %v1496
        %v1498 = vrot.slane %v1497, 4
        %v1500 = vshll.u32 %v1422, 16
        %v1502 = vrot.slane %v1500, 5
        %v1503 = vsel %vm418, %v1498, %v1502
        %v1504 = vshrl.u32 %v1422, 16
        %v1506 = vrot.slane %v1504, 4
        %v1507 = vor.u32 %v1506, %v1502
        %v1508 = vrot.slane %v1507, 4
        %v1510 = vshll.u32 %v1423, 16
        %v1512 = vrot.slane %v1510, 5
        %v1513 = vsel %vm418, %v1508, %v1512
        %v1515 = vshrl.u32 %v1424, 16
        %v1517 = vrot.slane %v1515, 4
        %v1518 = vshll.u32 %v1424, 16
        %v1520 = vrot.slane %v1518, 5
        %v1521 = vor.u32 %v1517, %v1520
        %v1522 = vrot.slane %v1521, 4
        %v1524 = vshll.u32 %v1425, 16
        %v1526 = vrot.slane %v1524, 5
        %v1527 = vsel %vm418, %v1522, %v1526
        %v1528 = vshrl.u32 %v1425, 16
        %v1530 = vrot.slane %v1528, 4
        %v1531 = vor.u32 %v1530, %v1526
        %v1532 = vrot.slane %v1531, 4
        %v1534 = vshll.u32 %v1426, 16
        %v1536 = vrot.slane %v1534, 5
        %v1537 = vsel %vm418, %v1532, %v1536
        %v1539 = vshrl.u32 %v1427, 16
        %v1541 = vrot.slane %v1539, 4
        %v1542 = vshll.u32 %v1427, 16
        %v1544 = vrot.slane %v1542, 5
        %v1545 = vor.u32 %v1541, %v1544
        %v1546 = vrot.slane %v1545, 4
        %v1548 = vshll.u32 %v1428, 16
        %v1550 = vrot.slane %v1548, 5
        %v1551 = vsel %vm418, %v1546, %v1550
        %v1552 = vshrl.u32 %v1428, 16
        %v1554 = vrot.slane %v1552, 4
        %v1555 = vor.u32 %v1554, %v1550
        %v1556 = vrot.slane %v1555, 4
        %v1558 = vshll.u32 %v1429, 16
        %v1560 = vrot.slane %v1558, 5
        %v1561 = vsel %vm418, %v1556, %v1560
        %v1563 = vshrl.u32 %v1430, 16
        %v1565 = vrot.slane %v1563, 4
        %v1566 = vshll.u32 %v1430, 16
        %v1568 = vrot.slane %v1566, 5
        %v1569 = vor.u32 %v1565, %v1568
        %v1570 = vrot.slane %v1569, 4
        %v1572 = vshll.u32 %v1431, 16
        %v1574 = vrot.slane %v1572, 5
        %v1575 = vsel %vm418, %v1570, %v1574
        %v1576 = vshrl.u32 %v1431, 16
        %v1578 = vrot.slane %v1576, 4
        %v1579 = vor.u32 %v1578, %v1574
        %v1580 = vrot.slane %v1579, 4
        %v1582 = vshll.u32 %v1432, 16
        %v1584 = vrot.slane %v1582, 5
        %v1585 = vsel %vm418, %v1580, %v1584
        %v1587 = vshrl.u32 %v1433, 16
        %v1589 = vrot.slane %v1587, 4
        %v1590 = vshll.u32 %v1433, 16
        %v1592 = vrot.slane %v1590, 5
        %v1593 = vor.u32 %v1589, %v1592
        %v1594 = vrot.slane %v1593, 4
        %v1596 = vshll.u32 %v1434, 16
        %v1598 = vrot.slane %v1596, 5
        %v1599 = vsel %vm418, %v1594, %v1598
        %v1600 = vshrl.u32 %v1434, 16
        %v1602 = vrot.slane %v1600, 4
        %v1603 = vor.u32 %v1602, %v1598
        %v1604 = vrot.slane %v1603, 4
        %v1606 = vshll.u32 %v1435, 16
        %v1608 = vrot.slane %v1606, 5
        %v1609 = vsel %vm418, %v1604, %v1608
        %v1611 = vshrl.u32 %v1436, 16
        %v1613 = vrot.slane %v1611, 4
        %v1614 = vshll.u32 %v1436, 16
        %v1616 = vrot.slane %v1614, 5
        %v1617 = vor.u32 %v1613, %v1616
        %v1618 = vrot.slane %v1617, 4
        %v1620 = vshll.u32 %v1437, 16
        %v1622 = vrot.slane %v1620, 5
        %v1623 = vsel %vm418, %v1618, %v1622
        %v1624 = vshrl.u32 %v1437, 16
        %v1626 = vrot.slane %v1624, 4
        %v1627 = vor.u32 %v1626, %v1622
        %v1628 = vrot.slane %v1627, 4
        %v1630 = vshll.u32 %v1438, 16
        %v1632 = vrot.slane %v1630, 5
        %v1633 = vsel %vm418, %v1628, %v1632
        %v1635 = vshrl.u32 %v1439, 16
        %v1637 = vrot.slane %v1635, 4
        %v1638 = vshll.u32 %v1439, 16
        %v1640 = vrot.slane %v1638, 5
        %v1641 = vor.u32 %v1637, %v1640
        %v1642 = vrot.slane %v1641, 4
        %v1644 = vshll.u32 %v1440, 16
        %v1646 = vrot.slane %v1644, 5
        %v1647 = vsel %vm418, %v1642, %v1646
        %v1648 = vshrl.u32 %v1440, 16
        %v1650 = vrot.slane %v1648, 4
        %v1651 = vor.u32 %v1650, %v1646
        %v1652 = vrot.slane %v1651, 4
        %v1654 = vshll.u32 %v1441, 16
        %v1656 = vrot.slane %v1654, 5
        %v1657 = vsel %vm418, %v1652, %v1656
        %v1659 = vshrl.u32 %v1442, 16
        %v1661 = vrot.slane %v1659, 4
        %v1662 = vshll.u32 %v1442, 16
        %v1664 = vrot.slane %v1662, 5
        %v1665 = vor.u32 %v1661, %v1664
        %v1666 = vrot.slane %v1665, 4
        %v1668 = vshll.u32 %v1443, 16
        %v1670 = vrot.slane %v1668, 5
        %v1671 = vsel %vm418, %v1666, %v1670
        %v1672 = vshrl.u32 %v1443, 16
        %v1674 = vrot.slane %v1672, 4
        %v1675 = vor.u32 %v1674, %v1670
        %v1676 = vrot.slane %v1675, 4
        %v1678 = vshll.u32 %v1444, 16
        %v1680 = vrot.slane %v1678, 5
        %v1681 = vsel %vm418, %v1676, %v1680
        %v1683 = vshrl.u32 %v1445, 16
        %v1685 = vrot.slane %v1683, 4
        %v1686 = vshll.u32 %v1445, 16
        %v1688 = vrot.slane %v1686, 5
        %v1689 = vor.u32 %v1685, %v1688
        %v1690 = vrot.slane %v1689, 4
        %v1692 = vshll.u32 %v1446, 16
        %v1694 = vrot.slane %v1692, 5
        %v1695 = vsel %vm418, %v1690, %v1694
        %v1696 = vshrl.u32 %v1446, 16
        %v1698 = vrot.slane %v1696, 4
        %v1699 = vor.u32 %v1698, %v1694
        %v1700 = vrot.slane %v1699, 4
        %v1702 = vshll.u32 %v1447, 16
        %v1704 = vrot.slane %v1702, 5
        %v1705 = vsel %vm418, %v1700, %v1704
        %v1707 = vshrl.u32 %v1448, 16
        %v1709 = vrot.slane %v1707, 4
        %v1710 = vshll.u32 %v1448, 16
        %v1712 = vrot.slane %v1710, 5
        %v1713 = vor.u32 %v1709, %v1712
        %v1714 = vrot.slane %v1713, 4
        %v1716 = vshll.u32 %v1449, 16
        %v1718 = vrot.slane %v1716, 5
        %v1719 = vsel %vm418, %v1714, %v1718
        %v1720 = vshrl.u32 %v1449, 16
        %v1722 = vrot.slane %v1720, 4
        %v1723 = vor.u32 %v1722, %v1718
        %v1724 = vrot.slane %v1723, 4
        %v1726 = vshll.u32 %v1450, 16
        %v1728 = vrot.slane %v1726, 5
        %v1729 = vsel %vm418, %v1724, %v1728
        %v1731 = vshrl.u32 %v1451, 16
        %v1733 = vrot.slane %v1731, 4
        %v1734 = vshll.u32 %v1451, 16
        %v1736 = vrot.slane %v1734, 5
        %v1737 = vor.u32 %v1733, %v1736
        %v1738 = vrot.slane %v1737, 4
        %v1740 = vshll.u32 %v1452, 16
        %v1742 = vrot.slane %v1740, 5
        %v1743 = vsel %vm418, %v1738, %v1742
        %v1744 = vshrl.u32 %v1452, 16
        %v1746 = vrot.slane %v1744, 4
        %v1747 = vor.u32 %v1746, %v1742
        %v1748 = vrot.slane %v1747, 4
        %v1750 = vshll.u32 %v1453, 16
        %v1752 = vrot.slane %v1750, 5
        %v1753 = vsel %vm418, %v1748, %v1752
        %v1755 = vshrl.u32 %v1454, 16
        %v1757 = vrot.slane %v1755, 4
        %v1758 = vshll.u32 %v1454, 16
        %v1760 = vrot.slane %v1758, 5
        %v1761 = vor.u32 %v1757, %v1760
        %v1762 = vrot.slane %v1761, 4
        %v1764 = vshll.u32 %v1455, 16
        %v1766 = vrot.slane %v1764, 5
        %v1767 = vsel %vm418, %v1762, %v1766
        %v1768 = vshrl.u32 %v1455, 16
        %v1770 = vrot.slane %v1768, 4
        %v1771 = vor.u32 %v1770, %v1766
        %v1772 = vrot.slane %v1771, 4
        %v1774 = vshll.u32 %v1456, 16
        %v1776 = vrot.slane %v1774, 5
        %v1777 = vsel %vm418, %v1772, %v1776
        %v1779 = vshrl.u32 %v1457, 16
        %v1781 = vrot.slane %v1779, 4
        %v1782 = vshll.u32 %v1457, 16
        %v1784 = vrot.slane %v1782, 5
        %v1785 = vor.u32 %v1781, %v1784
        %v1786 = vrot.slane %v1785, 4
        %v1788 = vshll.u32 %v1458, 16
        %v1790 = vrot.slane %v1788, 5
        %v1791 = vsel %vm418, %v1786, %v1790
        %v1792 = vshrl.u32 %v1458, 16
        %v1794 = vrot.slane %v1792, 4
        %v1795 = vor.u32 %v1794, %v1790
        %v1796 = vrot.slane %v1795, 4
        %v1798 = vshll.u32 %v1459, 16
        %v1800 = vrot.slane %v1798, 5
        %v1801 = vsel %vm418, %v1796, %v1800
        %v1803 = vshrl.u32 %v1460, 16
        %v1805 = vrot.slane %v1803, 4
        %v1806 = vshll.u32 %v1460, 16
        %v1808 = vrot.slane %v1806, 5
        %v1809 = vor.u32 %v1805, %v1808
        %v1810 = vrot.slane %v1809, 4
        %v1812 = vshll.u32 %v1461, 16
        %v1814 = vrot.slane %v1812, 5
        %v1815 = vsel %vm418, %v1810, %v1814
        %v1816 = vshrl.u32 %v1461, 16
        %v1818 = vrot.slane %v1816, 4
        %v1819 = vor.u32 %v1818, %v1814
        %v1820 = vrot.slane %v1819, 4
        %v1822 = vshll.u32 %v1462, 16
        %v1824 = vrot.slane %v1822, 5
        %v1825 = vsel %vm418, %v1820, %v1824
        %v1827 = vshrl.u32 %v1463, 16
        %v1829 = vrot.slane %v1827, 4
        %v1830 = vshll.u32 %v1463, 16
        %v1832 = vrot.slane %v1830, 5
        %v1833 = vor.u32 %v1829, %v1832
        %v1834 = vrot.slane %v1833, 4
        %v1836 = vshll.u32 %v1464, 16
        %v1838 = vrot.slane %v1836, 5
        %v1839 = vsel %vm418, %v1834, %v1838
        %v1840 = vshrl.u32 %v1464, 16
        %v1842 = vrot.slane %v1840, 4
        %v1843 = vor.u32 %v1842, %v1838
        %v1844 = vrot.slane %v1843, 4
        %v1846 = vshll.u32 %v1465, 16
        %v1848 = vrot.slane %v1846, 5
        %v1849 = vsel %vm418, %v1844, %v1848
        %v1850 = vunpack.c.l.b16 %v1479
        %v1851 = vunpack.c.l.b16 %v1489
        %v1852 = vunpack.c.l.b16 %v1503
        %v1853 = vunpack.c.l.b16 %v1513
        %v1854 = vunpack.c.l.b16 %v1527
        %v1855 = vunpack.c.l.b16 %v1537
        %v1856 = vunpack.c.l.b16 %v1551
        %v1857 = vunpack.c.l.b16 %v1561
        %v1858 = vunpack.c.l.b16 %v1575
        %v1859 = vunpack.c.l.b16 %v1585
        %v1860 = vunpack.c.l.b16 %v1599
        %v1861 = vunpack.c.l.b16 %v1609
        %v1862 = vunpack.c.l.b16 %v1623
        %v1863 = vunpack.c.l.b16 %v1633
        %v1864 = vunpack.c.l.b16 %v1647
        %v1865 = vunpack.c.l.b16 %v1657
        %v1866 = vunpack.c.l.b16 %v1671
        %v1867 = vunpack.c.l.b16 %v1681
        %v1868 = vunpack.c.l.b16 %v1695
        %v1869 = vunpack.c.l.b16 %v1705
        %v1870 = vunpack.c.l.b16 %v1719
        %v1871 = vunpack.c.l.b16 %v1729
        %v1872 = vunpack.c.l.b16 %v1743
        %v1873 = vunpack.c.l.b16 %v1753
        %v1874 = vunpack.c.l.b16 %v1767
        %v1875 = vunpack.c.l.b16 %v1777
        %v1876 = vunpack.c.l.b16 %v1791
        %v1877 = vunpack.c.l.b16 %v1801
        %v1878 = vunpack.c.l.b16 %v1815
        %v1879 = vunpack.c.l.b16 %v1825
        %v1880 = vunpack.c.l.b16 %v1839
        %v1881 = vunpack.c.l.b16 %v1849
        %v1882 = vpack.c.b16 %v1851, %v1850
        %v1883 = vpack.c.b16 %v1853, %v1852
        %v1884 = vpack.c.b16 %v1855, %v1854
        %v1885 = vpack.c.b16 %v1857, %v1856
        %v1886 = vpack.c.b16 %v1859, %v1858
        %v1887 = vpack.c.b16 %v1861, %v1860
        %v1888 = vpack.c.b16 %v1863, %v1862
        %v1889 = vpack.c.b16 %v1865, %v1864
        %v1890 = vpack.c.b16 %v1867, %v1866
        %v1891 = vpack.c.b16 %v1869, %v1868
        %v1892 = vpack.c.b16 %v1871, %v1870
        %v1893 = vpack.c.b16 %v1873, %v1872
        %v1894 = vpack.c.b16 %v1875, %v1874
        %v1895 = vpack.c.b16 %v1877, %v1876
        %v1896 = vpack.c.b16 %v1879, %v1878
        %v1897 = vpack.c.b16 %v1881, %v1880
        %1898 = vrot.lane.b32.xlu0 %v1882, 16
        %v1899 = vpop.permute.xlu0 %1898
        %1900 = vrot.lane.b32.xlu0 %v1883, 16
        %v1901 = vpop.permute.xlu0 %1900
        %1902 = vrot.lane.b32.xlu0 %v1884, 16
        %v1903 = vpop.permute.xlu0 %1902
        %1904 = vrot.lane.b32.xlu0 %v1885, 16
        %v1905 = vpop.permute.xlu0 %1904
        %1906 = vrot.lane.b32.xlu0 %v1886, 16
        %v1907 = vpop.permute.xlu0 %1906
        %1908 = vrot.lane.b32.xlu0 %v1887, 16
        %v1909 = vpop.permute.xlu0 %1908
        %1910 = vrot.lane.b32.xlu0 %v1888, 16
        %v1911 = vpop.permute.xlu0 %1910
        %1912 = vrot.lane.b32.xlu0 %v1889, 16
        %v1913 = vpop.permute.xlu0 %1912
        %1914 = vrot.lane.b32.xlu0 %v1890, 16
        %v1915 = vpop.permute.xlu0 %1914
        %1916 = vrot.lane.b32.xlu0 %v1891, 16
        %v1917 = vpop.permute.xlu0 %1916
        %1918 = vrot.lane.b32.xlu0 %v1892, 16
        %v1919 = vpop.permute.xlu0 %1918
        %1920 = vrot.lane.b32.xlu0 %v1893, 16
        %v1921 = vpop.permute.xlu0 %1920
        %1922 = vrot.lane.b32.xlu0 %v1894, 16
        %v1923 = vpop.permute.xlu0 %1922
        %1924 = vrot.lane.b32.xlu0 %v1895, 16
        %v1925 = vpop.permute.xlu0 %1924
        %1926 = vrot.lane.b32.xlu0 %v1896, 16
        %v1927 = vpop.permute.xlu0 %1926
        %1928 = vrot.lane.b32.xlu0 %v1897, 16
        %v1929 = vpop.permute.xlu0 %1928
        %vm1946 = vcmask 162944
        %1947 = vst.msk [vmem:[#allocation2] sm:$0xff] %vm1946, %v1899
        %1948 = vst.msk [vmem:[#allocation2 + $0x8] sm:$0xff] %vm1946, %v1901
        %1949 = vst.msk [vmem:[#allocation2 + $0x10] sm:$0xff] %vm1946, %v1903
        %1950 = vst.msk [vmem:[#allocation2 + $0x18] sm:$0xff] %vm1946, %v1905
        %1951 = vst.msk [vmem:[#allocation2 + $0x20] sm:$0xff] %vm1946, %v1907
        %1952 = vst.msk [vmem:[#allocation2 + $0x28] sm:$0xff] %vm1946, %v1909
        %1953 = vst.msk [vmem:[#allocation2 + $0x30] sm:$0xff] %vm1946, %v1911
        %1954 = vst.msk [vmem:[#allocation2 + $0x38] sm:$0xff] %vm1946, %v1913
        %1955 = vst.msk [vmem:[#allocation2 + $0x40] sm:$0xff] %vm1946, %v1915
        %1956 = vst.msk [vmem:[#allocation2 + $0x48] sm:$0xff] %vm1946, %v1917
        %1957 = vst.msk [vmem:[#allocation2 + $0x50] sm:$0xff] %vm1946, %v1919
        %1958 = vst.msk [vmem:[#allocation2 + $0x58] sm:$0xff] %vm1946, %v1921
        %1959 = vst.msk [vmem:[#allocation2 + $0x60] sm:$0xff] %vm1946, %v1923
        %1960 = vst.msk [vmem:[#allocation2 + $0x68] sm:$0xff] %vm1946, %v1925
        %1961 = vst.msk [vmem:[#allocation2 + $0x70] sm:$0xff] %vm1946, %v1927
        %1962 = vst.msk [vmem:[#allocation2 + $0x78] sm:$0xff] %vm1946, %v1929
        %v1963 = vld [vmem:[%s1240] sm:$0xe]
        %v1964 = vld [vmem:[%s1240 + $0x4] sm:$0xf]
        %v1965 = vld [vmem:[%s1240 + $0x8] sm:$0x1]
        %v1966 = vld [vmem:[%s1240 + $0xc] sm:$0xe]
        %v1967 = vld [vmem:[%s1240 + $0x10] sm:$0xf]
        %v1968 = vld [vmem:[%s1240 + $0x14] sm:$0x1]
        %v1969 = vld [vmem:[%s1240 + $0x18] sm:$0xe]
        %v1970 = vld [vmem:[%s1240 + $0x1c] sm:$0xf]
        %v1971 = vld [vmem:[%s1240 + $0x20] sm:$0x1]
        %v1972 = vld [vmem:[%s1240 + $0x24] sm:$0xe]
        %v1973 = vld [vmem:[%s1240 + $0x28] sm:$0xf]
        %v1974 = vld [vmem:[%s1240 + $0x2c] sm:$0x1]
        %v1975 = vld [vmem:[%s1240 + $0x30] sm:$0xe]
        %v1976 = vld [vmem:[%s1240 + $0x34] sm:$0xf]
        %v1977 = vld [vmem:[%s1240 + $0x38] sm:$0x1]
        %v1978 = vld [vmem:[%s1240 + $0x3c] sm:$0xe]
        %v1979 = vld [vmem:[%s1240 + $0x40] sm:$0xf]
        %v1980 = vld [vmem:[%s1240 + $0x44] sm:$0x1]
        %v1981 = vld [vmem:[%s1240 + $0x48] sm:$0xe]
        %v1982 = vld [vmem:[%s1240 + $0x4c] sm:$0xf]
        %v1983 = vld [vmem:[%s1240 + $0x50] sm:$0x1]
        %v1984 = vld [vmem:[%s1240 + $0x54] sm:$0xe]
        %v1985 = vld [vmem:[%s1240 + $0x58] sm:$0xf]
        %v1986 = vld [vmem:[%s1240 + $0x5c] sm:$0x1]
        %v1987 = vld [vmem:[%s1240 + $0x60] sm:$0xe]
        %v1988 = vld [vmem:[%s1240 + $0x64] sm:$0xf]
        %v1989 = vld [vmem:[%s1240 + $0x68] sm:$0x1]
        %v1990 = vld [vmem:[%s1240 + $0x6c] sm:$0xe]
        %v1991 = vld [vmem:[%s1240 + $0x70] sm:$0xf]
        %v1992 = vld [vmem:[%s1240 + $0x74] sm:$0x1]
        %v1993 = vld [vmem:[%s1240 + $0x78] sm:$0xe]
        %v1994 = vld [vmem:[%s1240 + $0x7c] sm:$0xf]
        %v1995 = vld [vmem:[%s1240 + $0x80] sm:$0x1]
        %v1996 = vld [vmem:[%s1240 + $0x84] sm:$0xe]
        %v1997 = vld [vmem:[%s1240 + $0x88] sm:$0xf]
        %v1998 = vld [vmem:[%s1240 + $0x8c] sm:$0x1]
        %v1999 = vld [vmem:[%s1240 + $0x90] sm:$0xe]
        %v2000 = vld [vmem:[%s1240 + $0x94] sm:$0xf]
        %v2001 = vld [vmem:[%s1240 + $0x98] sm:$0x1]
        %v2002 = vld [vmem:[%s1240 + $0x9c] sm:$0xe]
        %v2003 = vld [vmem:[%s1240 + $0xa0] sm:$0xf]
        %v2004 = vld [vmem:[%s1240 + $0xa4] sm:$0x1]
        %v2005 = vld [vmem:[%s1240 + $0xa8] sm:$0xe]
        %v2006 = vld [vmem:[%s1240 + $0xac] sm:$0xf]
        %v2007 = vld [vmem:[%s1240 + $0xb0] sm:$0x1]
        %v2008 = vld [vmem:[%s1240 + $0xb4] sm:$0xe]
        %v2009 = vld [vmem:[%s1240 + $0xb8] sm:$0xf]
        %v2010 = vld [vmem:[%s1240 + $0xbc] sm:$0x1]
        %v2059 = vrot.slane %v1963, 5
        %v2060 = vrot.slane %v2059, 4
        %v2061 = vrot.slane %v1964, 5
        %v2062 = vsel %vm1014, %v2060, %v2061
        %v2063 = vrot.slane %v2061, 4
        %v2064 = vrot.slane %v1965, 5
        %v2065 = vsel %vm1014, %v2063, %v2064
        %v2066 = vrot.slane %v1966, 5
        %v2067 = vrot.slane %v2066, 4
        %v2068 = vrot.slane %v1967, 5
        %v2069 = vsel %vm1014, %v2067, %v2068
        %v2070 = vrot.slane %v2068, 4
        %v2071 = vrot.slane %v1968, 5
        %v2072 = vsel %vm1014, %v2070, %v2071
        %v2073 = vrot.slane %v1969, 5
        %v2074 = vrot.slane %v2073, 4
        %v2075 = vrot.slane %v1970, 5
        %v2076 = vsel %vm1014, %v2074, %v2075
        %v2077 = vrot.slane %v2075, 4
        %v2078 = vrot.slane %v1971, 5
        %v2079 = vsel %vm1014, %v2077, %v2078
        %v2080 = vrot.slane %v1972, 5
        %v2081 = vrot.slane %v2080, 4
        %v2082 = vrot.slane %v1973, 5
        %v2083 = vsel %vm1014, %v2081, %v2082
        %v2084 = vrot.slane %v2082, 4
        %v2085 = vrot.slane %v1974, 5
        %v2086 = vsel %vm1014, %v2084, %v2085
        %v2087 = vrot.slane %v1975, 5
        %v2088 = vrot.slane %v2087, 4
        %v2089 = vrot.slane %v1976, 5
        %v2090 = vsel %vm1014, %v2088, %v2089
        %v2091 = vrot.slane %v2089, 4
        %v2092 = vrot.slane %v1977, 5
        %v2093 = vsel %vm1014, %v2091, %v2092
        %v2094 = vrot.slane %v1978, 5
        %v2095 = vrot.slane %v2094, 4
        %v2096 = vrot.slane %v1979, 5
        %v2097 = vsel %vm1014, %v2095, %v2096
        %v2098 = vrot.slane %v2096, 4
        %v2099 = vrot.slane %v1980, 5
        %v2100 = vsel %vm1014, %v2098, %v2099
        %v2101 = vrot.slane %v1981, 5
        %v2102 = vrot.slane %v2101, 4
        %v2103 = vrot.slane %v1982, 5
        %v2104 = vsel %vm1014, %v2102, %v2103
        %v2105 = vrot.slane %v2103, 4
        %v2106 = vrot.slane %v1983, 5
        %v2107 = vsel %vm1014, %v2105, %v2106
        %v2108 = vrot.slane %v1984, 5
        %v2109 = vrot.slane %v2108, 4
        %v2110 = vrot.slane %v1985, 5
        %v2111 = vsel %vm1014, %v2109, %v2110
        %v2112 = vrot.slane %v2110, 4
        %v2113 = vrot.slane %v1986, 5
        %v2114 = vsel %vm1014, %v2112, %v2113
        %v2115 = vrot.slane %v1987, 5
        %v2116 = vrot.slane %v2115, 4
        %v2117 = vrot.slane %v1988, 5
        %v2118 = vsel %vm1014, %v2116, %v2117
        %v2119 = vrot.slane %v2117, 4
        %v2120 = vrot.slane %v1989, 5
        %v2121 = vsel %vm1014, %v2119, %v2120
        %v2122 = vrot.slane %v1990, 5
        %v2123 = vrot.slane %v2122, 4
        %v2124 = vrot.slane %v1991, 5
        %v2125 = vsel %vm1014, %v2123, %v2124
        %v2126 = vrot.slane %v2124, 4
        %v2127 = vrot.slane %v1992, 5
        %v2128 = vsel %vm1014, %v2126, %v2127
        %v2129 = vrot.slane %v1993, 5
        %v2130 = vrot.slane %v2129, 4
        %v2131 = vrot.slane %v1994, 5
        %v2132 = vsel %vm1014, %v2130, %v2131
        %v2133 = vrot.slane %v2131, 4
        %v2134 = vrot.slane %v1995, 5
        %v2135 = vsel %vm1014, %v2133, %v2134
        %v2136 = vrot.slane %v1996, 5
        %v2137 = vrot.slane %v2136, 4
        %v2138 = vrot.slane %v1997, 5
        %v2139 = vsel %vm1014, %v2137, %v2138
        %v2140 = vrot.slane %v2138, 4
        %v2141 = vrot.slane %v1998, 5
        %v2142 = vsel %vm1014, %v2140, %v2141
        %v2143 = vrot.slane %v1999, 5
        %v2144 = vrot.slane %v2143, 4
        %v2145 = vrot.slane %v2000, 5
        %v2146 = vsel %vm1014, %v2144, %v2145
        %v2147 = vrot.slane %v2145, 4
        %v2148 = vrot.slane %v2001, 5
        %v2149 = vsel %vm1014, %v2147, %v2148
        %v2150 = vrot.slane %v2002, 5
        %v2151 = vrot.slane %v2150, 4
        %v2152 = vrot.slane %v2003, 5
        %v2153 = vsel %vm1014, %v2151, %v2152
        %v2154 = vrot.slane %v2152, 4
        %v2155 = vrot.slane %v2004, 5
        %v2156 = vsel %vm1014, %v2154, %v2155
        %v2157 = vrot.slane %v2005, 5
        %v2158 = vrot.slane %v2157, 4
        %v2159 = vrot.slane %v2006, 5
        %v2160 = vsel %vm1014, %v2158, %v2159
        %v2161 = vrot.slane %v2159, 4
        %v2162 = vrot.slane %v2007, 5
        %v2163 = vsel %vm1014, %v2161, %v2162
        %v2164 = vrot.slane %v2008, 5
        %v2165 = vrot.slane %v2164, 4
        %v2166 = vrot.slane %v2009, 5
        %v2167 = vsel %vm1014, %v2165, %v2166
        %v2168 = vrot.slane %v2166, 4
        %v2169 = vrot.slane %v2010, 5
        %v2170 = vsel %vm1014, %v2168, %v2169
        %v2171 = vunpack.c.l.b16 %v2062
        %v2172 = vunpack.c.l.b16 %v2065
        %v2173 = vunpack.c.l.b16 %v2069
        %v2174 = vunpack.c.l.b16 %v2072
        %v2175 = vunpack.c.l.b16 %v2076
        %v2176 = vunpack.c.l.b16 %v2079
        %v2177 = vunpack.c.l.b16 %v2083
        %v2178 = vunpack.c.l.b16 %v2086
        %v2179 = vunpack.c.l.b16 %v2090
        %v2180 = vunpack.c.l.b16 %v2093
        %v2181 = vunpack.c.l.b16 %v2097
        %v2182 = vunpack.c.l.b16 %v2100
        %v2183 = vunpack.c.l.b16 %v2104
        %v2184 = vunpack.c.l.b16 %v2107
        %v2185 = vunpack.c.l.b16 %v2111
        %v2186 = vunpack.c.l.b16 %v2114
        %v2187 = vunpack.c.l.b16 %v2118
        %v2188 = vunpack.c.l.b16 %v2121
        %v2189 = vunpack.c.l.b16 %v2125
        %v2190 = vunpack.c.l.b16 %v2128
        %v2191 = vunpack.c.l.b16 %v2132
        %v2192 = vunpack.c.l.b16 %v2135
        %v2193 = vunpack.c.l.b16 %v2139
        %v2194 = vunpack.c.l.b16 %v2142
        %v2195 = vunpack.c.l.b16 %v2146
        %v2196 = vunpack.c.l.b16 %v2149
        %v2197 = vunpack.c.l.b16 %v2153
        %v2198 = vunpack.c.l.b16 %v2156
        %v2199 = vunpack.c.l.b16 %v2160
        %v2200 = vunpack.c.l.b16 %v2163
        %v2201 = vunpack.c.l.b16 %v2167
        %v2202 = vunpack.c.l.b16 %v2170
        %v2203 = vpack.c.b16 %v2172, %v2171
        %v2204 = vpack.c.b16 %v2174, %v2173
        %v2205 = vpack.c.b16 %v2176, %v2175
        %v2206 = vpack.c.b16 %v2178, %v2177
        %v2207 = vpack.c.b16 %v2180, %v2179
        %v2208 = vpack.c.b16 %v2182, %v2181
        %v2209 = vpack.c.b16 %v2184, %v2183
        %v2210 = vpack.c.b16 %v2186, %v2185
        %v2211 = vpack.c.b16 %v2188, %v2187
        %v2212 = vpack.c.b16 %v2190, %v2189
        %v2213 = vpack.c.b16 %v2192, %v2191
        %v2214 = vpack.c.b16 %v2194, %v2193
        %v2215 = vpack.c.b16 %v2196, %v2195
        %v2216 = vpack.c.b16 %v2198, %v2197
        %v2217 = vpack.c.b16 %v2200, %v2199
        %v2218 = vpack.c.b16 %v2202, %v2201
        %2219 = vrot.lane.b32.xlu0 %v2203, 20
        %v2220 = vpop.permute.xlu0 %2219
        %2221 = vrot.lane.b32.xlu0 %v2204, 20
        %v2222 = vpop.permute.xlu0 %2221
        %2223 = vrot.lane.b32.xlu0 %v2205, 20
        %v2224 = vpop.permute.xlu0 %2223
        %2225 = vrot.lane.b32.xlu0 %v2206, 20
        %v2226 = vpop.permute.xlu0 %2225
        %2227 = vrot.lane.b32.xlu0 %v2207, 20
        %v2228 = vpop.permute.xlu0 %2227
        %2229 = vrot.lane.b32.xlu0 %v2208, 20
        %v2230 = vpop.permute.xlu0 %2229
        %2231 = vrot.lane.b32.xlu0 %v2209, 20
        %v2232 = vpop.permute.xlu0 %2231
        %2233 = vrot.lane.b32.xlu0 %v2210, 20
        %v2234 = vpop.permute.xlu0 %2233
        %2235 = vrot.lane.b32.xlu0 %v2211, 20
        %v2236 = vpop.permute.xlu0 %2235
        %2237 = vrot.lane.b32.xlu0 %v2212, 20
        %v2238 = vpop.permute.xlu0 %2237
        %2239 = vrot.lane.b32.xlu0 %v2213, 20
        %v2240 = vpop.permute.xlu0 %2239
        %2241 = vrot.lane.b32.xlu0 %v2214, 20
        %v2242 = vpop.permute.xlu0 %2241
        %2243 = vrot.lane.b32.xlu0 %v2215, 20
        %v2244 = vpop.permute.xlu0 %2243
        %2245 = vrot.lane.b32.xlu0 %v2216, 20
        %v2246 = vpop.permute.xlu0 %2245
        %2247 = vrot.lane.b32.xlu0 %v2217, 20
        %v2248 = vpop.permute.xlu0 %2247
        %2249 = vrot.lane.b32.xlu0 %v2218, 20
        %v2250 = vpop.permute.xlu0 %2249
        %vm2267 = vcmask 195744
        %2268 = vst.msk [vmem:[#allocation2] sm:$0xff] %vm2267, %v2220
        %2269 = vst.msk [vmem:[#allocation2 + $0x8] sm:$0xff] %vm2267, %v2222
        %2270 = vst.msk [vmem:[#allocation2 + $0x10] sm:$0xff] %vm2267, %v2224
        %2271 = vst.msk [vmem:[#allocation2 + $0x18] sm:$0xff] %vm2267, %v2226
        %2272 = vst.msk [vmem:[#allocation2 + $0x20] sm:$0xff] %vm2267, %v2228
        %2273 = vst.msk [vmem:[#allocation2 + $0x28] sm:$0xff] %vm2267, %v2230
        %2274 = vst.msk [vmem:[#allocation2 + $0x30] sm:$0xff] %vm2267, %v2232
        %2275 = vst.msk [vmem:[#allocation2 + $0x38] sm:$0xff] %vm2267, %v2234
        %2276 = vst.msk [vmem:[#allocation2 + $0x40] sm:$0xff] %vm2267, %v2236
        %2277 = vst.msk [vmem:[#allocation2 + $0x48] sm:$0xff] %vm2267, %v2238
        %2278 = vst.msk [vmem:[#allocation2 + $0x50] sm:$0xff] %vm2267, %v2240
        %2279 = vst.msk [vmem:[#allocation2 + $0x58] sm:$0xff] %vm2267, %v2242
        %2280 = vst.msk [vmem:[#allocation2 + $0x60] sm:$0xff] %vm2267, %v2244
        %2281 = vst.msk [vmem:[#allocation2 + $0x68] sm:$0xff] %vm2267, %v2246
        %2282 = vst.msk [vmem:[#allocation2 + $0x70] sm:$0xff] %vm2267, %v2248
        %2283 = vst.msk [vmem:[#allocation2 + $0x78] sm:$0xff] %vm2267, %v2250
        %s2284 = scalar_lea.vmem %s221, 24
        %v2285 = vld [vmem:[%s2284] sm:$0xf]
        %v2286 = vld [vmem:[%s2284 + $0x4] sm:$0xf]
        %v2287 = vld [vmem:[%s2284 + $0xc] sm:$0xf]
        %v2288 = vld [vmem:[%s2284 + $0x10] sm:$0xf]
        %v2289 = vld [vmem:[%s2284 + $0x18] sm:$0xf]
        %v2290 = vld [vmem:[%s2284 + $0x1c] sm:$0xf]
        %v2291 = vld [vmem:[%s2284 + $0x24] sm:$0xf]
        %v2292 = vld [vmem:[%s2284 + $0x28] sm:$0xf]
        %v2293 = vld [vmem:[%s2284 + $0x30] sm:$0xf]
        %v2294 = vld [vmem:[%s2284 + $0x34] sm:$0xf]
        %v2295 = vld [vmem:[%s2284 + $0x3c] sm:$0xf]
        %v2296 = vld [vmem:[%s2284 + $0x40] sm:$0xf]
        %v2297 = vld [vmem:[%s2284 + $0x48] sm:$0xf]
        %v2298 = vld [vmem:[%s2284 + $0x4c] sm:$0xf]
        %v2299 = vld [vmem:[%s2284 + $0x54] sm:$0xf]
        %v2300 = vld [vmem:[%s2284 + $0x58] sm:$0xf]
        %v2301 = vld [vmem:[%s2284 + $0x60] sm:$0xf]
        %v2302 = vld [vmem:[%s2284 + $0x64] sm:$0xf]
        %v2303 = vld [vmem:[%s2284 + $0x6c] sm:$0xf]
        %v2304 = vld [vmem:[%s2284 + $0x70] sm:$0xf]
        %v2305 = vld [vmem:[%s2284 + $0x78] sm:$0xf]
        %v2306 = vld [vmem:[%s2284 + $0x7c] sm:$0xf]
        %v2307 = vld [vmem:[%s2284 + $0x84] sm:$0xf]
        %v2308 = vld [vmem:[%s2284 + $0x88] sm:$0xf]
        %v2309 = vld [vmem:[%s2284 + $0x90] sm:$0xf]
        %v2310 = vld [vmem:[%s2284 + $0x94] sm:$0xf]
        %v2311 = vld [vmem:[%s2284 + $0x9c] sm:$0xf]
        %v2312 = vld [vmem:[%s2284 + $0xa0] sm:$0xf]
        %v2313 = vld [vmem:[%s2284 + $0xa8] sm:$0xf]
        %v2314 = vld [vmem:[%s2284 + $0xac] sm:$0xf]
        %v2315 = vld [vmem:[%s2284 + $0xb4] sm:$0xf]
        %v2316 = vld [vmem:[%s2284 + $0xb8] sm:$0xf]
        %v2349 = vunpack.c.l.b16 %v2285
        %v2350 = vunpack.c.l.b16 %v2286
        %v2351 = vunpack.c.l.b16 %v2287
        %v2352 = vunpack.c.l.b16 %v2288
        %v2353 = vunpack.c.l.b16 %v2289
        %v2354 = vunpack.c.l.b16 %v2290
        %v2355 = vunpack.c.l.b16 %v2291
        %v2356 = vunpack.c.l.b16 %v2292
        %v2357 = vunpack.c.l.b16 %v2293
        %v2358 = vunpack.c.l.b16 %v2294
        %v2359 = vunpack.c.l.b16 %v2295
        %v2360 = vunpack.c.l.b16 %v2296
        %v2361 = vunpack.c.l.b16 %v2297
        %v2362 = vunpack.c.l.b16 %v2298
        %v2363 = vunpack.c.l.b16 %v2299
        %v2364 = vunpack.c.l.b16 %v2300
        %v2365 = vunpack.c.l.b16 %v2301
        %v2366 = vunpack.c.l.b16 %v2302
        %v2367 = vunpack.c.l.b16 %v2303
        %v2368 = vunpack.c.l.b16 %v2304
        %v2369 = vunpack.c.l.b16 %v2305
        %v2370 = vunpack.c.l.b16 %v2306
        %v2371 = vunpack.c.l.b16 %v2307
        %v2372 = vunpack.c.l.b16 %v2308
        %v2373 = vunpack.c.l.b16 %v2309
        %v2374 = vunpack.c.l.b16 %v2310
        %v2375 = vunpack.c.l.b16 %v2311
        %v2376 = vunpack.c.l.b16 %v2312
        %v2377 = vunpack.c.l.b16 %v2313
        %v2378 = vunpack.c.l.b16 %v2314
        %v2379 = vunpack.c.l.b16 %v2315
        %v2380 = vunpack.c.l.b16 %v2316
        %v2381 = vpack.c.b16 %v2350, %v2349
        %v2382 = vpack.c.b16 %v2352, %v2351
        %v2383 = vpack.c.b16 %v2354, %v2353
        %v2384 = vpack.c.b16 %v2356, %v2355
        %v2385 = vpack.c.b16 %v2358, %v2357
        %v2386 = vpack.c.b16 %v2360, %v2359
        %v2387 = vpack.c.b16 %v2362, %v2361
        %v2388 = vpack.c.b16 %v2364, %v2363
        %v2389 = vpack.c.b16 %v2366, %v2365
        %v2390 = vpack.c.b16 %v2368, %v2367
        %v2391 = vpack.c.b16 %v2370, %v2369
        %v2392 = vpack.c.b16 %v2372, %v2371
        %v2393 = vpack.c.b16 %v2374, %v2373
        %v2394 = vpack.c.b16 %v2376, %v2375
        %v2395 = vpack.c.b16 %v2378, %v2377
        %v2396 = vpack.c.b16 %v2380, %v2379
        %2397 = vrot.lane.b32.xlu0 %v2381, 24
        %v2398 = vpop.permute.xlu0 %2397
        %2399 = vrot.lane.b32.xlu0 %v2382, 24
        %v2400 = vpop.permute.xlu0 %2399
        %2401 = vrot.lane.b32.xlu0 %v2383, 24
        %v2402 = vpop.permute.xlu0 %2401
        %2403 = vrot.lane.b32.xlu0 %v2384, 24
        %v2404 = vpop.permute.xlu0 %2403
        %2405 = vrot.lane.b32.xlu0 %v2385, 24
        %v2406 = vpop.permute.xlu0 %2405
        %2407 = vrot.lane.b32.xlu0 %v2386, 24
        %v2408 = vpop.permute.xlu0 %2407
        %2409 = vrot.lane.b32.xlu0 %v2387, 24
        %v2410 = vpop.permute.xlu0 %2409
        %2411 = vrot.lane.b32.xlu0 %v2388, 24
        %v2412 = vpop.permute.xlu0 %2411
        %2413 = vrot.lane.b32.xlu0 %v2389, 24
        %v2414 = vpop.permute.xlu0 %2413
        %2415 = vrot.lane.b32.xlu0 %v2390, 24
        %v2416 = vpop.permute.xlu0 %2415
        %2417 = vrot.lane.b32.xlu0 %v2391, 24
        %v2418 = vpop.permute.xlu0 %2417
        %2419 = vrot.lane.b32.xlu0 %v2392, 24
        %v2420 = vpop.permute.xlu0 %2419
        %2421 = vrot.lane.b32.xlu0 %v2393, 24
        %v2422 = vpop.permute.xlu0 %2421
        %2423 = vrot.lane.b32.xlu0 %v2394, 24
        %v2424 = vpop.permute.xlu0 %2423
        %2425 = vrot.lane.b32.xlu0 %v2395, 24
        %v2426 = vpop.permute.xlu0 %2425
        %2427 = vrot.lane.b32.xlu0 %v2396, 24
        %v2428 = vpop.permute.xlu0 %2427
        %vm2445 = vcmask 228544
        %2446 = vst.msk [vmem:[#allocation2] sm:$0xff] %vm2445, %v2398
        %2447 = vst.msk [vmem:[#allocation2 + $0x8] sm:$0xff] %vm2445, %v2400
        %2448 = vst.msk [vmem:[#allocation2 + $0x10] sm:$0xff] %vm2445, %v2402
        %2449 = vst.msk [vmem:[#allocation2 + $0x18] sm:$0xff] %vm2445, %v2404
        %2450 = vst.msk [vmem:[#allocation2 + $0x20] sm:$0xff] %vm2445, %v2406
        %2451 = vst.msk [vmem:[#allocation2 + $0x28] sm:$0xff] %vm2445, %v2408
        %2452 = vst.msk [vmem:[#allocation2 + $0x30] sm:$0xff] %vm2445, %v2410
        %2453 = vst.msk [vmem:[#allocation2 + $0x38] sm:$0xff] %vm2445, %v2412
        %2454 = vst.msk [vmem:[#allocation2 + $0x40] sm:$0xff] %vm2445, %v2414
        %2455 = vst.msk [vmem:[#allocation2 + $0x48] sm:$0xff] %vm2445, %v2416
        %2456 = vst.msk [vmem:[#allocation2 + $0x50] sm:$0xff] %vm2445, %v2418
        %2457 = vst.msk [vmem:[#allocation2 + $0x58] sm:$0xff] %vm2445, %v2420
        %2458 = vst.msk [vmem:[#allocation2 + $0x60] sm:$0xff] %vm2445, %v2422
        %2459 = vst.msk [vmem:[#allocation2 + $0x68] sm:$0xff] %vm2445, %v2424
        %2460 = vst.msk [vmem:[#allocation2 + $0x70] sm:$0xff] %vm2445, %v2426
        %2461 = vst.msk [vmem:[#allocation2 + $0x78] sm:$0xff] %vm2445, %v2428
        %v2462 = vld [vmem:[%s2284] sm:$0xf]
        %v2463 = vld [vmem:[%s2284 + $0x4] sm:$0xf]
        %v2464 = vld [vmem:[%s2284 + $0x8] sm:$0x1]
        %v2465 = vld [vmem:[%s2284 + $0xc] sm:$0xf]
        %v2466 = vld [vmem:[%s2284 + $0x10] sm:$0xf]
        %v2467 = vld [vmem:[%s2284 + $0x14] sm:$0x1]
        %v2468 = vld [vmem:[%s2284 + $0x18] sm:$0xf]
        %v2469 = vld [vmem:[%s2284 + $0x1c] sm:$0xf]
        %v2470 = vld [vmem:[%s2284 + $0x20] sm:$0x1]
        %v2471 = vld [vmem:[%s2284 + $0x24] sm:$0xf]
        %v2472 = vld [vmem:[%s2284 + $0x28] sm:$0xf]
        %v2473 = vld [vmem:[%s2284 + $0x2c] sm:$0x1]
        %v2474 = vld [vmem:[%s2284 + $0x30] sm:$0xf]
        %v2475 = vld [vmem:[%s2284 + $0x34] sm:$0xf]
        %v2476 = vld [vmem:[%s2284 + $0x38] sm:$0x1]
        %v2477 = vld [vmem:[%s2284 + $0x3c] sm:$0xf]
        %v2478 = vld [vmem:[%s2284 + $0x40] sm:$0xf]
        %v2479 = vld [vmem:[%s2284 + $0x44] sm:$0x1]
        %v2480 = vld [vmem:[%s2284 + $0x48] sm:$0xf]
        %v2481 = vld [vmem:[%s2284 + $0x4c] sm:$0xf]
        %v2482 = vld [vmem:[%s2284 + $0x50] sm:$0x1]
        %v2483 = vld [vmem:[%s2284 + $0x54] sm:$0xf]
        %v2484 = vld [vmem:[%s2284 + $0x58] sm:$0xf]
        %v2485 = vld [vmem:[%s2284 + $0x5c] sm:$0x1]
        %v2486 = vld [vmem:[%s2284 + $0x60] sm:$0xf]
        %v2487 = vld [vmem:[%s2284 + $0x64] sm:$0xf]
        %v2488 = vld [vmem:[%s2284 + $0x68] sm:$0x1]
        %v2489 = vld [vmem:[%s2284 + $0x6c] sm:$0xf]
        %v2490 = vld [vmem:[%s2284 + $0x70] sm:$0xf]
        %v2491 = vld [vmem:[%s2284 + $0x74] sm:$0x1]
        %v2492 = vld [vmem:[%s2284 + $0x78] sm:$0xf]
        %v2493 = vld [vmem:[%s2284 + $0x7c] sm:$0xf]
        %v2494 = vld [vmem:[%s2284 + $0x80] sm:$0x1]
        %v2495 = vld [vmem:[%s2284 + $0x84] sm:$0xf]
        %v2496 = vld [vmem:[%s2284 + $0x88] sm:$0xf]
        %v2497 = vld [vmem:[%s2284 + $0x8c] sm:$0x1]
        %v2498 = vld [vmem:[%s2284 + $0x90] sm:$0xf]
        %v2499 = vld [vmem:[%s2284 + $0x94] sm:$0xf]
        %v2500 = vld [vmem:[%s2284 + $0x98] sm:$0x1]
        %v2501 = vld [vmem:[%s2284 + $0x9c] sm:$0xf]
        %v2502 = vld [vmem:[%s2284 + $0xa0] sm:$0xf]
        %v2503 = vld [vmem:[%s2284 + $0xa4] sm:$0x1]
        %v2504 = vld [vmem:[%s2284 + $0xa8] sm:$0xf]
        %v2505 = vld [vmem:[%s2284 + $0xac] sm:$0xf]
        %v2506 = vld [vmem:[%s2284 + $0xb0] sm:$0x1]
        %v2507 = vld [vmem:[%s2284 + $0xb4] sm:$0xf]
        %v2508 = vld [vmem:[%s2284 + $0xb8] sm:$0xf]
        %v2509 = vld [vmem:[%s2284 + $0xbc] sm:$0x1]
        %v2511 = vshrl.u32 %v2462, 16
        %v2513 = vrot.slane %v2511, 4
        %v2514 = vshll.u32 %v2462, 16
        %v2516 = vrot.slane %v2514, 5
        %v2517 = vor.u32 %v2513, %v2516
        %v2518 = vrot.slane %v2517, 4
        %v2520 = vshll.u32 %v2463, 16
        %v2522 = vrot.slane %v2520, 5
        %v2523 = vsel %vm418, %v2518, %v2522
        %v2524 = vshrl.u32 %v2463, 16
        %v2526 = vrot.slane %v2524, 4
        %v2527 = vor.u32 %v2526, %v2522
        %v2528 = vrot.slane %v2527, 4
        %v2530 = vshll.u32 %v2464, 16
        %v2532 = vrot.slane %v2530, 5
        %v2533 = vsel %vm418, %v2528, %v2532
        %v2535 = vshrl.u32 %v2465, 16
        %v2537 = vrot.slane %v2535, 4
        %v2538 = vshll.u32 %v2465, 16
        %v2540 = vrot.slane %v2538, 5
        %v2541 = vor.u32 %v2537, %v2540
        %v2542 = vrot.slane %v2541, 4
        %v2544 = vshll.u32 %v2466, 16
        %v2546 = vrot.slane %v2544, 5
        %v2547 = vsel %vm418, %v2542, %v2546
        %v2548 = vshrl.u32 %v2466, 16
        %v2550 = vrot.slane %v2548, 4
        %v2551 = vor.u32 %v2550, %v2546
        %v2552 = vrot.slane %v2551, 4
        %v2554 = vshll.u32 %v2467, 16
        %v2556 = vrot.slane %v2554, 5
        %v2557 = vsel %vm418, %v2552, %v2556
        %v2559 = vshrl.u32 %v2468, 16
        %v2561 = vrot.slane %v2559, 4
        %v2562 = vshll.u32 %v2468, 16
        %v2564 = vrot.slane %v2562, 5
        %v2565 = vor.u32 %v2561, %v2564
        %v2566 = vrot.slane %v2565, 4
        %v2568 = vshll.u32 %v2469, 16
        %v2570 = vrot.slane %v2568, 5
        %v2571 = vsel %vm418, %v2566, %v2570
        %v2572 = vshrl.u32 %v2469, 16
        %v2574 = vrot.slane %v2572, 4
        %v2575 = vor.u32 %v2574, %v2570
        %v2576 = vrot.slane %v2575, 4
        %v2578 = vshll.u32 %v2470, 16
        %v2580 = vrot.slane %v2578, 5
        %v2581 = vsel %vm418, %v2576, %v2580
        %v2583 = vshrl.u32 %v2471, 16
        %v2585 = vrot.slane %v2583, 4
        %v2586 = vshll.u32 %v2471, 16
        %v2588 = vrot.slane %v2586, 5
        %v2589 = vor.u32 %v2585, %v2588
        %v2590 = vrot.slane %v2589, 4
        %v2592 = vshll.u32 %v2472, 16
        %v2594 = vrot.slane %v2592, 5
        %v2595 = vsel %vm418, %v2590, %v2594
        %v2596 = vshrl.u32 %v2472, 16
        %v2598 = vrot.slane %v2596, 4
        %v2599 = vor.u32 %v2598, %v2594
        %v2600 = vrot.slane %v2599, 4
        %v2602 = vshll.u32 %v2473, 16
        %v2604 = vrot.slane %v2602, 5
        %v2605 = vsel %vm418, %v2600, %v2604
        %v2607 = vshrl.u32 %v2474, 16
        %v2609 = vrot.slane %v2607, 4
        %v2610 = vshll.u32 %v2474, 16
        %v2612 = vrot.slane %v2610, 5
        %v2613 = vor.u32 %v2609, %v2612
        %v2614 = vrot.slane %v2613, 4
        %v2616 = vshll.u32 %v2475, 16
        %v2618 = vrot.slane %v2616, 5
        %v2619 = vsel %vm418, %v2614, %v2618
        %v2620 = vshrl.u32 %v2475, 16
        %v2622 = vrot.slane %v2620, 4
        %v2623 = vor.u32 %v2622, %v2618
        %v2624 = vrot.slane %v2623, 4
        %v2626 = vshll.u32 %v2476, 16
        %v2628 = vrot.slane %v2626, 5
        %v2629 = vsel %vm418, %v2624, %v2628
        %v2631 = vshrl.u32 %v2477, 16
        %v2633 = vrot.slane %v2631, 4
        %v2634 = vshll.u32 %v2477, 16
        %v2636 = vrot.slane %v2634, 5
        %v2637 = vor.u32 %v2633, %v2636
        %v2638 = vrot.slane %v2637, 4
        %v2640 = vshll.u32 %v2478, 16
        %v2642 = vrot.slane %v2640, 5
        %v2643 = vsel %vm418, %v2638, %v2642
        %v2644 = vshrl.u32 %v2478, 16
        %v2646 = vrot.slane %v2644, 4
        %v2647 = vor.u32 %v2646, %v2642
        %v2648 = vrot.slane %v2647, 4
        %v2650 = vshll.u32 %v2479, 16
        %v2652 = vrot.slane %v2650, 5
        %v2653 = vsel %vm418, %v2648, %v2652
        %v2655 = vshrl.u32 %v2480, 16
        %v2657 = vrot.slane %v2655, 4
        %v2658 = vshll.u32 %v2480, 16
        %v2660 = vrot.slane %v2658, 5
        %v2661 = vor.u32 %v2657, %v2660
        %v2662 = vrot.slane %v2661, 4
        %v2664 = vshll.u32 %v2481, 16
        %v2666 = vrot.slane %v2664, 5
        %v2667 = vsel %vm418, %v2662, %v2666
        %v2668 = vshrl.u32 %v2481, 16
        %v2670 = vrot.slane %v2668, 4
        %v2671 = vor.u32 %v2670, %v2666
        %v2672 = vrot.slane %v2671, 4
        %v2674 = vshll.u32 %v2482, 16
        %v2676 = vrot.slane %v2674, 5
        %v2677 = vsel %vm418, %v2672, %v2676
        %v2679 = vshrl.u32 %v2483, 16
        %v2681 = vrot.slane %v2679, 4
        %v2682 = vshll.u32 %v2483, 16
        %v2684 = vrot.slane %v2682, 5
        %v2685 = vor.u32 %v2681, %v2684
        %v2686 = vrot.slane %v2685, 4
        %v2688 = vshll.u32 %v2484, 16
        %v2690 = vrot.slane %v2688, 5
        %v2691 = vsel %vm418, %v2686, %v2690
        %v2692 = vshrl.u32 %v2484, 16
        %v2694 = vrot.slane %v2692, 4
        %v2695 = vor.u32 %v2694, %v2690
        %v2696 = vrot.slane %v2695, 4
        %v2698 = vshll.u32 %v2485, 16
        %v2700 = vrot.slane %v2698, 5
        %v2701 = vsel %vm418, %v2696, %v2700
        %v2703 = vshrl.u32 %v2486, 16
        %v2705 = vrot.slane %v2703, 4
        %v2706 = vshll.u32 %v2486, 16
        %v2708 = vrot.slane %v2706, 5
        %v2709 = vor.u32 %v2705, %v2708
        %v2710 = vrot.slane %v2709, 4
        %v2712 = vshll.u32 %v2487, 16
        %v2714 = vrot.slane %v2712, 5
        %v2715 = vsel %vm418, %v2710, %v2714
        %v2716 = vshrl.u32 %v2487, 16
        %v2718 = vrot.slane %v2716, 4
        %v2719 = vor.u32 %v2718, %v2714
        %v2720 = vrot.slane %v2719, 4
        %v2722 = vshll.u32 %v2488, 16
        %v2724 = vrot.slane %v2722, 5
        %v2725 = vsel %vm418, %v2720, %v2724
        %v2727 = vshrl.u32 %v2489, 16
        %v2729 = vrot.slane %v2727, 4
        %v2730 = vshll.u32 %v2489, 16
        %v2732 = vrot.slane %v2730, 5
        %v2733 = vor.u32 %v2729, %v2732
        %v2734 = vrot.slane %v2733, 4
        %v2736 = vshll.u32 %v2490, 16
        %v2738 = vrot.slane %v2736, 5
        %v2739 = vsel %vm418, %v2734, %v2738
        %v2740 = vshrl.u32 %v2490, 16
        %v2742 = vrot.slane %v2740, 4
        %v2743 = vor.u32 %v2742, %v2738
        %v2744 = vrot.slane %v2743, 4
        %v2746 = vshll.u32 %v2491, 16
        %v2748 = vrot.slane %v2746, 5
        %v2749 = vsel %vm418, %v2744, %v2748
        %v2751 = vshrl.u32 %v2492, 16
        %v2753 = vrot.slane %v2751, 4
        %v2754 = vshll.u32 %v2492, 16
        %v2756 = vrot.slane %v2754, 5
        %v2757 = vor.u32 %v2753, %v2756
        %v2758 = vrot.slane %v2757, 4
        %v2760 = vshll.u32 %v2493, 16
        %v2762 = vrot.slane %v2760, 5
        %v2763 = vsel %vm418, %v2758, %v2762
        %v2764 = vshrl.u32 %v2493, 16
        %v2766 = vrot.slane %v2764, 4
        %v2767 = vor.u32 %v2766, %v2762
        %v2768 = vrot.slane %v2767, 4
        %v2770 = vshll.u32 %v2494, 16
        %v2772 = vrot.slane %v2770, 5
        %v2773 = vsel %vm418, %v2768, %v2772
        %v2775 = vshrl.u32 %v2495, 16
        %v2777 = vrot.slane %v2775, 4
        %v2778 = vshll.u32 %v2495, 16
        %v2780 = vrot.slane %v2778, 5
        %v2781 = vor.u32 %v2777, %v2780
        %v2782 = vrot.slane %v2781, 4
        %v2784 = vshll.u32 %v2496, 16
        %v2786 = vrot.slane %v2784, 5
        %v2787 = vsel %vm418, %v2782, %v2786
        %v2788 = vshrl.u32 %v2496, 16
        %v2790 = vrot.slane %v2788, 4
        %v2791 = vor.u32 %v2790, %v2786
        %v2792 = vrot.slane %v2791, 4
        %v2794 = vshll.u32 %v2497, 16
        %v2796 = vrot.slane %v2794, 5
        %v2797 = vsel %vm418, %v2792, %v2796
        %v2799 = vshrl.u32 %v2498, 16
        %v2801 = vrot.slane %v2799, 4
        %v2802 = vshll.u32 %v2498, 16
        %v2804 = vrot.slane %v2802, 5
        %v2805 = vor.u32 %v2801, %v2804
        %v2806 = vrot.slane %v2805, 4
        %v2808 = vshll.u32 %v2499, 16
        %v2810 = vrot.slane %v2808, 5
        %v2811 = vsel %vm418, %v2806, %v2810
        %v2812 = vshrl.u32 %v2499, 16
        %v2814 = vrot.slane %v2812, 4
        %v2815 = vor.u32 %v2814, %v2810
        %v2816 = vrot.slane %v2815, 4
        %v2818 = vshll.u32 %v2500, 16
        %v2820 = vrot.slane %v2818, 5
        %v2821 = vsel %vm418, %v2816, %v2820
        %v2823 = vshrl.u32 %v2501, 16
        %v2825 = vrot.slane %v2823, 4
        %v2826 = vshll.u32 %v2501, 16
        %v2828 = vrot.slane %v2826, 5
        %v2829 = vor.u32 %v2825, %v2828
        %v2830 = vrot.slane %v2829, 4
        %v2832 = vshll.u32 %v2502, 16
        %v2834 = vrot.slane %v2832, 5
        %v2835 = vsel %vm418, %v2830, %v2834
        %v2836 = vshrl.u32 %v2502, 16
        %v2838 = vrot.slane %v2836, 4
        %v2839 = vor.u32 %v2838, %v2834
        %v2840 = vrot.slane %v2839, 4
        %v2842 = vshll.u32 %v2503, 16
        %v2844 = vrot.slane %v2842, 5
        %v2845 = vsel %vm418, %v2840, %v2844
        %v2847 = vshrl.u32 %v2504, 16
        %v2849 = vrot.slane %v2847, 4
        %v2850 = vshll.u32 %v2504, 16
        %v2852 = vrot.slane %v2850, 5
        %v2853 = vor.u32 %v2849, %v2852
        %v2854 = vrot.slane %v2853, 4
        %v2856 = vshll.u32 %v2505, 16
        %v2858 = vrot.slane %v2856, 5
        %v2859 = vsel %vm418, %v2854, %v2858
        %v2860 = vshrl.u32 %v2505, 16
        %v2862 = vrot.slane %v2860, 4
        %v2863 = vor.u32 %v2862, %v2858
        %v2864 = vrot.slane %v2863, 4
        %v2866 = vshll.u32 %v2506, 16
        %v2868 = vrot.slane %v2866, 5
        %v2869 = vsel %vm418, %v2864, %v2868
        %v2871 = vshrl.u32 %v2507, 16
        %v2873 = vrot.slane %v2871, 4
        %v2874 = vshll.u32 %v2507, 16
        %v2876 = vrot.slane %v2874, 5
        %v2877 = vor.u32 %v2873, %v2876
        %v2878 = vrot.slane %v2877, 4
        %v2880 = vshll.u32 %v2508, 16
        %v2882 = vrot.slane %v2880, 5
        %v2883 = vsel %vm418, %v2878, %v2882
        %v2884 = vshrl.u32 %v2508, 16
        %v2886 = vrot.slane %v2884, 4
        %v2887 = vor.u32 %v2886, %v2882
        %v2888 = vrot.slane %v2887, 4
        %v2890 = vshll.u32 %v2509, 16
        %v2892 = vrot.slane %v2890, 5
        %v2893 = vsel %vm418, %v2888, %v2892
        %v2894 = vunpack.c.l.b16 %v2523
        %v2895 = vunpack.c.l.b16 %v2533
        %v2896 = vunpack.c.l.b16 %v2547
        %v2897 = vunpack.c.l.b16 %v2557
        %v2898 = vunpack.c.l.b16 %v2571
        %v2899 = vunpack.c.l.b16 %v2581
        %v2900 = vunpack.c.l.b16 %v2595
        %v2901 = vunpack.c.l.b16 %v2605
        %v2902 = vunpack.c.l.b16 %v2619
        %v2903 = vunpack.c.l.b16 %v2629
        %v2904 = vunpack.c.l.b16 %v2643
        %v2905 = vunpack.c.l.b16 %v2653
        %v2906 = vunpack.c.l.b16 %v2667
        %v2907 = vunpack.c.l.b16 %v2677
        %v2908 = vunpack.c.l.b16 %v2691
        %v2909 = vunpack.c.l.b16 %v2701
        %v2910 = vunpack.c.l.b16 %v2715
        %v2911 = vunpack.c.l.b16 %v2725
        %v2912 = vunpack.c.l.b16 %v2739
        %v2913 = vunpack.c.l.b16 %v2749
        %v2914 = vunpack.c.l.b16 %v2763
        %v2915 = vunpack.c.l.b16 %v2773
        %v2916 = vunpack.c.l.b16 %v2787
        %v2917 = vunpack.c.l.b16 %v2797
        %v2918 = vunpack.c.l.b16 %v2811
        %v2919 = vunpack.c.l.b16 %v2821
        %v2920 = vunpack.c.l.b16 %v2835
        %v2921 = vunpack.c.l.b16 %v2845
        %v2922 = vunpack.c.l.b16 %v2859
        %v2923 = vunpack.c.l.b16 %v2869
        %v2924 = vunpack.c.l.b16 %v2883
        %v2925 = vunpack.c.l.b16 %v2893
        %v2926 = vpack.c.b16 %v2895, %v2894
        %v2927 = vpack.c.b16 %v2897, %v2896
        %v2928 = vpack.c.b16 %v2899, %v2898
        %v2929 = vpack.c.b16 %v2901, %v2900
        %v2930 = vpack.c.b16 %v2903, %v2902
        %v2931 = vpack.c.b16 %v2905, %v2904
        %v2932 = vpack.c.b16 %v2907, %v2906
        %v2933 = vpack.c.b16 %v2909, %v2908
        %v2934 = vpack.c.b16 %v2911, %v2910
        %v2935 = vpack.c.b16 %v2913, %v2912
        %v2936 = vpack.c.b16 %v2915, %v2914
        %v2937 = vpack.c.b16 %v2917, %v2916
        %v2938 = vpack.c.b16 %v2919, %v2918
        %v2939 = vpack.c.b16 %v2921, %v2920
        %v2940 = vpack.c.b16 %v2923, %v2922
        %v2941 = vpack.c.b16 %v2925, %v2924
        %2942 = vrot.lane.b32.xlu0 %v2926, 28
        %v2943 = vpop.permute.xlu0 %2942
        %2944 = vrot.lane.b32.xlu0 %v2927, 28
        %v2945 = vpop.permute.xlu0 %2944
        %2946 = vrot.lane.b32.xlu0 %v2928, 28
        %v2947 = vpop.permute.xlu0 %2946
        %2948 = vrot.lane.b32.xlu0 %v2929, 28
        %v2949 = vpop.permute.xlu0 %2948
        %2950 = vrot.lane.b32.xlu0 %v2930, 28
        %v2951 = vpop.permute.xlu0 %2950
        %2952 = vrot.lane.b32.xlu0 %v2931, 28
        %v2953 = vpop.permute.xlu0 %2952
        %2954 = vrot.lane.b32.xlu0 %v2932, 28
        %v2955 = vpop.permute.xlu0 %2954
        %2956 = vrot.lane.b32.xlu0 %v2933, 28
        %v2957 = vpop.permute.xlu0 %2956
        %2958 = vrot.lane.b32.xlu0 %v2934, 28
        %v2959 = vpop.permute.xlu0 %2958
        %2960 = vrot.lane.b32.xlu0 %v2935, 28
        %v2961 = vpop.permute.xlu0 %2960
        %2962 = vrot.lane.b32.xlu0 %v2936, 28
        %v2963 = vpop.permute.xlu0 %2962
        %2964 = vrot.lane.b32.xlu0 %v2937, 28
        %v2965 = vpop.permute.xlu0 %2964
        %2966 = vrot.lane.b32.xlu0 %v2938, 28
        %v2967 = vpop.permute.xlu0 %2966
        %2968 = vrot.lane.b32.xlu0 %v2939, 28
        %v2969 = vpop.permute.xlu0 %2968
        %2970 = vrot.lane.b32.xlu0 %v2940, 28
        %v2971 = vpop.permute.xlu0 %2970
        %2972 = vrot.lane.b32.xlu0 %v2941, 28
        %v2973 = vpop.permute.xlu0 %2972
        %vm2990 = vcmask 261344
        %2991 = vst.msk [vmem:[#allocation2] sm:$0xff] %vm2990, %v2943
        %2992 = vst.msk [vmem:[#allocation2 + $0x8] sm:$0xff] %vm2990, %v2945
        %2993 = vst.msk [vmem:[#allocation2 + $0x10] sm:$0xff] %vm2990, %v2947
        %2994 = vst.msk [vmem:[#allocation2 + $0x18] sm:$0xff] %vm2990, %v2949
        %2995 = vst.msk [vmem:[#allocation2 + $0x20] sm:$0xff] %vm2990, %v2951
        %2996 = vst.msk [vmem:[#allocation2 + $0x28] sm:$0xff] %vm2990, %v2953
        %2997 = vst.msk [vmem:[#allocation2 + $0x30] sm:$0xff] %vm2990, %v2955
        %2998 = vst.msk [vmem:[#allocation2 + $0x38] sm:$0xff] %vm2990, %v2957
        %2999 = vst.msk [vmem:[#allocation2 + $0x40] sm:$0xff] %vm2990, %v2959
        %3000 = vst.msk [vmem:[#allocation2 + $0x48] sm:$0xff] %vm2990, %v2961
        %3001 = vst.msk [vmem:[#allocation2 + $0x50] sm:$0xff] %vm2990, %v2963
        %3002 = vst.msk [vmem:[#allocation2 + $0x58] sm:$0xff] %vm2990, %v2965
        %3003 = vst.msk [vmem:[#allocation2 + $0x60] sm:$0xff] %vm2990, %v2967
        %3004 = vst.msk [vmem:[#allocation2 + $0x68] sm:$0xff] %vm2990, %v2969
        %3005 = vst.msk [vmem:[#allocation2 + $0x70] sm:$0xff] %vm2990, %v2971
        %3006 = vst.msk [vmem:[#allocation2 + $0x78] sm:$0xff] %vm2990, %v2973
        %v3007 = vld [vmem:[%s2284] sm:$0xe]
        %v3008 = vld [vmem:[%s2284 + $0x4] sm:$0xf]
        %v3009 = vld [vmem:[%s2284 + $0x8] sm:$0x1]
        %v3010 = vld [vmem:[%s2284 + $0xc] sm:$0xe]
        %v3011 = vld [vmem:[%s2284 + $0x10] sm:$0xf]
        %v3012 = vld [vmem:[%s2284 + $0x14] sm:$0x1]
        %v3013 = vld [vmem:[%s2284 + $0x18] sm:$0xe]
        %v3014 = vld [vmem:[%s2284 + $0x1c] sm:$0xf]
        %v3015 = vld [vmem:[%s2284 + $0x20] sm:$0x1]
        %v3016 = vld [vmem:[%s2284 + $0x24] sm:$0xe]
        %v3017 = vld [vmem:[%s2284 + $0x28] sm:$0xf]
        %v3018 = vld [vmem:[%s2284 + $0x2c] sm:$0x1]
        %v3019 = vld [vmem:[%s2284 + $0x30] sm:$0xe]
        %v3020 = vld [vmem:[%s2284 + $0x34] sm:$0xf]
        %v3021 = vld [vmem:[%s2284 + $0x38] sm:$0x1]
        %v3022 = vld [vmem:[%s2284 + $0x3c] sm:$0xe]
        %v3023 = vld [vmem:[%s2284 + $0x40] sm:$0xf]
        %v3024 = vld [vmem:[%s2284 + $0x44] sm:$0x1]
        %v3025 = vld [vmem:[%s2284 + $0x48] sm:$0xe]
        %v3026 = vld [vmem:[%s2284 + $0x4c] sm:$0xf]
        %v3027 = vld [vmem:[%s2284 + $0x50] sm:$0x1]
        %v3028 = vld [vmem:[%s2284 + $0x54] sm:$0xe]
        %v3029 = vld [vmem:[%s2284 + $0x58] sm:$0xf]
        %v3030 = vld [vmem:[%s2284 + $0x5c] sm:$0x1]
        %v3031 = vld [vmem:[%s2284 + $0x60] sm:$0xe]
        %v3032 = vld [vmem:[%s2284 + $0x64] sm:$0xf]
        %v3033 = vld [vmem:[%s2284 + $0x68] sm:$0x1]
        %v3034 = vld [vmem:[%s2284 + $0x6c] sm:$0xe]
        %v3035 = vld [vmem:[%s2284 + $0x70] sm:$0xf]
        %v3036 = vld [vmem:[%s2284 + $0x74] sm:$0x1]
        %v3037 = vld [vmem:[%s2284 + $0x78] sm:$0xe]
        %v3038 = vld [vmem:[%s2284 + $0x7c] sm:$0xf]
        %v3039 = vld [vmem:[%s2284 + $0x80] sm:$0x1]
        %v3040 = vld [vmem:[%s2284 + $0x84] sm:$0xe]
        %v3041 = vld [vmem:[%s2284 + $0x88] sm:$0xf]
        %v3042 = vld [vmem:[%s2284 + $0x8c] sm:$0x1]
        %v3043 = vld [vmem:[%s2284 + $0x90] sm:$0xe]
        %v3044 = vld [vmem:[%s2284 + $0x94] sm:$0xf]
        %v3045 = vld [vmem:[%s2284 + $0x98] sm:$0x1]
        %v3046 = vld [vmem:[%s2284 + $0x9c] sm:$0xe]
        %v3047 = vld [vmem:[%s2284 + $0xa0] sm:$0xf]
        %v3048 = vld [vmem:[%s2284 + $0xa4] sm:$0x1]
        %v3049 = vld [vmem:[%s2284 + $0xa8] sm:$0xe]
        %v3050 = vld [vmem:[%s2284 + $0xac] sm:$0xf]
        %v3051 = vld [vmem:[%s2284 + $0xb0] sm:$0x1]
        %v3052 = vld [vmem:[%s2284 + $0xb4] sm:$0xe]
        %v3053 = vld [vmem:[%s2284 + $0xb8] sm:$0xf]
        %v3054 = vld [vmem:[%s2284 + $0xbc] sm:$0x1]
        %v3103 = vrot.slane %v3007, 5
        %v3104 = vrot.slane %v3103, 4
        %v3105 = vrot.slane %v3008, 5
        %v3106 = vsel %vm1014, %v3104, %v3105
        %v3107 = vrot.slane %v3105, 4
        %v3108 = vrot.slane %v3009, 5
        %v3109 = vsel %vm1014, %v3107, %v3108
        %v3110 = vrot.slane %v3010, 5
        %v3111 = vrot.slane %v3110, 4
        %v3112 = vrot.slane %v3011, 5
        %v3113 = vsel %vm1014, %v3111, %v3112
        %v3114 = vrot.slane %v3112, 4
        %v3115 = vrot.slane %v3012, 5
        %v3116 = vsel %vm1014, %v3114, %v3115
        %v3117 = vrot.slane %v3013, 5
        %v3118 = vrot.slane %v3117, 4
        %v3119 = vrot.slane %v3014, 5
        %v3120 = vsel %vm1014, %v3118, %v3119
        %v3121 = vrot.slane %v3119, 4
        %v3122 = vrot.slane %v3015, 5
        %v3123 = vsel %vm1014, %v3121, %v3122
        %v3124 = vrot.slane %v3016, 5
        %v3125 = vrot.slane %v3124, 4
        %v3126 = vrot.slane %v3017, 5
        %v3127 = vsel %vm1014, %v3125, %v3126
        %v3128 = vrot.slane %v3126, 4
        %v3129 = vrot.slane %v3018, 5
        %v3130 = vsel %vm1014, %v3128, %v3129
        %v3131 = vrot.slane %v3019, 5
        %v3132 = vrot.slane %v3131, 4
        %v3133 = vrot.slane %v3020, 5
        %v3134 = vsel %vm1014, %v3132, %v3133
        %v3135 = vrot.slane %v3133, 4
        %v3136 = vrot.slane %v3021, 5
        %v3137 = vsel %vm1014, %v3135, %v3136
        %v3138 = vrot.slane %v3022, 5
        %v3139 = vrot.slane %v3138, 4
        %v3140 = vrot.slane %v3023, 5
        %v3141 = vsel %vm1014, %v3139, %v3140
        %v3142 = vrot.slane %v3140, 4
        %v3143 = vrot.slane %v3024, 5
        %v3144 = vsel %vm1014, %v3142, %v3143
        %v3145 = vrot.slane %v3025, 5
        %v3146 = vrot.slane %v3145, 4
        %v3147 = vrot.slane %v3026, 5
        %v3148 = vsel %vm1014, %v3146, %v3147
        %v3149 = vrot.slane %v3147, 4
        %v3150 = vrot.slane %v3027, 5
        %v3151 = vsel %vm1014, %v3149, %v3150
        %v3152 = vrot.slane %v3028, 5
        %v3153 = vrot.slane %v3152, 4
        %v3154 = vrot.slane %v3029, 5
        %v3155 = vsel %vm1014, %v3153, %v3154
        %v3156 = vrot.slane %v3154, 4
        %v3157 = vrot.slane %v3030, 5
        %v3158 = vsel %vm1014, %v3156, %v3157
        %v3159 = vrot.slane %v3031, 5
        %v3160 = vrot.slane %v3159, 4
        %v3161 = vrot.slane %v3032, 5
        %v3162 = vsel %vm1014, %v3160, %v3161
        %v3163 = vrot.slane %v3161, 4
        %v3164 = vrot.slane %v3033, 5
        %v3165 = vsel %vm1014, %v3163, %v3164
        %v3166 = vrot.slane %v3034, 5
        %v3167 = vrot.slane %v3166, 4
        %v3168 = vrot.slane %v3035, 5
        %v3169 = vsel %vm1014, %v3167, %v3168
        %v3170 = vrot.slane %v3168, 4
        %v3171 = vrot.slane %v3036, 5
        %v3172 = vsel %vm1014, %v3170, %v3171
        %v3173 = vrot.slane %v3037, 5
        %v3174 = vrot.slane %v3173, 4
        %v3175 = vrot.slane %v3038, 5
        %v3176 = vsel %vm1014, %v3174, %v3175
        %v3177 = vrot.slane %v3175, 4
        %v3178 = vrot.slane %v3039, 5
        %v3179 = vsel %vm1014, %v3177, %v3178
        %v3180 = vrot.slane %v3040, 5
        %v3181 = vrot.slane %v3180, 4
        %v3182 = vrot.slane %v3041, 5
        %v3183 = vsel %vm1014, %v3181, %v3182
        %v3184 = vrot.slane %v3182, 4
        %v3185 = vrot.slane %v3042, 5
        %v3186 = vsel %vm1014, %v3184, %v3185
        %v3187 = vrot.slane %v3043, 5
        %v3188 = vrot.slane %v3187, 4
        %v3189 = vrot.slane %v3044, 5
        %v3190 = vsel %vm1014, %v3188, %v3189
        %v3191 = vrot.slane %v3189, 4
        %v3192 = vrot.slane %v3045, 5
        %v3193 = vsel %vm1014, %v3191, %v3192
        %v3194 = vrot.slane %v3046, 5
        %v3195 = vrot.slane %v3194, 4
        %v3196 = vrot.slane %v3047, 5
        %v3197 = vsel %vm1014, %v3195, %v3196
        %v3198 = vrot.slane %v3196, 4
        %v3199 = vrot.slane %v3048, 5
        %v3200 = vsel %vm1014, %v3198, %v3199
        %v3201 = vrot.slane %v3049, 5
        %v3202 = vrot.slane %v3201, 4
        %v3203 = vrot.slane %v3050, 5
        %v3204 = vsel %vm1014, %v3202, %v3203
        %v3205 = vrot.slane %v3203, 4
        %v3206 = vrot.slane %v3051, 5
        %v3207 = vsel %vm1014, %v3205, %v3206
        %v3208 = vrot.slane %v3052, 5
        %v3209 = vrot.slane %v3208, 4
        %v3210 = vrot.slane %v3053, 5
        %v3211 = vsel %vm1014, %v3209, %v3210
        %v3212 = vrot.slane %v3210, 4
        %v3213 = vrot.slane %v3054, 5
        %v3214 = vsel %vm1014, %v3212, %v3213
        %v3215 = vunpack.c.l.b16 %v3106
        %v3216 = vunpack.c.l.b16 %v3109
        %v3217 = vunpack.c.l.b16 %v3113
        %v3218 = vunpack.c.l.b16 %v3116
        %v3219 = vunpack.c.l.b16 %v3120
        %v3220 = vunpack.c.l.b16 %v3123
        %v3221 = vunpack.c.l.b16 %v3127
        %v3222 = vunpack.c.l.b16 %v3130
        %v3223 = vunpack.c.l.b16 %v3134
        %v3224 = vunpack.c.l.b16 %v3137
        %v3225 = vunpack.c.l.b16 %v3141
        %v3226 = vunpack.c.l.b16 %v3144
        %v3227 = vunpack.c.l.b16 %v3148
        %v3228 = vunpack.c.l.b16 %v3151
        %v3229 = vunpack.c.l.b16 %v3155
        %v3230 = vunpack.c.l.b16 %v3158
        %v3231 = vunpack.c.l.b16 %v3162
        %v3232 = vunpack.c.l.b16 %v3165
        %v3233 = vunpack.c.l.b16 %v3169
        %v3234 = vunpack.c.l.b16 %v3172
        %v3235 = vunpack.c.l.b16 %v3176
        %v3236 = vunpack.c.l.b16 %v3179
        %v3237 = vunpack.c.l.b16 %v3183
        %v3238 = vunpack.c.l.b16 %v3186
        %v3239 = vunpack.c.l.b16 %v3190
        %v3240 = vunpack.c.l.b16 %v3193
        %v3241 = vunpack.c.l.b16 %v3197
        %v3242 = vunpack.c.l.b16 %v3200
        %v3243 = vunpack.c.l.b16 %v3204
        %v3244 = vunpack.c.l.b16 %v3207
        %v3245 = vunpack.c.l.b16 %v3211
        %v3246 = vunpack.c.l.b16 %v3214
        %v3247 = vpack.c.b16 %v3216, %v3215
        %v3248 = vpack.c.b16 %v3218, %v3217
        %v3249 = vpack.c.b16 %v3220, %v3219
        %v3250 = vpack.c.b16 %v3222, %v3221
        %v3251 = vpack.c.b16 %v3224, %v3223
        %v3252 = vpack.c.b16 %v3226, %v3225
        %v3253 = vpack.c.b16 %v3228, %v3227
        %v3254 = vpack.c.b16 %v3230, %v3229
        %v3255 = vpack.c.b16 %v3232, %v3231
        %v3256 = vpack.c.b16 %v3234, %v3233
        %v3257 = vpack.c.b16 %v3236, %v3235
        %v3258 = vpack.c.b16 %v3238, %v3237
        %v3259 = vpack.c.b16 %v3240, %v3239
        %v3260 = vpack.c.b16 %v3242, %v3241
        %v3261 = vpack.c.b16 %v3244, %v3243
        %v3262 = vpack.c.b16 %v3246, %v3245
        %3263 = vrot.lane.b32.xlu0 %v3247, 32
        %v3264 = vpop.permute.xlu0 %3263
        %3265 = vrot.lane.b32.xlu0 %v3248, 32
        %v3266 = vpop.permute.xlu0 %3265
        %3267 = vrot.lane.b32.xlu0 %v3249, 32
        %v3268 = vpop.permute.xlu0 %3267
        %3269 = vrot.lane.b32.xlu0 %v3250, 32
        %v3270 = vpop.permute.xlu0 %3269
        %3271 = vrot.lane.b32.xlu0 %v3251, 32
        %v3272 = vpop.permute.xlu0 %3271
        %3273 = vrot.lane.b32.xlu0 %v3252, 32
        %v3274 = vpop.permute.xlu0 %3273
        %3275 = vrot.lane.b32.xlu0 %v3253, 32
        %v3276 = vpop.permute.xlu0 %3275
        %3277 = vrot.lane.b32.xlu0 %v3254, 32
        %v3278 = vpop.permute.xlu0 %3277
        %3279 = vrot.lane.b32.xlu0 %v3255, 32
        %v3280 = vpop.permute.xlu0 %3279
        %3281 = vrot.lane.b32.xlu0 %v3256, 32
        %v3282 = vpop.permute.xlu0 %3281
        %3283 = vrot.lane.b32.xlu0 %v3257, 32
        %v3284 = vpop.permute.xlu0 %3283
        %3285 = vrot.lane.b32.xlu0 %v3258, 32
        %v3286 = vpop.permute.xlu0 %3285
        %3287 = vrot.lane.b32.xlu0 %v3259, 32
        %v3288 = vpop.permute.xlu0 %3287
        %3289 = vrot.lane.b32.xlu0 %v3260, 32
        %v3290 = vpop.permute.xlu0 %3289
        %3291 = vrot.lane.b32.xlu0 %v3261, 32
        %v3292 = vpop.permute.xlu0 %3291
        %3293 = vrot.lane.b32.xlu0 %v3262, 32
        %v3294 = vpop.permute.xlu0 %3293
        %vm3311 = vcmask 294144
        %3312 = vst.msk [vmem:[#allocation2] sm:$0xff] %vm3311, %v3264
        %3313 = vst.msk [vmem:[#allocation2 + $0x8] sm:$0xff] %vm3311, %v3266
        %3314 = vst.msk [vmem:[#allocation2 + $0x10] sm:$0xff] %vm3311, %v3268
        %3315 = vst.msk [vmem:[#allocation2 + $0x18] sm:$0xff] %vm3311, %v3270
        %3316 = vst.msk [vmem:[#allocation2 + $0x20] sm:$0xff] %vm3311, %v3272
        %3317 = vst.msk [vmem:[#allocation2 + $0x28] sm:$0xff] %vm3311, %v3274
        %3318 = vst.msk [vmem:[#allocation2 + $0x30] sm:$0xff] %vm3311, %v3276
        %3319 = vst.msk [vmem:[#allocation2 + $0x38] sm:$0xff] %vm3311, %v3278
        %3320 = vst.msk [vmem:[#allocation2 + $0x40] sm:$0xff] %vm3311, %v3280
        %3321 = vst.msk [vmem:[#allocation2 + $0x48] sm:$0xff] %vm3311, %v3282
        %3322 = vst.msk [vmem:[#allocation2 + $0x50] sm:$0xff] %vm3311, %v3284
        %3323 = vst.msk [vmem:[#allocation2 + $0x58] sm:$0xff] %vm3311, %v3286
        %3324 = vst.msk [vmem:[#allocation2 + $0x60] sm:$0xff] %vm3311, %v3288
        %3325 = vst.msk [vmem:[#allocation2 + $0x68] sm:$0xff] %vm3311, %v3290
        %3326 = vst.msk [vmem:[#allocation2 + $0x70] sm:$0xff] %vm3311, %v3292
        %3327 = vst.msk [vmem:[#allocation2 + $0x78] sm:$0xff] %vm3311, %v3294
        %v3328 = vld [vmem:[#allocation2] sm:$0xff]
        %v3329 = vld [vmem:[#allocation2 + $0x8] sm:$0xff]
        %v3330 = vld [vmem:[#allocation2 + $0x10] sm:$0xff]
        %v3331 = vld [vmem:[#allocation2 + $0x18] sm:$0xff]
        %v3332 = vld [vmem:[#allocation2 + $0x20] sm:$0xff]
        %v3333 = vld [vmem:[#allocation2 + $0x28] sm:$0xff]
        %v3334 = vld [vmem:[#allocation2 + $0x30] sm:$0xff]
        %v3335 = vld [vmem:[#allocation2 + $0x38] sm:$0xff]
        %v3336 = vld [vmem:[#allocation2 + $0x40] sm:$0xff]
        %v3337 = vld [vmem:[#allocation2 + $0x48] sm:$0xff]
        %v3338 = vld [vmem:[#allocation2 + $0x50] sm:$0xff]
        %v3339 = vld [vmem:[#allocation2 + $0x58] sm:$0xff]
        %v3340 = vld [vmem:[#allocation2 + $0x60] sm:$0xff]
        %v3341 = vld [vmem:[#allocation2 + $0x68] sm:$0xff]
        %v3342 = vld [vmem:[#allocation2 + $0x70] sm:$0xff]
        %v3343 = vld [vmem:[#allocation2 + $0x78] sm:$0xff]
        %v3344 = vld [vmem:[%s1] sm:$0xf]
        %v3345 = vld [vmem:[%s1 + $0x4] sm:$0xf]
        %v3346 = vld [vmem:[%s1 + $0x8] sm:$0xf]
        %v3347 = vld [vmem:[%s1 + $0xc] sm:$0xf]
        %v3348 = vld [vmem:[%s1 + $0x10] sm:$0x3]
        %v3349 = vld [vmem:[%s2] sm:$0x1]
        %v3351 = vlaneseq
        %v3352 = vshrl.u32 %v3351, 7
        %v3353 = vsub.s32 0, %v3352
        %v3354 = vrot.slane %v3349, %v3353
        %v3361 = vunpack.c.l.b16 %v3344
        %v3362 = vunpack.c.l.b16 %v3345
        %v3363 = vunpack.c.l.b16 %v3346
        %v3364 = vunpack.c.l.b16 %v3347
        %v3365 = vunpack.c.l.b16 %v3348
        %v3366 = vpack.c.b16 %v3362, %v3361
        %v3367 = vpack.c.b16 %v3364, %v3363
        %v3368 = vpack.c.b16 %v3365, %v3365
        %vm3371 = vcmask 293888
        %v3373 = vsel %vm3371, %v3328, 0
        %v3376 = vsel %vm3371, %v3329, 0
        %v3379 = vsel %vm3371, %v3330, 0
        %v3382 = vsel %vm3371, %v3331, 0
        %v3385 = vsel %vm3371, %v3332, 0
        %v3388 = vsel %vm3371, %v3333, 0
        %v3391 = vsel %vm3371, %v3334, 0
        %v3394 = vsel %vm3371, %v3335, 0
        %v3397 = vsel %vm3371, %v3336, 0
        %v3400 = vsel %vm3371, %v3337, 0
        %v3403 = vsel %vm3371, %v3338, 0
        %v3406 = vsel %vm3371, %v3339, 0
        %v3409 = vsel %vm3371, %v3340, 0
        %v3412 = vsel %vm3371, %v3341, 0
        %v3415 = vsel %vm3371, %v3342, 0
        %v3418 = vsel %vm3371, %v3343, 0
        %vm3420 = vcmask 1041408
        %v3422 = vsel %vm3420, %v3368, 0
        %3424 = vmatprep.subr.bf16.mxu0 0
        %3425 = vmatpush1.bf16.msra.mxu0 %v3366
        %3426 = vmatprep.subr.bf16.mxu0 0
        %3427 = vmatpush1.bf16.msra.mxu0 %v3367
        %3428 = vmatprep.subr.bf16.mxu0 0
        %3429 = vmatpush1.bf16.msra.mxu0 %v3422
        %3430 = vmatprep.subr.bf16.mxu0 0
        %3431 = vmatpush1.bf16.msra.mxu0 0
        %3432 = vmatprep.subr.bf16.mxu0 0
        %3433 = vmatpush1.bf16.msra.mxu0 0
        %3434 = vmatprep.subr.bf16.mxu0 0
        %3435 = vmatpush1.bf16.msra.mxu0 0
        %3436 = vmatprep.subr.bf16.mxu0 0
        %3437 = vmatpush1.bf16.msra.mxu0 0
        %3438 = vmatprep.subr.bf16.mxu0 0
        %3439 = vmatpush1.bf16.msra.mxu0 0
        %3440 = vmatprep.subr.bf16.mxu0 0
        %3441 = vmatpush1.bf16.msra.mxu0 0
        %3442 = vmatprep.subr.bf16.mxu0 0
        %3443 = vmatpush1.bf16.msra.mxu0 0
        %3444 = vmatprep.subr.bf16.mxu0 0
        %3445 = vmatpush1.bf16.msra.mxu0 0
        %3446 = vmatprep.subr.bf16.mxu0 0
        %3447 = vmatpush1.bf16.msra.mxu0 0
        %3448 = vmatprep.subr.bf16.mxu0 0
        %3449 = vmatpush1.bf16.msra.mxu0 0
        %3450 = vmatprep.subr.bf16.mxu0 0
        %3451 = vmatpush1.bf16.msra.mxu0 0
        %3452 = vmatprep.subr.bf16.mxu0 0
        %3453 = vmatpush1.bf16.msra.mxu0 0
        %3454 = vmatprep.subr.bf16.mxu0 0
        %3455 = vmatpush1.bf16.msra.mxu0 0
        %3456 = vmatprep.mubr.bf16.mxu0 0
        %3457 = vmatmul.mubr.bf16.gmra.mrb[0].mxu0 %v3373
        %v3458 = vpop.f32.mrb[0].mxu0
        %v3459 = vadd.f32 %v3354, %v3458
        %v3460 = vpop.f32.mrb[0].mxu0
        %v3461 = vpop.f32.mrb[0].mxu0
        %v3462 = vadd.f32 %v3354, %v3461
        %v3463 = vpop.f32.mrb[0].mxu0
        %3464 = vmatprep.mubr.bf16.mxu0 0
        %3465 = vmatmul.mubr.bf16.gmra.mrb[0].mxu0 %v3376
        %v3466 = vpop.f32.mrb[0].mxu0
        %v3467 = vadd.f32 %v3354, %v3466
        %v3468 = vpop.f32.mrb[0].mxu0
        %v3469 = vpop.f32.mrb[0].mxu0
        %v3470 = vadd.f32 %v3354, %v3469
        %v3471 = vpop.f32.mrb[0].mxu0
        %3472 = vmatprep.mubr.bf16.mxu0 0
        %3473 = vmatmul.mubr.bf16.gmra.mrb[0].mxu0 %v3379
        %v3474 = vpop.f32.mrb[0].mxu0
        %v3475 = vadd.f32 %v3354, %v3474
        %v3476 = vpop.f32.mrb[0].mxu0
        %v3477 = vpop.f32.mrb[0].mxu0
        %v3478 = vadd.f32 %v3354, %v3477
        %v3479 = vpop.f32.mrb[0].mxu0
        %3480 = vmatprep.mubr.bf16.mxu0 0
        %3481 = vmatmul.mubr.bf16.gmra.mrb[0].mxu0 %v3382
        %v3482 = vpop.f32.mrb[0].mxu0
        %v3483 = vadd.f32 %v3354, %v3482
        %v3484 = vpop.f32.mrb[0].mxu0
        %v3485 = vpop.f32.mrb[0].mxu0
        %v3486 = vadd.f32 %v3354, %v3485
        %v3487 = vpop.f32.mrb[0].mxu0
        %3488 = vmatprep.mubr.bf16.mxu0 0
        %3489 = vmatmul.mubr.bf16.gmra.mrb[0].mxu0 %v3385
        %v3490 = vpop.f32.mrb[0].mxu0
        %v3491 = vadd.f32 %v3354, %v3490
        %v3492 = vpop.f32.mrb[0].mxu0
        %v3493 = vpop.f32.mrb[0].mxu0
        %v3494 = vadd.f32 %v3354, %v3493
        %v3495 = vpop.f32.mrb[0].mxu0
        %3496 = vmatprep.mubr.bf16.mxu0 0
        %3497 = vmatmul.mubr.bf16.gmra.mrb[0].mxu0 %v3388
        %v3498 = vpop.f32.mrb[0].mxu0
        %v3499 = vadd.f32 %v3354, %v3498
        %v3500 = vpop.f32.mrb[0].mxu0
        %v3501 = vpop.f32.mrb[0].mxu0
        %v3502 = vadd.f32 %v3354, %v3501
        %v3503 = vpop.f32.mrb[0].mxu0
        %3504 = vmatprep.mubr.bf16.mxu0 0
        %3505 = vmatmul.mubr.bf16.gmra.mrb[0].mxu0 %v3391
        %v3506 = vpop.f32.mrb[0].mxu0
        %v3507 = vadd.f32 %v3354, %v3506
        %v3508 = vpop.f32.mrb[0].mxu0
        %v3509 = vpop.f32.mrb[0].mxu0
        %v3510 = vadd.f32 %v3354, %v3509
        %v3511 = vpop.f32.mrb[0].mxu0
        %3512 = vmatprep.mubr.bf16.mxu0 0
        %3513 = vmatmul.mubr.bf16.gmra.mrb[0].mxu0 %v3394
        %v3514 = vpop.f32.mrb[0].mxu0
        %v3515 = vadd.f32 %v3354, %v3514
        %v3516 = vpop.f32.mrb[0].mxu0
        %v3517 = vpop.f32.mrb[0].mxu0
        %v3518 = vadd.f32 %v3354, %v3517
        %v3519 = vpop.f32.mrb[0].mxu0
        %3520 = vmatprep.mubr.bf16.mxu0 0
        %3521 = vmatmul.mubr.bf16.gmra.mrb[0].mxu0 %v3397
        %v3522 = vpop.f32.mrb[0].mxu0
        %v3523 = vadd.f32 %v3354, %v3522
        %v3524 = vpop.f32.mrb[0].mxu0
        %v3525 = vpop.f32.mrb[0].mxu0
        %v3526 = vadd.f32 %v3354, %v3525
        %v3527 = vpop.f32.mrb[0].mxu0
        %3528 = vmatprep.mubr.bf16.mxu0 0
        %3529 = vmatmul.mubr.bf16.gmra.mrb[0].mxu0 %v3400
        %v3530 = vpop.f32.mrb[0].mxu0
        %v3531 = vadd.f32 %v3354, %v3530
        %v3532 = vpop.f32.mrb[0].mxu0
        %v3533 = vpop.f32.mrb[0].mxu0
        %v3534 = vadd.f32 %v3354, %v3533
        %v3535 = vpop.f32.mrb[0].mxu0
        %3536 = vmatprep.mubr.bf16.mxu0 0
        %3537 = vmatmul.mubr.bf16.gmra.mrb[0].mxu0 %v3403
        %v3538 = vpop.f32.mrb[0].mxu0
        %v3539 = vadd.f32 %v3354, %v3538
        %v3540 = vpop.f32.mrb[0].mxu0
        %v3541 = vpop.f32.mrb[0].mxu0
        %v3542 = vadd.f32 %v3354, %v3541
        %v3543 = vpop.f32.mrb[0].mxu0
        %3544 = vmatprep.mubr.bf16.mxu0 0
        %3545 = vmatmul.mubr.bf16.gmra.mrb[0].mxu0 %v3406
        %v3546 = vpop.f32.mrb[0].mxu0
        %v3547 = vadd.f32 %v3354, %v3546
        %v3548 = vpop.f32.mrb[0].mxu0
        %v3549 = vpop.f32.mrb[0].mxu0
        %v3550 = vadd.f32 %v3354, %v3549
        %v3551 = vpop.f32.mrb[0].mxu0
        %3552 = vmatprep.mubr.bf16.mxu0 0
        %3553 = vmatmul.mubr.bf16.gmra.mrb[0].mxu0 %v3409
        %v3554 = vpop.f32.mrb[0].mxu0
        %v3555 = vadd.f32 %v3354, %v3554
        %v3556 = vpop.f32.mrb[0].mxu0
        %v3557 = vpop.f32.mrb[0].mxu0
        %v3558 = vadd.f32 %v3354, %v3557
        %v3559 = vpop.f32.mrb[0].mxu0
        %3560 = vmatprep.mubr.bf16.mxu0 0
        %3561 = vmatmul.mubr.bf16.gmra.mrb[0].mxu0 %v3412
        %v3562 = vpop.f32.mrb[0].mxu0
        %v3563 = vadd.f32 %v3354, %v3562
        %v3564 = vpop.f32.mrb[0].mxu0
        %v3565 = vpop.f32.mrb[0].mxu0
        %v3566 = vadd.f32 %v3354, %v3565
        %v3567 = vpop.f32.mrb[0].mxu0
        %3568 = vmatprep.mubr.bf16.mxu0 0
        %3569 = vmatmul.mubr.bf16.gmra.mrb[0].mxu0 %v3415
        %v3570 = vpop.f32.mrb[0].mxu0
        %v3571 = vadd.f32 %v3354, %v3570
        %v3572 = vpop.f32.mrb[0].mxu0
        %v3573 = vpop.f32.mrb[0].mxu0
        %v3574 = vadd.f32 %v3354, %v3573
        %v3575 = vpop.f32.mrb[0].mxu0
        %3576 = vmatprep.mubr.bf16.mxu0 0
        %3577 = vmatmul.mubr.bf16.gmra.mrb[0].mxu0 %v3418
        %v3578 = vpop.f32.mrb[0].mxu0
        %v3579 = vadd.f32 %v3354, %v3578
        %v3580 = vpop.f32.mrb[0].mxu0
        %v3581 = vpop.f32.mrb[0].mxu0
        %v3582 = vadd.f32 %v3354, %v3581
        %v3583 = vpop.f32.mrb[0].mxu0
        %3584 = vdwg.mxu0
        %v3585 = vmax.f32 %v3459, 0.0
        %v3586 = vmax.f32 %v3462, 0.0
        %v3587 = vmax.f32 %v3467, 0.0
        %v3588 = vmax.f32 %v3470, 0.0
        %v3589 = vmax.f32 %v3475, 0.0
        %v3590 = vmax.f32 %v3478, 0.0
        %v3591 = vmax.f32 %v3483, 0.0
        %v3592 = vmax.f32 %v3486, 0.0
        %v3593 = vmax.f32 %v3491, 0.0
        %v3594 = vmax.f32 %v3494, 0.0
        %v3595 = vmax.f32 %v3499, 0.0
        %v3596 = vmax.f32 %v3502, 0.0
        %v3597 = vmax.f32 %v3507, 0.0
        %v3598 = vmax.f32 %v3510, 0.0
        %v3599 = vmax.f32 %v3515, 0.0
        %v3600 = vmax.f32 %v3518, 0.0
        %v3601 = vmax.f32 %v3523, 0.0
        %v3602 = vmax.f32 %v3526, 0.0
        %v3603 = vmax.f32 %v3531, 0.0
        %v3604 = vmax.f32 %v3534, 0.0
        %v3605 = vmax.f32 %v3539, 0.0
        %v3606 = vmax.f32 %v3542, 0.0
        %v3607 = vmax.f32 %v3547, 0.0
        %v3608 = vmax.f32 %v3550, 0.0
        %v3609 = vmax.f32 %v3555, 0.0
        %v3610 = vmax.f32 %v3558, 0.0
        %v3611 = vmax.f32 %v3563, 0.0
        %v3612 = vmax.f32 %v3566, 0.0
        %v3613 = vmax.f32 %v3571, 0.0
        %v3614 = vmax.f32 %v3574, 0.0
        %v3615 = vmax.f32 %v3579, 0.0
        %v3616 = vmax.f32 %v3582, 0.0
        %vm3617 = vcmask 261120
        %v3618 = vsel %vm3617, %v3585, 0.0
        %v3619 = vsel %vm3617, %v3586, 0.0
        %v3620 = vadd.f32 %v3618, %v3619
        %v3621 = vsel %vm3617, %v3587, 0.0
        %v3622 = vadd.f32 %v3620, %v3621
        %v3623 = vsel %vm3617, %v3588, 0.0
        %v3624 = vadd.f32 %v3622, %v3623
        %v3625 = vsel %vm3617, %v3589, 0.0
        %v3626 = vadd.f32 %v3624, %v3625
        %v3627 = vsel %vm3617, %v3590, 0.0
        %v3628 = vadd.f32 %v3626, %v3627
        %v3629 = vsel %vm3617, %v3591, 0.0
        %v3630 = vadd.f32 %v3628, %v3629
        %v3631 = vsel %vm3617, %v3592, 0.0
        %v3632 = vadd.f32 %v3630, %v3631
        %v3633 = vsel %vm3617, %v3593, 0.0
        %v3634 = vadd.f32 %v3632, %v3633
        %v3635 = vsel %vm3617, %v3594, 0.0
        %v3636 = vadd.f32 %v3634, %v3635
        %v3637 = vsel %vm3617, %v3595, 0.0
        %v3638 = vadd.f32 %v3636, %v3637
        %v3639 = vsel %vm3617, %v3596, 0.0
        %v3640 = vadd.f32 %v3638, %v3639
        %v3641 = vsel %vm3617, %v3597, 0.0
        %v3642 = vadd.f32 %v3640, %v3641
        %v3643 = vsel %vm3617, %v3598, 0.0
        %v3644 = vadd.f32 %v3642, %v3643
        %v3645 = vsel %vm3617, %v3599, 0.0
        %v3646 = vadd.f32 %v3644, %v3645
        %v3647 = vsel %vm3617, %v3600, 0.0
        %v3648 = vadd.f32 %v3646, %v3647
        %v3649 = vsel %vm3617, %v3601, 0.0
        %v3650 = vadd.f32 %v3648, %v3649
        %v3651 = vsel %vm3617, %v3602, 0.0
        %v3652 = vadd.f32 %v3650, %v3651
        %v3653 = vsel %vm3617, %v3603, 0.0
        %v3654 = vadd.f32 %v3652, %v3653
        %v3655 = vsel %vm3617, %v3604, 0.0
        %v3656 = vadd.f32 %v3654, %v3655
        %v3657 = vsel %vm3617, %v3605, 0.0
        %v3658 = vadd.f32 %v3656, %v3657
        %v3659 = vsel %vm3617, %v3606, 0.0
        %v3660 = vadd.f32 %v3658, %v3659
        %v3661 = vsel %vm3617, %v3607, 0.0
        %v3662 = vadd.f32 %v3660, %v3661
        %v3663 = vsel %vm3617, %v3608, 0.0
        %v3664 = vadd.f32 %v3662, %v3663
        %v3665 = vsel %vm3617, %v3609, 0.0
        %v3666 = vadd.f32 %v3664, %v3665
        %v3667 = vsel %vm3617, %v3610, 0.0
        %v3668 = vadd.f32 %v3666, %v3667
        %v3669 = vsel %vm3617, %v3611, 0.0
        %v3670 = vadd.f32 %v3668, %v3669
        %v3671 = vsel %vm3617, %v3612, 0.0
        %v3672 = vadd.f32 %v3670, %v3671
        %v3673 = vsel %vm3617, %v3613, 0.0
        %v3674 = vadd.f32 %v3672, %v3673
        %v3675 = vsel %vm3617, %v3614, 0.0
        %v3676 = vadd.f32 %v3674, %v3675
        %v3677 = vsel %vm3617, %v3615, 0.0
        %v3678 = vadd.f32 %v3676, %v3677
        %v3679 = vsel %vm3617, %v3616, 0.0
        %v3680 = vadd.f32 %v3678, %v3679
        %v3681 = vrot.slane %v3680, 4
        %v3682 = vadd.f32 %v3680, %v3681
        %v3683 = vrot.slane %v3682, 2
        %v3684 = vadd.f32 %v3682, %v3683
        %v3685 = vrot.slane %v3684, 1
        %v3686 = vadd.f32 %v3684, %v3685
        %v3687 = vmul.f32 %v3686, 0.00390625
        %v3688 = vpack.c.bf16 %v3687, %v3687
        %v3689 = vld [vmem:[%s3] sm:$0xf]
        %v3690 = vld [vmem:[%s3 + $0x4] sm:$0xf]
        %v3691 = vld [vmem:[%s3 + $0x8] sm:$0xf]
        %v3692 = vld [vmem:[%s3 + $0xc] sm:$0xf]
        %v3693 = vld [vmem:[%s4] sm:$0x1]
        %v3698 = vunpack.c.l.b16 %v3689
        %v3699 = vunpack.c.l.b16 %v3690
        %v3700 = vunpack.c.l.b16 %v3691
        %v3701 = vunpack.c.l.b16 %v3692
        %v3702 = vpack.c.b16 %v3699, %v3698
        %v3703 = vpack.c.b16 %v3701, %v3700
        %v3707 = vsel %vm3617, %v3688, 0
        %3709 = vmatprep.subr.bf16.mxu0 0
        %3710 = vmatpush1.bf16.msra.mxu0 %v3702
        %3711 = vmatprep.subr.bf16.mxu0 0
        %3712 = vmatpush1.bf16.msra.mxu0 %v3703
        %3713 = vmatprep.subr.bf16.mxu0 0
        %3714 = vmatpush1.bf16.msra.mxu0 0
        %3715 = vmatprep.subr.bf16.mxu0 0
        %3716 = vmatpush1.bf16.msra.mxu0 0
        %3717 = vmatprep.subr.bf16.mxu0 0
        %3718 = vmatpush1.bf16.msra.mxu0 0
        %3719 = vmatprep.subr.bf16.mxu0 0
        %3720 = vmatpush1.bf16.msra.mxu0 0
        %3721 = vmatprep.subr.bf16.mxu0 0
        %3722 = vmatpush1.bf16.msra.mxu0 0
        %3723 = vmatprep.subr.bf16.mxu0 0
        %3724 = vmatpush1.bf16.msra.mxu0 0
        %3725 = vmatprep.subr.bf16.mxu0 0
        %3726 = vmatpush1.bf16.msra.mxu0 0
        %3727 = vmatprep.subr.bf16.mxu0 0
        %3728 = vmatpush1.bf16.msra.mxu0 0
        %3729 = vmatprep.subr.bf16.mxu0 0
        %3730 = vmatpush1.bf16.msra.mxu0 0
        %3731 = vmatprep.subr.bf16.mxu0 0
        %3732 = vmatpush1.bf16.msra.mxu0 0
        %3733 = vmatprep.subr.bf16.mxu0 0
        %3734 = vmatpush1.bf16.msra.mxu0 0
        %3735 = vmatprep.subr.bf16.mxu0 0
        %3736 = vmatpush1.bf16.msra.mxu0 0
        %3737 = vmatprep.subr.bf16.mxu0 0
        %3738 = vmatpush1.bf16.msra.mxu0 0
        %3739 = vmatprep.subr.bf16.mxu0 0
        %3740 = vmatpush1.bf16.msra.mxu0 0
        %3741 = vmatprep.mubr.bf16.mxu0 0
        %3742 = vmatmul.mubr.bf16.gmra.mrb[0].mxu0 %v3707
        %v3743 = vpop.f32.mrb[0].mxu0
        %v3744 = vadd.f32 %v3693, %v3743
        %v3745 = vpop.f32.mrb[0].mxu0
        %v3746 = vpop.f32.mrb[0].mxu0
        %v3747 = vpop.f32.mrb[0].mxu0
        %3748 = vdwg.mxu0
        %3749 = vst [vmem:[%s216] sm:$0x1] %v3744
        %s3750 = sand.u32 %s137, 1
        %s3751 = scalar_lea.sflag [#allocation4], %s3750
        %s3752 = sand.u32 %s137, 1
        %s3753 = scalar_lea.vmem [#allocation3], %s3752
        // Predicated region
        $region41: #{tpu_custom_call.1} parent=39 // pred_check
          %p3754 = pneg %p147
        $region42: #{tpu_custom_call.1} parent=39 // pred_check_branch
          %3756 = sbr.rel (%p3754) target = $region44
        $region43: #{tpu_custom_call.1} parent=39 // pred_region
          %s3758 = ssub.s32 16, 16
          %3759 = vsyncadd %s3751, %s3758
          %s3760 = smul.addr %s19, 16
          %s3761 = scalar_lea.hbm %s5, %s3760
          %s3763 = sshll.u32 %s3753, 4
          %s3764 = int_to_ptr.vmem [resolvable:$true] %s3763
          %3766 = dma.vmem_to_hbm [thread:$0]  %s3764, 16, %s3761, %s3751
        $region44: #{tpu_custom_call.1} parent=39 // pred_fallthru
          _
      $region40: #{tpu_custom_call.1} parent=5 // pred_fallthru
        _
      %p3767 = scmp.le.s32.totalorder 2, %s14
      // Predicated region
      $region45: #{tpu_custom_call.1} parent=5 // pred_check
        %p3768 = pneg %p3767
      $region46: #{tpu_custom_call.1} parent=5 // pred_check_branch
        %3770 = sbr.rel (%p3768) target = $region48
      $region47: #{tpu_custom_call.1} parent=5 // pred_region
        %s3771 = ssub.s32 %s14, 2
        // Predicated region
        $region49: #{tpu_custom_call.1} parent=47 // pred_check
          %p3772 = pneg %p153
        $region50: #{tpu_custom_call.1} parent=47 // pred_check_branch
          %3774 = sbr.rel (%p3772) target = $region52
        $region51: #{tpu_custom_call.1} parent=47 // pred_region
          %s3775 = sand.u32 %s138, 1
          %s3776 = scalar_lea.sflag [#allocation4], %s3775
          %s3777 = sand.u32 %s138, 1
          %s3778 = scalar_lea.vmem [#allocation3], %s3777
          %3779 = dma.done %s3776, 16
        $region52: #{tpu_custom_call.1} parent=47 // pred_fallthru
          _
      $region48: #{tpu_custom_call.1} parent=5 // pred_fallthru
        _
    $region6: #{tpu_custom_call.1} parent=1 // loop_footer
      %s18 = sadd.s32 1, %s14
    $region7: #{tpu_custom_call.1} parent=1 // loop_footer_branch
      %13 = sbr.rel target = $region3
    $region8: #{tpu_custom_call.1} parent=1 // loop_exit
      _
    %3780 = vsyncpa [#allocation4], 1
    %s3781 = scalar_lea.sflag [#allocation4], 1
    %3782 = vsyncpa %s3781, 1

</llo_original>
